<compile_context>
chip_gen: v7x
topology: tpu7x:2x2x1
jax: 0.10.0
libtpu: 0.0.40
codegen_flags: <defaults>
</compile_context>

<pallas_src>
import functools

import jax
import jax.numpy as jnp
from jax import lax
from jax.experimental import pallas as pl
from jax.experimental.pallas import tpu as pltpu


# -----------------------------------------------------------------------------
# Fused Pallas kernel: all LSTM layers + both directions + linear head
# -----------------------------------------------------------------------------
def _fused_bilstm_kernel(*refs, num_layers, hidden, batch, b_pad, n_steps):
    """Ref layout (all whole-array VMEM):
        refs[0]              : x slab (T*R, Din0), R = 2*Bp stacked rows per step:
                                rows [t*R     : t*R+B]     = x[t]      (fwd stream)
                                rows [t*R+Bp  : t*R+Bp+B]  = x[T-1-t]  (bwd stream)
                                remaining (pad) rows are zero.
        refs[1+3l .. 3+3l]   : per layer l:
                                w_ihcat (Din, 8H)  gate cols (i_f,i_b,f_f,f_b,o_f,o_b,g_f,g_b)
                                w_bd    (2H, 8H)   block-diag recurrent: rows[:H]->fwd cols,
                                                   rows[H:]->bwd cols (zeros elsewhere)
                                b_cat   (1, 8H)    combined b_ih+b_hh, interleaved cols
        refs[1+3L]           : w_lin slab (T*Bp, 2H)  head weight broadcast per row block
        refs[2+3L]           : out (B, 1)                                (output)
        refs[3+3L]           : gate-projection scratch (T*R, 8H)         (scratch)
        refs[4+3L], [5+3L]   : ping-pong layer-output slabs (T*R, 2H)    (scratch)
    """
    H = hidden
    B = batch
    Bp = b_pad
    R = 2 * Bp
    T = n_steps
    L = num_layers

    x_in_ref = refs[0]
    w_lin_ref = refs[1 + 3 * L]
    out_ref = refs[2 + 3 * L]
    gx_ref = refs[3 + 3 * L]
    slabs = (refs[4 + 3 * L], refs[5 + 3 * L])

    # Zero the ping-pong slabs once so pad rows stay exactly zero (keeps the
    # unused halves finite/deterministic; pad rows never feed real rows).
    slabs[0][...] = jnp.zeros_like(slabs[0])
    slabs[1][...] = jnp.zeros_like(slabs[1])

    for l in range(L):
        w_ihcat = refs[1 + 3 * l][...]           # (Din, 8H)
        w_bd = refs[2 + 3 * l][...]              # (2H, 8H) block-diagonal
        b_cat = refs[3 + 3 * l][...]             # (1, 8H)

        in_ref = x_in_ref if l == 0 else slabs[(l - 1) % 2]
        out_slab = slabs[l % 2]

        # --- Hoisted input->gate projection: ONE matmul per layer (both
        #     directions, all T steps), stored to a VMEM scratch slab. -------
        gx_ref[...] = jnp.dot(in_ref[...], w_ihcat,
                              preferred_element_type=jnp.float32) + b_cat

        # --- Serial recurrence: ONE fused block-diagonal matmul per step. ---
        # Stacked state: rows [:Bp] fwd stream, rows [Bp:] bwd stream;
        # cols [:H] hold the fwd hidden/cell, cols [H:] the bwd ones.  The
        # block-diagonal w_bd keeps the two halves exactly independent, so the
        # "inactive" halves carry harmless bounded junk that never leaks.
        h = jnp.zeros((R, 2 * H), jnp.float32)
        c = jnp.zeros((R, 2 * H), jnp.float32)
        # TODO(synk): for production T switch to lax.fori_loop(unroll=4..8) and
        # hold w_bd resident in the MXU via pltpu.matmul_push_rhs/acc_lhs.
        for t in range(T):
            gates = gx_ref[t * R:(t + 1) * R, :] + jnp.dot(
                h, w_bd, preferred_element_type=jnp.float32)       # (R, 8H)

            sig = jax.nn.sigmoid(gates[:, :6 * H])   # i,f,o (both dirs), contiguous
            g_g = jnp.tanh(gates[:, 6 * H:])         # g (both dirs)
            i_g = sig[:, 0:2 * H]
            f_g = sig[:, 2 * H:4 * H]
            o_g = sig[:, 4 * H:6 * H]
            c = f_g * c + i_g * g_g
            h = o_g * jnp.tanh(c)

            # Scatter this step's outputs into the next layer's input slab
            # (masked stores, off the recurrence dependency chain).
            h_f = h[:B, :H]             # fwd output for sequence position t
            h_b = h[Bp:Bp + B, H:]      # bwd output for sequence position T-1-t
            out_slab[t * R:t * R + B, :H] = h_f
            out_slab[(T - 1 - t) * R + Bp:(T - 1 - t) * R + Bp + B, :H] = h_f
            out_slab[(T - 1 - t) * R:(T - 1 - t) * R + B, H:] = h_b
            out_slab[t * R + Bp:t * R + Bp + B, H:] = h_b

    # --- Bias-free linear head: VPU multiply + reduction straight off the
    #     slab layout (no (B, T*2H) concat, no N=1 MXU dot). -----------------
    last = slabs[(L - 1) % 2]
    acc = jnp.zeros((Bp, 2 * H), jnp.float32)
    for t in range(T):
        acc = acc + last[t * R:t * R + Bp, :] * w_lin_ref[t * Bp:(t + 1) * Bp, :]
    out_ref[...] = jnp.sum(acc, axis=1, keepdims=True)[:B, :]


# -----------------------------------------------------------------------------
# Wrapper: ONE pallas_call for the whole forward pass
# -----------------------------------------------------------------------------
def _interleave_gate_cols(wf, wb, H):
    """(D,4H)+(D,4H), per-direction gate order (i,f,o,g) ->
       (D,8H) with columns (i_f,i_b,f_f,f_b,o_f,o_b,g_f,g_b)."""
    parts = []
    for g in range(4):
        parts.append(wf[:, g * H:(g + 1) * H])
        parts.append(wb[:, g * H:(g + 1) * H])
    return jnp.concatenate(parts, axis=1)


def dilated_net_forward(x, params):
    """x: (B, num_inputs, T) -> out: (B, 1)   (matches the PyTorch module)."""
    B, d_in0, T = x.shape
    layers = params["lstm_layers"]
    L = len(layers)
    H = layers[0]["w_hh_f"].shape[0]
    Bp = max(8, ((B + 7) // 8) * 8)          # pad batch rows to a sublane group
    R = 2 * Bp

    # ---- XLA-side (tiny, one-time) layout prep ------------------------------
    seq = jnp.transpose(x, (2, 0, 1)).astype(jnp.float32)          # (T, B, Din)
    fwd = jnp.pad(seq, ((0, 0), (0, Bp - B), (0, 0)))
    bwd = jnp.pad(seq[::-1], ((0, 0), (0, Bp - B), (0, 0)))
    x_slab = jnp.concatenate([fwd, bwd], axis=1).reshape(T * R, d_in0)

    flat_inputs = [x_slab]
    for lp in layers:
        zf = jnp.zeros_like(lp["w_hh_f"])
        zb = jnp.zeros_like(lp["w_hh_b"])
        w_ihcat = _interleave_gate_cols(lp["w_ih_f"], lp["w_ih_b"], H)   # (Din, 8H)
        w_bd = jnp.concatenate(
            [_interleave_gate_cols(lp["w_hh_f"], zb, H),
             _interleave_gate_cols(zf, lp["w_hh_b"], H)], axis=0)        # (2H, 8H)
        b_cat = _interleave_gate_cols(lp["b_f"], lp["b_b"], H)           # (1, 8H)
        flat_inputs += [w_ihcat, w_bd, b_cat]

    # Head weight broadcast onto the per-step forward row block of the slab.
    w_lin_r = params["w_lin"].reshape(T, 2 * H)
    w_lin_slab = jnp.broadcast_to(
        w_lin_r[:, None, :], (T, Bp, 2 * H)).reshape(T * Bp, 2 * H)
    flat_inputs.append(w_lin_slab)

    # ---- VMEM budget + cost estimate for the single fused call --------------
    in_bytes = sum(int(a.size) * 4 for a in flat_inputs)
    scratch_bytes = (T * R * 8 * H + 2 * T * R * 2 * H) * 4
    vmem_limit = int(min(112 << 20,
                         max(32 << 20, 2 * (in_bytes + scratch_bytes) + (8 << 20))))

    flops = 2 * T * Bp * 2 * H                                  # head
    trans = 0
    for l in range(L):
        d_in = d_in0 if l == 0 else 2 * H
        flops += 2 * (T * R) * d_in * (8 * H)                   # hoisted projection
        flops += T * 2 * R * (2 * H) * (8 * H)                  # recurrence
        trans += T * R * (8 * H + 2 * H)                        # gate sigmoid/tanh + tanh(c)
    cost = pl.CostEstimate(flops=flops, transcendentals=trans,
                           bytes_accessed=in_bytes + B * 4)

    vmem = pl.BlockSpec(memory_space=pltpu.MemorySpace.VMEM)
    kernel = functools.partial(_fused_bilstm_kernel, num_layers=L, hidden=H,
                               batch=B, b_pad=Bp, n_steps=T)

    # TODO(synk): production-scale variants (large h1 / T / num_layers):
    #   v7x (64 MiB VMEM): stream layer weights (layer grid axis or manual
    #     double-buffered make_async_copy), bf16 weights/gx (c stays f32), and
    #     split the two directions across the 2 TensorCores (core_parallel).
    #   v6e: bf16 MXU operands for the hoisted projection (f32 accumulate).
    #   v5e: manual weight-prefetch overlap (memory_space=pl.ANY + DMA sems).
    return pl.pallas_call(
        kernel,
        out_shape=jax.ShapeDtypeStruct((B, 1), jnp.float32),
        in_specs=[vmem] * len(flat_inputs),
        out_specs=vmem,
        scratch_shapes=[
            pltpu.VMEM((T * R, 8 * H), jnp.float32),   # hoisted gate projections
            pltpu.VMEM((T * R, 2 * H), jnp.float32),   # layer-output slab (ping)
            pltpu.VMEM((T * R, 2 * H), jnp.float32),   # layer-output slab (pong)
        ],
        compiler_params=pltpu.CompilerParams(vmem_limit_bytes=vmem_limit),
        cost_estimate=cost,
    )(*flat_inputs)


# -----------------------------------------------------------------------------
# Pure-JAX reference (same math, gate order (i, f, o, g)) for correctness
# -----------------------------------------------------------------------------
def _lstm_dir_ref(x_seq, w_ih, w_hh, b):
    _, B, _ = x_seq.shape
    H = w_hh.shape[0]

    def step(carry, x_t):
        h, c = carry
        gates = x_t @ w_ih + h @ w_hh + b
        i_g = jax.nn.sigmoid(gates[:, 0 * H:1 * H])
        f_g = jax.nn.sigmoid(gates[:, 1 * H:2 * H])
        o_g = jax.nn.sigmoid(gates[:, 2 * H:3 * H])
        g_g = jnp.tanh(gates[:, 3 * H:4 * H])
        c = f_g * c + i_g * g_g
        h = o_g * jnp.tanh(c)
        return (h, c), h

    init = (jnp.zeros((B, H), jnp.float32), jnp.zeros((B, H), jnp.float32))
    _, hs = lax.scan(step, init, x_seq)
    return hs


def dilated_net_forward_ref(x, params):
    B = x.shape[0]
    seq = jnp.transpose(x, (2, 0, 1)).astype(jnp.float32)
    layer_in = seq
    for lp in params["lstm_layers"]:
        h_fwd = _lstm_dir_ref(layer_in, lp["w_ih_f"], lp["w_hh_f"], lp["b_f"])
        h_bwd = _lstm_dir_ref(layer_in[::-1], lp["w_ih_b"], lp["w_hh_b"],
                              lp["b_b"])[::-1]
        layer_in = jnp.concatenate([h_fwd, h_bwd], axis=-1)
    feat = jnp.transpose(layer_in, (1, 0, 2)).reshape(B, -1)
    return feat @ params["w_lin"]


# -----------------------------------------------------------------------------
# Deterministic parameter init (per-direction gate column order (i, f, o, g))
# -----------------------------------------------------------------------------
def init_params(key, num_inputs, hidden, num_layers, n_steps_past):
    def u(k, shape, scale):
        return jax.random.uniform(k, shape, jnp.float32, -scale, scale)

    scale = 1.0 / jnp.sqrt(hidden)
    layers = []
    for l in range(num_layers):
        d_in = num_inputs if l == 0 else 2 * hidden
        key, *ks = jax.random.split(key, 7)
        layers.append({
            "w_ih_f": u(ks[0], (d_in, 4 * hidden), scale),
            "w_hh_f": u(ks[1], (hidden, 4 * hidden), scale),
            "b_f":    u(ks[2], (1, 4 * hidden), scale),   # b_ih + b_hh combined
            "w_ih_b": u(ks[3], (d_in, 4 * hidden), scale),
            "w_hh_b": u(ks[4], (hidden, 4 * hidden), scale),
            "b_b":    u(ks[5], (1, 4 * hidden), scale),
        })
    key, k_lin = jax.random.split(key)
    in_feat = hidden * 2 * n_steps_past
    w_lin = u(k_lin, (in_feat, 1), 1.0 / jnp.sqrt(in_feat))
    return {"lstm_layers": layers, "w_lin": w_lin}


# -----------------------------------------------------------------------------
if __name__ == "__main__":
    # Small shapes consistent with the module's forward pass.
    B = 2              # batch
    NUM_INPUTS = 4     # n_stocks / input_size
    T = 8              # n_steps_past
    H1 = 16            # hidden_size
    NUM_LAYERS = 3     # module uses num_layers = h2; kept small for the test

    key = jax.random.PRNGKey(0)
    key, k_x = jax.random.split(key)
    x = jax.random.normal(k_x, (B, NUM_INPUTS, T), dtype=jnp.float32)

    params = init_params(key, NUM_INPUTS, H1, NUM_LAYERS, T)

    fwd = jax.jit(functools.partial(dilated_net_forward, params=params))
    out = jax.block_until_ready(fwd(x))

    ref = jax.block_until_ready(dilated_net_forward_ref(x, params))
    assert out.shape == (B, 1), out.shape
    assert jnp.allclose(out, ref, rtol=1e-3, atol=5e-3), (out, ref)

    print("KERNEL_OK")
</pallas_src>

<mosaic_0001>
module attributes {stable_mosaic.version = 11 : i64} {
  func.func @_fused_bilstm_kernel(%arg0: memref<128x4xf32, #tpu.memory_space<vmem>>, %arg1: memref<4x128xf32, #tpu.memory_space<vmem>>, %arg2: memref<32x128xf32, #tpu.memory_space<vmem>>, %arg3: memref<1x128xf32, #tpu.memory_space<vmem>>, %arg4: memref<32x128xf32, #tpu.memory_space<vmem>>, %arg5: memref<32x128xf32, #tpu.memory_space<vmem>>, %arg6: memref<1x128xf32, #tpu.memory_space<vmem>>, %arg7: memref<32x128xf32, #tpu.memory_space<vmem>>, %arg8: memref<32x128xf32, #tpu.memory_space<vmem>>, %arg9: memref<1x128xf32, #tpu.memory_space<vmem>>, %arg10: memref<64x32xf32, #tpu.memory_space<vmem>>, %arg11: memref<2x1xf32, #tpu.memory_space<vmem>>, %arg12: memref<128x128xf32, #tpu.memory_space<vmem>>, %arg13: memref<128x32xf32, #tpu.memory_space<vmem>>, %arg14: memref<128x32xf32, #tpu.memory_space<vmem>>) attributes {dimension_semantics = [], scalar_prefetch = 0 : i64, scratch_operands = 3 : i64, tpu.core_type = #tpu.core_type<tc>} {
    %cst = arith.constant 0.000000e+00 : f32
    %0 = vector.broadcast %cst : f32 to vector<128x32xf32>
    %c0 = arith.constant 0 : index
    %c0_0 = arith.constant 0 : index
    %1 = vector.load %arg13[%c0, %c0_0] : memref<128x32xf32, #tpu.memory_space<vmem>>, vector<128x32xf32>
    tpu.vector_store %arg13[%c0, %c0_0], %0 {strides = array<i32>} : memref<128x32xf32, #tpu.memory_space<vmem>>, vector<128x32xf32>,
    %cst_1 = arith.constant 0.000000e+00 : f32
    %2 = vector.broadcast %cst_1 : f32 to vector<128x32xf32>
    %c0_2 = arith.constant 0 : index
    %c0_3 = arith.constant 0 : index
    %3 = vector.load %arg14[%c0_2, %c0_3] : memref<128x32xf32, #tpu.memory_space<vmem>>, vector<128x32xf32>
    tpu.vector_store %arg14[%c0_2, %c0_3], %2 {strides = array<i32>} : memref<128x32xf32, #tpu.memory_space<vmem>>, vector<128x32xf32>,
    %c0_4 = arith.constant 0 : index
    %c0_5 = arith.constant 0 : index
    %4 = vector.load %arg1[%c0_4, %c0_5] : memref<4x128xf32, #tpu.memory_space<vmem>>, vector<4x128xf32>
    %c0_6 = arith.constant 0 : index
    %c0_7 = arith.constant 0 : index
    %5 = vector.load %arg2[%c0_6, %c0_7] : memref<32x128xf32, #tpu.memory_space<vmem>>, vector<32x128xf32>
    %c0_8 = arith.constant 0 : index
    %c0_9 = arith.constant 0 : index
    %6 = vector.load %arg3[%c0_8, %c0_9] : memref<1x128xf32, #tpu.memory_space<vmem>>, vector<1x128xf32>
    %c0_10 = arith.constant 0 : index
    %c0_11 = arith.constant 0 : index
    %7 = vector.load %arg0[%c0_10, %c0_11] : memref<128x4xf32, #tpu.memory_space<vmem>>, vector<128x4xf32>
    %cst_12 = arith.constant dense<0.000000e+00> : vector<128x128xf32>
    %8 = tpu.matmul %7, %4, %cst_12 {dimension_numbers = #tpu.dot_dimension_numbers<[1], [0], [0], [1], [0, 0, 1, 1], [], []>} : vector<128x4xf32>, vector<4x128xf32>, vector<128x128xf32> -> vector<128x128xf32>
    %9 = vector.broadcast %6 : vector<1x128xf32> to vector<128x128xf32>
    %10 = arith.addf %8, %9 : vector<128x128xf32>
    %c0_13 = arith.constant 0 : index
    %c0_14 = arith.constant 0 : index
    %11 = vector.load %arg12[%c0_13, %c0_14] : memref<128x128xf32, #tpu.memory_space<vmem>>, vector<128x128xf32>
    tpu.vector_store %arg12[%c0_13, %c0_14], %10 {strides = array<i32>} : memref<128x128xf32, #tpu.memory_space<vmem>>, vector<128x128xf32>,
    %cst_15 = arith.constant 0.000000e+00 : f32
    %12 = vector.broadcast %cst_15 : f32 to vector<16x32xf32>
    %cst_16 = arith.constant 0.000000e+00 : f32
    %13 = vector.broadcast %cst_16 : f32 to vector<16x32xf32>
    %c0_17 = arith.constant 0 : index
    %c0_18 = arith.constant 0 : index
    %14 = vector.load %arg12[%c0_17, %c0_18] : memref<128x128xf32, #tpu.memory_space<vmem>>, vector<16x128xf32>
    %cst_19 = arith.constant dense<0.000000e+00> : vector<16x128xf32>
    %15 = tpu.matmul %12, %5, %cst_19 {dimension_numbers = #tpu.dot_dimension_numbers<[1], [0], [0], [1], [0, 0, 1, 1], [], []>} : vector<16x32xf32>, vector<32x128xf32>, vector<16x128xf32> -> vector<16x128xf32>
    %16 = arith.addf %14, %15 : vector<16x128xf32>
    %17 = vector.extract_strided_slice %16 {offsets = [0, 0], sizes = [16, 96], strides = [1, 1]} : vector<16x128xf32> to vector<16x96xf32>
    %18 = arith.negf %17 : vector<16x96xf32>
    %19 = math.exp %18 : vector<16x96xf32>
    %cst_20 = arith.constant 1.000000e+00 : f32
    %20 = vector.broadcast %cst_20 : f32 to vector<16x96xf32>
    %21 = arith.addf %20, %19 : vector<16x96xf32>
    %22 = arith.divf %20, %21 : vector<16x96xf32>
    %23 = vector.extract_strided_slice %16 {offsets = [0, 96], sizes = [16, 32], strides = [1, 1]} : vector<16x128xf32> to vector<16x32xf32>
    %24 = math.tanh %23 : vector<16x32xf32>
    %25 = vector.extract_strided_slice %22 {offsets = [0, 0], sizes = [16, 32], strides = [1, 1]} : vector<16x96xf32> to vector<16x32xf32>
    %26 = vector.extract_strided_slice %22 {offsets = [0, 32], sizes = [16, 32], strides = [1, 1]} : vector<16x96xf32> to vector<16x32xf32>
    %27 = vector.extract_strided_slice %22 {offsets = [0, 64], sizes = [16, 32], strides = [1, 1]} : vector<16x96xf32> to vector<16x32xf32>
    %28 = arith.mulf %26, %13 : vector<16x32xf32>
    %29 = arith.mulf %25, %24 : vector<16x32xf32>
    %30 = arith.addf %28, %29 : vector<16x32xf32>
    %31 = math.tanh %30 : vector<16x32xf32>
    %32 = arith.mulf %27, %31 : vector<16x32xf32>
    %33 = vector.extract_strided_slice %32 {offsets = [0, 0], sizes = [2, 16], strides = [1, 1]} : vector<16x32xf32> to vector<2x16xf32>
    %34 = vector.extract_strided_slice %32 {offsets = [8, 16], sizes = [2, 16], strides = [1, 1]} : vector<16x32xf32> to vector<2x16xf32>
    %c0_21 = arith.constant 0 : index
    %c0_22 = arith.constant 0 : index
    %35 = vector.load %arg13[%c0_21, %c0_22] : memref<128x32xf32, #tpu.memory_space<vmem>>, vector<2x16xf32>
    tpu.vector_store %arg13[%c0_21, %c0_22], %33 {strides = array<i32>} : memref<128x32xf32, #tpu.memory_space<vmem>>, vector<2x16xf32>,
    %c120 = arith.constant 120 : index
    %c0_23 = arith.constant 0 : index
    %36 = vector.load %arg13[%c120, %c0_23] : memref<128x32xf32, #tpu.memory_space<vmem>>, vector<2x16xf32>
    tpu.vector_store %arg13[%c120, %c0_23], %33 {strides = array<i32>} : memref<128x32xf32, #tpu.memory_space<vmem>>, vector<2x16xf32>,
    %c112 = arith.constant 112 : index
    %c16 = arith.constant 16 : index
    %37 = vector.load %arg13[%c112, %c16] : memref<128x32xf32, #tpu.memory_space<vmem>>, vector<2x16xf32>
    tpu.vector_store %arg13[%c112, %c16], %34 {strides = array<i32>} : memref<128x32xf32, #tpu.memory_space<vmem>>, vector<2x16xf32>,
    %c8 = arith.constant 8 : index
    %c16_24 = arith.constant 16 : index
    %38 = vector.load %arg13[%c8, %c16_24] : memref<128x32xf32, #tpu.memory_space<vmem>>, vector<2x16xf32>
    tpu.vector_store %arg13[%c8, %c16_24], %34 {strides = array<i32>} : memref<128x32xf32, #tpu.memory_space<vmem>>, vector<2x16xf32>,
    %c16_25 = arith.constant 16 : index
    %c0_26 = arith.constant 0 : index
    %39 = vector.load %arg12[%c16_25, %c0_26] : memref<128x128xf32, #tpu.memory_space<vmem>>, vector<16x128xf32>
    %cst_27 = arith.constant dense<0.000000e+00> : vector<16x128xf32>
    %40 = tpu.matmul %32, %5, %cst_27 {dimension_numbers = #tpu.dot_dimension_numbers<[1], [0], [0], [1], [0, 0, 1, 1], [], []>} : vector<16x32xf32>, vector<32x128xf32>, vector<16x128xf32> -> vector<16x128xf32>
    %41 = arith.addf %39, %40 : vector<16x128xf32>
    %42 = vector.extract_strided_slice %41 {offsets = [0, 0], sizes = [16, 96], strides = [1, 1]} : vector<16x128xf32> to vector<16x96xf32>
    %43 = arith.negf %42 : vector<16x96xf32>
    %44 = math.exp %43 : vector<16x96xf32>
    %cst_28 = arith.constant 1.000000e+00 : f32
    %45 = vector.broadcast %cst_28 : f32 to vector<16x96xf32>
    %46 = arith.addf %45, %44 : vector<16x96xf32>
    %47 = arith.divf %45, %46 : vector<16x96xf32>
    %48 = vector.extract_strided_slice %41 {offsets = [0, 96], sizes = [16, 32], strides = [1, 1]} : vector<16x128xf32> to vector<16x32xf32>
    %49 = math.tanh %48 : vector<16x32xf32>
    %50 = vector.extract_strided_slice %47 {offsets = [0, 0], sizes = [16, 32], strides = [1, 1]} : vector<16x96xf32> to vector<16x32xf32>
    %51 = vector.extract_strided_slice %47 {offsets = [0, 32], sizes = [16, 32], strides = [1, 1]} : vector<16x96xf32> to vector<16x32xf32>
    %52 = vector.extract_strided_slice %47 {offsets = [0, 64], sizes = [16, 32], strides = [1, 1]} : vector<16x96xf32> to vector<16x32xf32>
    %53 = arith.mulf %51, %30 : vector<16x32xf32>
    %54 = arith.mulf %50, %49 : vector<16x32xf32>
    %55 = arith.addf %53, %54 : vector<16x32xf32>
    %56 = math.tanh %55 : vector<16x32xf32>
    %57 = arith.mulf %52, %56 : vector<16x32xf32>
    %58 = vector.extract_strided_slice %57 {offsets = [0, 0], sizes = [2, 16], strides = [1, 1]} : vector<16x32xf32> to vector<2x16xf32>
    %59 = vector.extract_strided_slice %57 {offsets = [8, 16], sizes = [2, 16], strides = [1, 1]} : vector<16x32xf32> to vector<2x16xf32>
    %c16_29 = arith.constant 16 : index
    %c0_30 = arith.constant 0 : index
    %60 = vector.load %arg13[%c16_29, %c0_30] : memref<128x32xf32, #tpu.memory_space<vmem>>, vector<2x16xf32>
    tpu.vector_store %arg13[%c16_29, %c0_30], %58 {strides = array<i32>} : memref<128x32xf32, #tpu.memory_space<vmem>>, vector<2x16xf32>,
    %c104 = arith.constant 104 : index
    %c0_31 = arith.constant 0 : index
    %61 = vector.load %arg13[%c104, %c0_31] : memref<128x32xf32, #tpu.memory_space<vmem>>, vector<2x16xf32>
    tpu.vector_store %arg13[%c104, %c0_31], %58 {strides = array<i32>} : memref<128x32xf32, #tpu.memory_space<vmem>>, vector<2x16xf32>,
    %c96 = arith.constant 96 : index
    %c16_32 = arith.constant 16 : index
    %62 = vector.load %arg13[%c96, %c16_32] : memref<128x32xf32, #tpu.memory_space<vmem>>, vector<2x16xf32>
    tpu.vector_store %arg13[%c96, %c16_32], %59 {strides = array<i32>} : memref<128x32xf32, #tpu.memory_space<vmem>>, vector<2x16xf32>,
    %c24 = arith.constant 24 : index
    %c16_33 = arith.constant 16 : index
    %63 = vector.load %arg13[%c24, %c16_33] : memref<128x32xf32, #tpu.memory_space<vmem>>, vector<2x16xf32>
    tpu.vector_store %arg13[%c24, %c16_33], %59 {strides = array<i32>} : memref<128x32xf32, #tpu.memory_space<vmem>>, vector<2x16xf32>,
    %c32 = arith.constant 32 : index
    %c0_34 = arith.constant 0 : index
    %64 = vector.load %arg12[%c32, %c0_34] : memref<128x128xf32, #tpu.memory_space<vmem>>, vector<16x128xf32>
    %cst_35 = arith.constant dense<0.000000e+00> : vector<16x128xf32>
    %65 = tpu.matmul %57, %5, %cst_35 {dimension_numbers = #tpu.dot_dimension_numbers<[1], [0], [0], [1], [0, 0, 1, 1], [], []>} : vector<16x32xf32>, vector<32x128xf32>, vector<16x128xf32> -> vector<16x128xf32>
    %66 = arith.addf %64, %65 : vector<16x128xf32>
    %67 = vector.extract_strided_slice %66 {offsets = [0, 0], sizes = [16, 96], strides = [1, 1]} : vector<16x128xf32> to vector<16x96xf32>
    %68 = arith.negf %67 : vector<16x96xf32>
    %69 = math.exp %68 : vector<16x96xf32>
    %cst_36 = arith.constant 1.000000e+00 : f32
    %70 = vector.broadcast %cst_36 : f32 to vector<16x96xf32>
    %71 = arith.addf %70, %69 : vector<16x96xf32>
    %72 = arith.divf %70, %71 : vector<16x96xf32>
    %73 = vector.extract_strided_slice %66 {offsets = [0, 96], sizes = [16, 32], strides = [1, 1]} : vector<16x128xf32> to vector<16x32xf32>
    %74 = math.tanh %73 : vector<16x32xf32>
    %75 = vector.extract_strided_slice %72 {offsets = [0, 0], sizes = [16, 32], strides = [1, 1]} : vector<16x96xf32> to vector<16x32xf32>
    %76 = vector.extract_strided_slice %72 {offsets = [0, 32], sizes = [16, 32], strides = [1, 1]} : vector<16x96xf32> to vector<16x32xf32>
    %77 = vector.extract_strided_slice %72 {offsets = [0, 64], sizes = [16, 32], strides = [1, 1]} : vector<16x96xf32> to vector<16x32xf32>
    %78 = arith.mulf %76, %55 : vector<16x32xf32>
    %79 = arith.mulf %75, %74 : vector<16x32xf32>
    %80 = arith.addf %78, %79 : vector<16x32xf32>
    %81 = math.tanh %80 : vector<16x32xf32>
    %82 = arith.mulf %77, %81 : vector<16x32xf32>
    %83 = vector.extract_strided_slice %82 {offsets = [0, 0], sizes = [2, 16], strides = [1, 1]} : vector<16x32xf32> to vector<2x16xf32>
    %84 = vector.extract_strided_slice %82 {offsets = [8, 16], sizes = [2, 16], strides = [1, 1]} : vector<16x32xf32> to vector<2x16xf32>
    %c32_37 = arith.constant 32 : index
    %c0_38 = arith.constant 0 : index
    %85 = vector.load %arg13[%c32_37, %c0_38] : memref<128x32xf32, #tpu.memory_space<vmem>>, vector<2x16xf32>
    tpu.vector_store %arg13[%c32_37, %c0_38], %83 {strides = array<i32>} : memref<128x32xf32, #tpu.memory_space<vmem>>, vector<2x16xf32>,
    %c88 = arith.constant 88 : index
    %c0_39 = arith.constant 0 : index
    %86 = vector.load %arg13[%c88, %c0_39] : memref<128x32xf32, #tpu.memory_space<vmem>>, vector<2x16xf32>
    tpu.vector_store %arg13[%c88, %c0_39], %83 {strides = array<i32>} : memref<128x32xf32, #tpu.memory_space<vmem>>, vector<2x16xf32>,
    %c80 = arith.constant 80 : index
    %c16_40 = arith.constant 16 : index
    %87 = vector.load %arg13[%c80, %c16_40] : memref<128x32xf32, #tpu.memory_space<vmem>>, vector<2x16xf32>
    tpu.vector_store %arg13[%c80, %c16_40], %84 {strides = array<i32>} : memref<128x32xf32, #tpu.memory_space<vmem>>, vector<2x16xf32>,
    %c40 = arith.constant 40 : index
    %c16_41 = arith.constant 16 : index
    %88 = vector.load %arg13[%c40, %c16_41] : memref<128x32xf32, #tpu.memory_space<vmem>>, vector<2x16xf32>
    tpu.vector_store %arg13[%c40, %c16_41], %84 {strides = array<i32>} : memref<128x32xf32, #tpu.memory_space<vmem>>, vector<2x16xf32>,
    %c48 = arith.constant 48 : index
    %c0_42 = arith.constant 0 : index
    %89 = vector.load %arg12[%c48, %c0_42] : memref<128x128xf32, #tpu.memory_space<vmem>>, vector<16x128xf32>
    %cst_43 = arith.constant dense<0.000000e+00> : vector<16x128xf32>
    %90 = tpu.matmul %82, %5, %cst_43 {dimension_numbers = #tpu.dot_dimension_numbers<[1], [0], [0], [1], [0, 0, 1, 1], [], []>} : vector<16x32xf32>, vector<32x128xf32>, vector<16x128xf32> -> vector<16x128xf32>
    %91 = arith.addf %89, %90 : vector<16x128xf32>
    %92 = vector.extract_strided_slice %91 {offsets = [0, 0], sizes = [16, 96], strides = [1, 1]} : vector<16x128xf32> to vector<16x96xf32>
    %93 = arith.negf %92 : vector<16x96xf32>
    %94 = math.exp %93 : vector<16x96xf32>
    %cst_44 = arith.constant 1.000000e+00 : f32
    %95 = vector.broadcast %cst_44 : f32 to vector<16x96xf32>
    %96 = arith.addf %95, %94 : vector<16x96xf32>
    %97 = arith.divf %95, %96 : vector<16x96xf32>
    %98 = vector.extract_strided_slice %91 {offsets = [0, 96], sizes = [16, 32], strides = [1, 1]} : vector<16x128xf32> to vector<16x32xf32>
    %99 = math.tanh %98 : vector<16x32xf32>
    %100 = vector.extract_strided_slice %97 {offsets = [0, 0], sizes = [16, 32], strides = [1, 1]} : vector<16x96xf32> to vector<16x32xf32>
    %101 = vector.extract_strided_slice %97 {offsets = [0, 32], sizes = [16, 32], strides = [1, 1]} : vector<16x96xf32> to vector<16x32xf32>
    %102 = vector.extract_strided_slice %97 {offsets = [0, 64], sizes = [16, 32], strides = [1, 1]} : vector<16x96xf32> to vector<16x32xf32>
    %103 = arith.mulf %101, %80 : vector<16x32xf32>
    %104 = arith.mulf %100, %99 : vector<16x32xf32>
    %105 = arith.addf %103, %104 : vector<16x32xf32>
    %106 = math.tanh %105 : vector<16x32xf32>
    %107 = arith.mulf %102, %106 : vector<16x32xf32>
    %108 = vector.extract_strided_slice %107 {offsets = [0, 0], sizes = [2, 16], strides = [1, 1]} : vector<16x32xf32> to vector<2x16xf32>
    %109 = vector.extract_strided_slice %107 {offsets = [8, 16], sizes = [2, 16], strides = [1, 1]} : vector<16x32xf32> to vector<2x16xf32>
    %c48_45 = arith.constant 48 : index
    %c0_46 = arith.constant 0 : index
    %110 = vector.load %arg13[%c48_45, %c0_46] : memref<128x32xf32, #tpu.memory_space<vmem>>, vector<2x16xf32>
    tpu.vector_store %arg13[%c48_45, %c0_46], %108 {strides = array<i32>} : memref<128x32xf32, #tpu.memory_space<vmem>>, vector<2x16xf32>,
    %c72 = arith.constant 72 : index
    %c0_47 = arith.constant 0 : index
    %111 = vector.load %arg13[%c72, %c0_47] : memref<128x32xf32, #tpu.memory_space<vmem>>, vector<2x16xf32>
    tpu.vector_store %arg13[%c72, %c0_47], %108 {strides = array<i32>} : memref<128x32xf32, #tpu.memory_space<vmem>>, vector<2x16xf32>,
    %c64 = arith.constant 64 : index
    %c16_48 = arith.constant 16 : index
    %112 = vector.load %arg13[%c64, %c16_48] : memref<128x32xf32, #tpu.memory_space<vmem>>, vector<2x16xf32>
    tpu.vector_store %arg13[%c64, %c16_48], %109 {strides = array<i32>} : memref<128x32xf32, #tpu.memory_space<vmem>>, vector<2x16xf32>,
    %c56 = arith.constant 56 : index
    %c16_49 = arith.constant 16 : index
    %113 = vector.load %arg13[%c56, %c16_49] : memref<128x32xf32, #tpu.memory_space<vmem>>, vector<2x16xf32>
    tpu.vector_store %arg13[%c56, %c16_49], %109 {strides = array<i32>} : memref<128x32xf32, #tpu.memory_space<vmem>>, vector<2x16xf32>,
    %c64_50 = arith.constant 64 : index
    %c0_51 = arith.constant 0 : index
    %114 = vector.load %arg12[%c64_50, %c0_51] : memref<128x128xf32, #tpu.memory_space<vmem>>, vector<16x128xf32>
    %cst_52 = arith.constant dense<0.000000e+00> : vector<16x128xf32>
    %115 = tpu.matmul %107, %5, %cst_52 {dimension_numbers = #tpu.dot_dimension_numbers<[1], [0], [0], [1], [0, 0, 1, 1], [], []>} : vector<16x32xf32>, vector<32x128xf32>, vector<16x128xf32> -> vector<16x128xf32>
    %116 = arith.addf %114, %115 : vector<16x128xf32>
    %117 = vector.extract_strided_slice %116 {offsets = [0, 0], sizes = [16, 96], strides = [1, 1]} : vector<16x128xf32> to vector<16x96xf32>
    %118 = arith.negf %117 : vector<16x96xf32>
    %119 = math.exp %118 : vector<16x96xf32>
    %cst_53 = arith.constant 1.000000e+00 : f32
    %120 = vector.broadcast %cst_53 : f32 to vector<16x96xf32>
    %121 = arith.addf %120, %119 : vector<16x96xf32>
    %122 = arith.divf %120, %121 : vector<16x96xf32>
    %123 = vector.extract_strided_slice %116 {offsets = [0, 96], sizes = [16, 32], strides = [1, 1]} : vector<16x128xf32> to vector<16x32xf32>
    %124 = math.tanh %123 : vector<16x32xf32>
    %125 = vector.extract_strided_slice %122 {offsets = [0, 0], sizes = [16, 32], strides = [1, 1]} : vector<16x96xf32> to vector<16x32xf32>
    %126 = vector.extract_strided_slice %122 {offsets = [0, 32], sizes = [16, 32], strides = [1, 1]} : vector<16x96xf32> to vector<16x32xf32>
    %127 = vector.extract_strided_slice %122 {offsets = [0, 64], sizes = [16, 32], strides = [1, 1]} : vector<16x96xf32> to vector<16x32xf32>
    %128 = arith.mulf %126, %105 : vector<16x32xf32>
    %129 = arith.mulf %125, %124 : vector<16x32xf32>
    %130 = arith.addf %128, %129 : vector<16x32xf32>
    %131 = math.tanh %130 : vector<16x32xf32>
    %132 = arith.mulf %127, %131 : vector<16x32xf32>
    %133 = vector.extract_strided_slice %132 {offsets = [0, 0], sizes = [2, 16], strides = [1, 1]} : vector<16x32xf32> to vector<2x16xf32>
    %134 = vector.extract_strided_slice %132 {offsets = [8, 16], sizes = [2, 16], strides = [1, 1]} : vector<16x32xf32> to vector<2x16xf32>
    %c64_54 = arith.constant 64 : index
    %c0_55 = arith.constant 0 : index
    %135 = vector.load %arg13[%c64_54, %c0_55] : memref<128x32xf32, #tpu.memory_space<vmem>>, vector<2x16xf32>
    tpu.vector_store %arg13[%c64_54, %c0_55], %133 {strides = array<i32>} : memref<128x32xf32, #tpu.memory_space<vmem>>, vector<2x16xf32>,
    %c56_56 = arith.constant 56 : index
    %c0_57 = arith.constant 0 : index
    %136 = vector.load %arg13[%c56_56, %c0_57] : memref<128x32xf32, #tpu.memory_space<vmem>>, vector<2x16xf32>
    tpu.vector_store %arg13[%c56_56, %c0_57], %133 {strides = array<i32>} : memref<128x32xf32, #tpu.memory_space<vmem>>, vector<2x16xf32>,
    %c48_58 = arith.constant 48 : index
    %c16_59 = arith.constant 16 : index
    %137 = vector.load %arg13[%c48_58, %c16_59] : memref<128x32xf32, #tpu.memory_space<vmem>>, vector<2x16xf32>
    tpu.vector_store %arg13[%c48_58, %c16_59], %134 {strides = array<i32>} : memref<128x32xf32, #tpu.memory_space<vmem>>, vector<2x16xf32>,
    %c72_60 = arith.constant 72 : index
    %c16_61 = arith.constant 16 : index
    %138 = vector.load %arg13[%c72_60, %c16_61] : memref<128x32xf32, #tpu.memory_space<vmem>>, vector<2x16xf32>
    tpu.vector_store %arg13[%c72_60, %c16_61], %134 {strides = array<i32>} : memref<128x32xf32, #tpu.memory_space<vmem>>, vector<2x16xf32>,
    %c80_62 = arith.constant 80 : index
    %c0_63 = arith.constant 0 : index
    %139 = vector.load %arg12[%c80_62, %c0_63] : memref<128x128xf32, #tpu.memory_space<vmem>>, vector<16x128xf32>
    %cst_64 = arith.constant dense<0.000000e+00> : vector<16x128xf32>
    %140 = tpu.matmul %132, %5, %cst_64 {dimension_numbers = #tpu.dot_dimension_numbers<[1], [0], [0], [1], [0, 0, 1, 1], [], []>} : vector<16x32xf32>, vector<32x128xf32>, vector<16x128xf32> -> vector<16x128xf32>
    %141 = arith.addf %139, %140 : vector<16x128xf32>
    %142 = vector.extract_strided_slice %141 {offsets = [0, 0], sizes = [16, 96], strides = [1, 1]} : vector<16x128xf32> to vector<16x96xf32>
    %143 = arith.negf %142 : vector<16x96xf32>
    %144 = math.exp %143 : vector<16x96xf32>
    %cst_65 = arith.constant 1.000000e+00 : f32
    %145 = vector.broadcast %cst_65 : f32 to vector<16x96xf32>
    %146 = arith.addf %145, %144 : vector<16x96xf32>
    %147 = arith.divf %145, %146 : vector<16x96xf32>
    %148 = vector.extract_strided_slice %141 {offsets = [0, 96], sizes = [16, 32], strides = [1, 1]} : vector<16x128xf32> to vector<16x32xf32>
    %149 = math.tanh %148 : vector<16x32xf32>
    %150 = vector.extract_strided_slice %147 {offsets = [0, 0], sizes = [16, 32], strides = [1, 1]} : vector<16x96xf32> to vector<16x32xf32>
    %151 = vector.extract_strided_slice %147 {offsets = [0, 32], sizes = [16, 32], strides = [1, 1]} : vector<16x96xf32> to vector<16x32xf32>
    %152 = vector.extract_strided_slice %147 {offsets = [0, 64], sizes = [16, 32], strides = [1, 1]} : vector<16x96xf32> to vector<16x32xf32>
    %153 = arith.mulf %151, %130 : vector<16x32xf32>
    %154 = arith.mulf %150, %149 : vector<16x32xf32>
    %155 = arith.addf %153, %154 : vector<16x32xf32>
    %156 = math.tanh %155 : vector<16x32xf32>
    %157 = arith.mulf %152, %156 : vector<16x32xf32>
    %158 = vector.extract_strided_slice %157 {offsets = [0, 0], sizes = [2, 16], strides = [1, 1]} : vector<16x32xf32> to vector<2x16xf32>
    %159 = vector.extract_strided_slice %157 {offsets = [8, 16], sizes = [2, 16], strides = [1, 1]} : vector<16x32xf32> to vector<2x16xf32>
    %c80_66 = arith.constant 80 : index
    %c0_67 = arith.constant 0 : index
    %160 = vector.load %arg13[%c80_66, %c0_67] : memref<128x32xf32, #tpu.memory_space<vmem>>, vector<2x16xf32>
    tpu.vector_store %arg13[%c80_66, %c0_67], %158 {strides = array<i32>} : memref<128x32xf32, #tpu.memory_space<vmem>>, vector<2x16xf32>,
    %c40_68 = arith.constant 40 : index
    %c0_69 = arith.constant 0 : index
    %161 = vector.load %arg13[%c40_68, %c0_69] : memref<128x32xf32, #tpu.memory_space<vmem>>, vector<2x16xf32>
    tpu.vector_store %arg13[%c40_68, %c0_69], %158 {strides = array<i32>} : memref<128x32xf32, #tpu.memory_space<vmem>>, vector<2x16xf32>,
    %c32_70 = arith.constant 32 : index
    %c16_71 = arith.constant 16 : index
    %162 = vector.load %arg13[%c32_70, %c16_71] : memref<128x32xf32, #tpu.memory_space<vmem>>, vector<2x16xf32>
    tpu.vector_store %arg13[%c32_70, %c16_71], %159 {strides = array<i32>} : memref<128x32xf32, #tpu.memory_space<vmem>>, vector<2x16xf32>,
    %c88_72 = arith.constant 88 : index
    %c16_73 = arith.constant 16 : index
    %163 = vector.load %arg13[%c88_72, %c16_73] : memref<128x32xf32, #tpu.memory_space<vmem>>, vector<2x16xf32>
    tpu.vector_store %arg13[%c88_72, %c16_73], %159 {strides = array<i32>} : memref<128x32xf32, #tpu.memory_space<vmem>>, vector<2x16xf32>,
    %c96_74 = arith.constant 96 : index
    %c0_75 = arith.constant 0 : index
    %164 = vector.load %arg12[%c96_74, %c0_75] : memref<128x128xf32, #tpu.memory_space<vmem>>, vector<16x128xf32>
    %cst_76 = arith.constant dense<0.000000e+00> : vector<16x128xf32>
    %165 = tpu.matmul %157, %5, %cst_76 {dimension_numbers = #tpu.dot_dimension_numbers<[1], [0], [0], [1], [0, 0, 1, 1], [], []>} : vector<16x32xf32>, vector<32x128xf32>, vector<16x128xf32> -> vector<16x128xf32>
    %166 = arith.addf %164, %165 : vector<16x128xf32>
    %167 = vector.extract_strided_slice %166 {offsets = [0, 0], sizes = [16, 96], strides = [1, 1]} : vector<16x128xf32> to vector<16x96xf32>
    %168 = arith.negf %167 : vector<16x96xf32>
    %169 = math.exp %168 : vector<16x96xf32>
    %cst_77 = arith.constant 1.000000e+00 : f32
    %170 = vector.broadcast %cst_77 : f32 to vector<16x96xf32>
    %171 = arith.addf %170, %169 : vector<16x96xf32>
    %172 = arith.divf %170, %171 : vector<16x96xf32>
    %173 = vector.extract_strided_slice %166 {offsets = [0, 96], sizes = [16, 32], strides = [1, 1]} : vector<16x128xf32> to vector<16x32xf32>
    %174 = math.tanh %173 : vector<16x32xf32>
    %175 = vector.extract_strided_slice %172 {offsets = [0, 0], sizes = [16, 32], strides = [1, 1]} : vector<16x96xf32> to vector<16x32xf32>
    %176 = vector.extract_strided_slice %172 {offsets = [0, 32], sizes = [16, 32], strides = [1, 1]} : vector<16x96xf32> to vector<16x32xf32>
    %177 = vector.extract_strided_slice %172 {offsets = [0, 64], sizes = [16, 32], strides = [1, 1]} : vector<16x96xf32> to vector<16x32xf32>
    %178 = arith.mulf %176, %155 : vector<16x32xf32>
    %179 = arith.mulf %175, %174 : vector<16x32xf32>
    %180 = arith.addf %178, %179 : vector<16x32xf32>
    %181 = math.tanh %180 : vector<16x32xf32>
    %182 = arith.mulf %177, %181 : vector<16x32xf32>
    %183 = vector.extract_strided_slice %182 {offsets = [0, 0], sizes = [2, 16], strides = [1, 1]} : vector<16x32xf32> to vector<2x16xf32>
    %184 = vector.extract_strided_slice %182 {offsets = [8, 16], sizes = [2, 16], strides = [1, 1]} : vector<16x32xf32> to vector<2x16xf32>
    %c96_78 = arith.constant 96 : index
    %c0_79 = arith.constant 0 : index
    %185 = vector.load %arg13[%c96_78, %c0_79] : memref<128x32xf32, #tpu.memory_space<vmem>>, vector<2x16xf32>
    tpu.vector_store %arg13[%c96_78, %c0_79], %183 {strides = array<i32>} : memref<128x32xf32, #tpu.memory_space<vmem>>, vector<2x16xf32>,
    %c24_80 = arith.constant 24 : index
    %c0_81 = arith.constant 0 : index
    %186 = vector.load %arg13[%c24_80, %c0_81] : memref<128x32xf32, #tpu.memory_space<vmem>>, vector<2x16xf32>
    tpu.vector_store %arg13[%c24_80, %c0_81], %183 {strides = array<i32>} : memref<128x32xf32, #tpu.memory_space<vmem>>, vector<2x16xf32>,
    %c16_82 = arith.constant 16 : index
    %c16_83 = arith.constant 16 : index
    %187 = vector.load %arg13[%c16_82, %c16_83] : memref<128x32xf32, #tpu.memory_space<vmem>>, vector<2x16xf32>
    tpu.vector_store %arg13[%c16_82, %c16_83], %184 {strides = array<i32>} : memref<128x32xf32, #tpu.memory_space<vmem>>, vector<2x16xf32>,
    %c104_84 = arith.constant 104 : index
    %c16_85 = arith.constant 16 : index
    %188 = vector.load %arg13[%c104_84, %c16_85] : memref<128x32xf32, #tpu.memory_space<vmem>>, vector<2x16xf32>
    tpu.vector_store %arg13[%c104_84, %c16_85], %184 {strides = array<i32>} : memref<128x32xf32, #tpu.memory_space<vmem>>, vector<2x16xf32>,
    %c112_86 = arith.constant 112 : index
    %c0_87 = arith.constant 0 : index
    %189 = vector.load %arg12[%c112_86, %c0_87] : memref<128x128xf32, #tpu.memory_space<vmem>>, vector<16x128xf32>
    %cst_88 = arith.constant dense<0.000000e+00> : vector<16x128xf32>
    %190 = tpu.matmul %182, %5, %cst_88 {dimension_numbers = #tpu.dot_dimension_numbers<[1], [0], [0], [1], [0, 0, 1, 1], [], []>} : vector<16x32xf32>, vector<32x128xf32>, vector<16x128xf32> -> vector<16x128xf32>
    %191 = arith.addf %189, %190 : vector<16x128xf32>
    %192 = vector.extract_strided_slice %191 {offsets = [0, 0], sizes = [16, 96], strides = [1, 1]} : vector<16x128xf32> to vector<16x96xf32>
    %193 = arith.negf %192 : vector<16x96xf32>
    %194 = math.exp %193 : vector<16x96xf32>
    %cst_89 = arith.constant 1.000000e+00 : f32
    %195 = vector.broadcast %cst_89 : f32 to vector<16x96xf32>
    %196 = arith.addf %195, %194 : vector<16x96xf32>
    %197 = arith.divf %195, %196 : vector<16x96xf32>
    %198 = vector.extract_strided_slice %191 {offsets = [0, 96], sizes = [16, 32], strides = [1, 1]} : vector<16x128xf32> to vector<16x32xf32>
    %199 = math.tanh %198 : vector<16x32xf32>
    %200 = vector.extract_strided_slice %197 {offsets = [0, 0], sizes = [16, 32], strides = [1, 1]} : vector<16x96xf32> to vector<16x32xf32>
    %201 = vector.extract_strided_slice %197 {offsets = [0, 32], sizes = [16, 32], strides = [1, 1]} : vector<16x96xf32> to vector<16x32xf32>
    %202 = vector.extract_strided_slice %197 {offsets = [0, 64], sizes = [16, 32], strides = [1, 1]} : vector<16x96xf32> to vector<16x32xf32>
    %203 = arith.mulf %201, %180 : vector<16x32xf32>
    %204 = arith.mulf %200, %199 : vector<16x32xf32>
    %205 = arith.addf %203, %204 : vector<16x32xf32>
    %206 = math.tanh %205 : vector<16x32xf32>
    %207 = arith.mulf %202, %206 : vector<16x32xf32>
    %208 = vector.extract_strided_slice %207 {offsets = [0, 0], sizes = [2, 16], strides = [1, 1]} : vector<16x32xf32> to vector<2x16xf32>
    %209 = vector.extract_strided_slice %207 {offsets = [8, 16], sizes = [2, 16], strides = [1, 1]} : vector<16x32xf32> to vector<2x16xf32>
    %c112_90 = arith.constant 112 : index
    %c0_91 = arith.constant 0 : index
    %210 = vector.load %arg13[%c112_90, %c0_91] : memref<128x32xf32, #tpu.memory_space<vmem>>, vector<2x16xf32>
    tpu.vector_store %arg13[%c112_90, %c0_91], %208 {strides = array<i32>} : memref<128x32xf32, #tpu.memory_space<vmem>>, vector<2x16xf32>,
    %c8_92 = arith.constant 8 : index
    %c0_93 = arith.constant 0 : index
    %211 = vector.load %arg13[%c8_92, %c0_93] : memref<128x32xf32, #tpu.memory_space<vmem>>, vector<2x16xf32>
    tpu.vector_store %arg13[%c8_92, %c0_93], %208 {strides = array<i32>} : memref<128x32xf32, #tpu.memory_space<vmem>>, vector<2x16xf32>,
    %c0_94 = arith.constant 0 : index
    %c16_95 = arith.constant 16 : index
    %212 = vector.load %arg13[%c0_94, %c16_95] : memref<128x32xf32, #tpu.memory_space<vmem>>, vector<2x16xf32>
    tpu.vector_store %arg13[%c0_94, %c16_95], %209 {strides = array<i32>} : memref<128x32xf32, #tpu.memory_space<vmem>>, vector<2x16xf32>,
    %c120_96 = arith.constant 120 : index
    %c16_97 = arith.constant 16 : index
    %213 = vector.load %arg13[%c120_96, %c16_97] : memref<128x32xf32, #tpu.memory_space<vmem>>, vector<2x16xf32>
    tpu.vector_store %arg13[%c120_96, %c16_97], %209 {strides = array<i32>} : memref<128x32xf32, #tpu.memory_space<vmem>>, vector<2x16xf32>,
    %c0_98 = arith.constant 0 : index
    %c0_99 = arith.constant 0 : index
    %214 = vector.load %arg4[%c0_98, %c0_99] : memref<32x128xf32, #tpu.memory_space<vmem>>, vector<32x128xf32>
    %c0_100 = arith.constant 0 : index
    %c0_101 = arith.constant 0 : index
    %215 = vector.load %arg5[%c0_100, %c0_101] : memref<32x128xf32, #tpu.memory_space<vmem>>, vector<32x128xf32>
    %c0_102 = arith.constant 0 : index
    %c0_103 = arith.constant 0 : index
    %216 = vector.load %arg6[%c0_102, %c0_103] : memref<1x128xf32, #tpu.memory_space<vmem>>, vector<1x128xf32>
    %c0_104 = arith.constant 0 : index
    %c0_105 = arith.constant 0 : index
    %217 = vector.load %arg13[%c0_104, %c0_105] : memref<128x32xf32, #tpu.memory_space<vmem>>, vector<128x32xf32>
    %cst_106 = arith.constant dense<0.000000e+00> : vector<128x128xf32>
    %218 = tpu.matmul %217, %214, %cst_106 {dimension_numbers = #tpu.dot_dimension_numbers<[1], [0], [0], [1], [0, 0, 1, 1], [], []>} : vector<128x32xf32>, vector<32x128xf32>, vector<128x128xf32> -> vector<128x128xf32>
    %219 = vector.broadcast %216 : vector<1x128xf32> to vector<128x128xf32>
    %220 = arith.addf %218, %219 : vector<128x128xf32>
    %c0_107 = arith.constant 0 : index
    %c0_108 = arith.constant 0 : index
    %221 = vector.load %arg12[%c0_107, %c0_108] : memref<128x128xf32, #tpu.memory_space<vmem>>, vector<128x128xf32>
    tpu.vector_store %arg12[%c0_107, %c0_108], %220 {strides = array<i32>} : memref<128x128xf32, #tpu.memory_space<vmem>>, vector<128x128xf32>,
    %cst_109 = arith.constant 0.000000e+00 : f32
    %222 = vector.broadcast %cst_109 : f32 to vector<16x32xf32>
    %cst_110 = arith.constant 0.000000e+00 : f32
    %223 = vector.broadcast %cst_110 : f32 to vector<16x32xf32>
    %c0_111 = arith.constant 0 : index
    %c0_112 = arith.constant 0 : index
    %224 = vector.load %arg12[%c0_111, %c0_112] : memref<128x128xf32, #tpu.memory_space<vmem>>, vector<16x128xf32>
    %cst_113 = arith.constant dense<0.000000e+00> : vector<16x128xf32>
    %225 = tpu.matmul %222, %215, %cst_113 {dimension_numbers = #tpu.dot_dimension_numbers<[1], [0], [0], [1], [0, 0, 1, 1], [], []>} : vector<16x32xf32>, vector<32x128xf32>, vector<16x128xf32> -> vector<16x128xf32>
    %226 = arith.addf %224, %225 : vector<16x128xf32>
    %227 = vector.extract_strided_slice %226 {offsets = [0, 0], sizes = [16, 96], strides = [1, 1]} : vector<16x128xf32> to vector<16x96xf32>
    %228 = arith.negf %227 : vector<16x96xf32>
    %229 = math.exp %228 : vector<16x96xf32>
    %cst_114 = arith.constant 1.000000e+00 : f32
    %230 = vector.broadcast %cst_114 : f32 to vector<16x96xf32>
    %231 = arith.addf %230, %229 : vector<16x96xf32>
    %232 = arith.divf %230, %231 : vector<16x96xf32>
    %233 = vector.extract_strided_slice %226 {offsets = [0, 96], sizes = [16, 32], strides = [1, 1]} : vector<16x128xf32> to vector<16x32xf32>
    %234 = math.tanh %233 : vector<16x32xf32>
    %235 = vector.extract_strided_slice %232 {offsets = [0, 0], sizes = [16, 32], strides = [1, 1]} : vector<16x96xf32> to vector<16x32xf32>
    %236 = vector.extract_strided_slice %232 {offsets = [0, 32], sizes = [16, 32], strides = [1, 1]} : vector<16x96xf32> to vector<16x32xf32>
    %237 = vector.extract_strided_slice %232 {offsets = [0, 64], sizes = [16, 32], strides = [1, 1]} : vector<16x96xf32> to vector<16x32xf32>
    %238 = arith.mulf %236, %223 : vector<16x32xf32>
    %239 = arith.mulf %235, %234 : vector<16x32xf32>
    %240 = arith.addf %238, %239 : vector<16x32xf32>
    %241 = math.tanh %240 : vector<16x32xf32>
    %242 = arith.mulf %237, %241 : vector<16x32xf32>
    %243 = vector.extract_strided_slice %242 {offsets = [0, 0], sizes = [2, 16], strides = [1, 1]} : vector<16x32xf32> to vector<2x16xf32>
    %244 = vector.extract_strided_slice %242 {offsets = [8, 16], sizes = [2, 16], strides = [1, 1]} : vector<16x32xf32> to vector<2x16xf32>
    %c0_115 = arith.constant 0 : index
    %c0_116 = arith.constant 0 : index
    %245 = vector.load %arg14[%c0_115, %c0_116] : memref<128x32xf32, #tpu.memory_space<vmem>>, vector<2x16xf32>
    tpu.vector_store %arg14[%c0_115, %c0_116], %243 {strides = array<i32>} : memref<128x32xf32, #tpu.memory_space<vmem>>, vector<2x16xf32>,
    %c120_117 = arith.constant 120 : index
    %c0_118 = arith.constant 0 : index
    %246 = vector.load %arg14[%c120_117, %c0_118] : memref<128x32xf32, #tpu.memory_space<vmem>>, vector<2x16xf32>
    tpu.vector_store %arg14[%c120_117, %c0_118], %243 {strides = array<i32>} : memref<128x32xf32, #tpu.memory_space<vmem>>, vector<2x16xf32>,
    %c112_119 = arith.constant 112 : index
    %c16_120 = arith.constant 16 : index
    %247 = vector.load %arg14[%c112_119, %c16_120] : memref<128x32xf32, #tpu.memory_space<vmem>>, vector<2x16xf32>
    tpu.vector_store %arg14[%c112_119, %c16_120], %244 {strides = array<i32>} : memref<128x32xf32, #tpu.memory_space<vmem>>, vector<2x16xf32>,
    %c8_121 = arith.constant 8 : index
    %c16_122 = arith.constant 16 : index
    %248 = vector.load %arg14[%c8_121, %c16_122] : memref<128x32xf32, #tpu.memory_space<vmem>>, vector<2x16xf32>
    tpu.vector_store %arg14[%c8_121, %c16_122], %244 {strides = array<i32>} : memref<128x32xf32, #tpu.memory_space<vmem>>, vector<2x16xf32>,
    %c16_123 = arith.constant 16 : index
    %c0_124 = arith.constant 0 : index
    %249 = vector.load %arg12[%c16_123, %c0_124] : memref<128x128xf32, #tpu.memory_space<vmem>>, vector<16x128xf32>
    %cst_125 = arith.constant dense<0.000000e+00> : vector<16x128xf32>
    %250 = tpu.matmul %242, %215, %cst_125 {dimension_numbers = #tpu.dot_dimension_numbers<[1], [0], [0], [1], [0, 0, 1, 1], [], []>} : vector<16x32xf32>, vector<32x128xf32>, vector<16x128xf32> -> vector<16x128xf32>
    %251 = arith.addf %249, %250 : vector<16x128xf32>
    %252 = vector.extract_strided_slice %251 {offsets = [0, 0], sizes = [16, 96], strides = [1, 1]} : vector<16x128xf32> to vector<16x96xf32>
    %253 = arith.negf %252 : vector<16x96xf32>
    %254 = math.exp %253 : vector<16x96xf32>
    %cst_126 = arith.constant 1.000000e+00 : f32
    %255 = vector.broadcast %cst_126 : f32 to vector<16x96xf32>
    %256 = arith.addf %255, %254 : vector<16x96xf32>
    %257 = arith.divf %255, %256 : vector<16x96xf32>
    %258 = vector.extract_strided_slice %251 {offsets = [0, 96], sizes = [16, 32], strides = [1, 1]} : vector<16x128xf32> to vector<16x32xf32>
    %259 = math.tanh %258 : vector<16x32xf32>
    %260 = vector.extract_strided_slice %257 {offsets = [0, 0], sizes = [16, 32], strides = [1, 1]} : vector<16x96xf32> to vector<16x32xf32>
    %261 = vector.extract_strided_slice %257 {offsets = [0, 32], sizes = [16, 32], strides = [1, 1]} : vector<16x96xf32> to vector<16x32xf32>
    %262 = vector.extract_strided_slice %257 {offsets = [0, 64], sizes = [16, 32], strides = [1, 1]} : vector<16x96xf32> to vector<16x32xf32>
    %263 = arith.mulf %261, %240 : vector<16x32xf32>
    %264 = arith.mulf %260, %259 : vector<16x32xf32>
    %265 = arith.addf %263, %264 : vector<16x32xf32>
    %266 = math.tanh %265 : vector<16x32xf32>
    %267 = arith.mulf %262, %266 : vector<16x32xf32>
    %268 = vector.extract_strided_slice %267 {offsets = [0, 0], sizes = [2, 16], strides = [1, 1]} : vector<16x32xf32> to vector<2x16xf32>
    %269 = vector.extract_strided_slice %267 {offsets = [8, 16], sizes = [2, 16], strides = [1, 1]} : vector<16x32xf32> to vector<2x16xf32>
    %c16_127 = arith.constant 16 : index
    %c0_128 = arith.constant 0 : index
    %270 = vector.load %arg14[%c16_127, %c0_128] : memref<128x32xf32, #tpu.memory_space<vmem>>, vector<2x16xf32>
    tpu.vector_store %arg14[%c16_127, %c0_128], %268 {strides = array<i32>} : memref<128x32xf32, #tpu.memory_space<vmem>>, vector<2x16xf32>,
    %c104_129 = arith.constant 104 : index
    %c0_130 = arith.constant 0 : index
    %271 = vector.load %arg14[%c104_129, %c0_130] : memref<128x32xf32, #tpu.memory_space<vmem>>, vector<2x16xf32>
    tpu.vector_store %arg14[%c104_129, %c0_130], %268 {strides = array<i32>} : memref<128x32xf32, #tpu.memory_space<vmem>>, vector<2x16xf32>,
    %c96_131 = arith.constant 96 : index
    %c16_132 = arith.constant 16 : index
    %272 = vector.load %arg14[%c96_131, %c16_132] : memref<128x32xf32, #tpu.memory_space<vmem>>, vector<2x16xf32>
    tpu.vector_store %arg14[%c96_131, %c16_132], %269 {strides = array<i32>} : memref<128x32xf32, #tpu.memory_space<vmem>>, vector<2x16xf32>,
    %c24_133 = arith.constant 24 : index
    %c16_134 = arith.constant 16 : index
    %273 = vector.load %arg14[%c24_133, %c16_134] : memref<128x32xf32, #tpu.memory_space<vmem>>, vector<2x16xf32>
    tpu.vector_store %arg14[%c24_133, %c16_134], %269 {strides = array<i32>} : memref<128x32xf32, #tpu.memory_space<vmem>>, vector<2x16xf32>,
    %c32_135 = arith.constant 32 : index
    %c0_136 = arith.constant 0 : index
    %274 = vector.load %arg12[%c32_135, %c0_136] : memref<128x128xf32, #tpu.memory_space<vmem>>, vector<16x128xf32>
    %cst_137 = arith.constant dense<0.000000e+00> : vector<16x128xf32>
    %275 = tpu.matmul %267, %215, %cst_137 {dimension_numbers = #tpu.dot_dimension_numbers<[1], [0], [0], [1], [0, 0, 1, 1], [], []>} : vector<16x32xf32>, vector<32x128xf32>, vector<16x128xf32> -> vector<16x128xf32>
    %276 = arith.addf %274, %275 : vector<16x128xf32>
    %277 = vector.extract_strided_slice %276 {offsets = [0, 0], sizes = [16, 96], strides = [1, 1]} : vector<16x128xf32> to vector<16x96xf32>
    %278 = arith.negf %277 : vector<16x96xf32>
    %279 = math.exp %278 : vector<16x96xf32>
    %cst_138 = arith.constant 1.000000e+00 : f32
    %280 = vector.broadcast %cst_138 : f32 to vector<16x96xf32>
    %281 = arith.addf %280, %279 : vector<16x96xf32>
    %282 = arith.divf %280, %281 : vector<16x96xf32>
    %283 = vector.extract_strided_slice %276 {offsets = [0, 96], sizes = [16, 32], strides = [1, 1]} : vector<16x128xf32> to vector<16x32xf32>
    %284 = math.tanh %283 : vector<16x32xf32>
    %285 = vector.extract_strided_slice %282 {offsets = [0, 0], sizes = [16, 32], strides = [1, 1]} : vector<16x96xf32> to vector<16x32xf32>
    %286 = vector.extract_strided_slice %282 {offsets = [0, 32], sizes = [16, 32], strides = [1, 1]} : vector<16x96xf32> to vector<16x32xf32>
    %287 = vector.extract_strided_slice %282 {offsets = [0, 64], sizes = [16, 32], strides = [1, 1]} : vector<16x96xf32> to vector<16x32xf32>
    %288 = arith.mulf %286, %265 : vector<16x32xf32>
    %289 = arith.mulf %285, %284 : vector<16x32xf32>
    %290 = arith.addf %288, %289 : vector<16x32xf32>
    %291 = math.tanh %290 : vector<16x32xf32>
    %292 = arith.mulf %287, %291 : vector<16x32xf32>
    %293 = vector.extract_strided_slice %292 {offsets = [0, 0], sizes = [2, 16], strides = [1, 1]} : vector<16x32xf32> to vector<2x16xf32>
    %294 = vector.extract_strided_slice %292 {offsets = [8, 16], sizes = [2, 16], strides = [1, 1]} : vector<16x32xf32> to vector<2x16xf32>
    %c32_139 = arith.constant 32 : index
    %c0_140 = arith.constant 0 : index
    %295 = vector.load %arg14[%c32_139, %c0_140] : memref<128x32xf32, #tpu.memory_space<vmem>>, vector<2x16xf32>
    tpu.vector_store %arg14[%c32_139, %c0_140], %293 {strides = array<i32>} : memref<128x32xf32, #tpu.memory_space<vmem>>, vector<2x16xf32>,
    %c88_141 = arith.constant 88 : index
    %c0_142 = arith.constant 0 : index
    %296 = vector.load %arg14[%c88_141, %c0_142] : memref<128x32xf32, #tpu.memory_space<vmem>>, vector<2x16xf32>
    tpu.vector_store %arg14[%c88_141, %c0_142], %293 {strides = array<i32>} : memref<128x32xf32, #tpu.memory_space<vmem>>, vector<2x16xf32>,
    %c80_143 = arith.constant 80 : index
    %c16_144 = arith.constant 16 : index
    %297 = vector.load %arg14[%c80_143, %c16_144] : memref<128x32xf32, #tpu.memory_space<vmem>>, vector<2x16xf32>
    tpu.vector_store %arg14[%c80_143, %c16_144], %294 {strides = array<i32>} : memref<128x32xf32, #tpu.memory_space<vmem>>, vector<2x16xf32>,
    %c40_145 = arith.constant 40 : index
    %c16_146 = arith.constant 16 : index
    %298 = vector.load %arg14[%c40_145, %c16_146] : memref<128x32xf32, #tpu.memory_space<vmem>>, vector<2x16xf32>
    tpu.vector_store %arg14[%c40_145, %c16_146], %294 {strides = array<i32>} : memref<128x32xf32, #tpu.memory_space<vmem>>, vector<2x16xf32>,
    %c48_147 = arith.constant 48 : index
    %c0_148 = arith.constant 0 : index
    %299 = vector.load %arg12[%c48_147, %c0_148] : memref<128x128xf32, #tpu.memory_space<vmem>>, vector<16x128xf32>
    %cst_149 = arith.constant dense<0.000000e+00> : vector<16x128xf32>
    %300 = tpu.matmul %292, %215, %cst_149 {dimension_numbers = #tpu.dot_dimension_numbers<[1], [0], [0], [1], [0, 0, 1, 1], [], []>} : vector<16x32xf32>, vector<32x128xf32>, vector<16x128xf32> -> vector<16x128xf32>
    %301 = arith.addf %299, %300 : vector<16x128xf32>
    %302 = vector.extract_strided_slice %301 {offsets = [0, 0], sizes = [16, 96], strides = [1, 1]} : vector<16x128xf32> to vector<16x96xf32>
    %303 = arith.negf %302 : vector<16x96xf32>
    %304 = math.exp %303 : vector<16x96xf32>
    %cst_150 = arith.constant 1.000000e+00 : f32
    %305 = vector.broadcast %cst_150 : f32 to vector<16x96xf32>
    %306 = arith.addf %305, %304 : vector<16x96xf32>
    %307 = arith.divf %305, %306 : vector<16x96xf32>
    %308 = vector.extract_strided_slice %301 {offsets = [0, 96], sizes = [16, 32], strides = [1, 1]} : vector<16x128xf32> to vector<16x32xf32>
    %309 = math.tanh %308 : vector<16x32xf32>
    %310 = vector.extract_strided_slice %307 {offsets = [0, 0], sizes = [16, 32], strides = [1, 1]} : vector<16x96xf32> to vector<16x32xf32>
    %311 = vector.extract_strided_slice %307 {offsets = [0, 32], sizes = [16, 32], strides = [1, 1]} : vector<16x96xf32> to vector<16x32xf32>
    %312 = vector.extract_strided_slice %307 {offsets = [0, 64], sizes = [16, 32], strides = [1, 1]} : vector<16x96xf32> to vector<16x32xf32>
    %313 = arith.mulf %311, %290 : vector<16x32xf32>
    %314 = arith.mulf %310, %309 : vector<16x32xf32>
    %315 = arith.addf %313, %314 : vector<16x32xf32>
    %316 = math.tanh %315 : vector<16x32xf32>
    %317 = arith.mulf %312, %316 : vector<16x32xf32>
    %318 = vector.extract_strided_slice %317 {offsets = [0, 0], sizes = [2, 16], strides = [1, 1]} : vector<16x32xf32> to vector<2x16xf32>
    %319 = vector.extract_strided_slice %317 {offsets = [8, 16], sizes = [2, 16], strides = [1, 1]} : vector<16x32xf32> to vector<2x16xf32>
    %c48_151 = arith.constant 48 : index
    %c0_152 = arith.constant 0 : index
    %320 = vector.load %arg14[%c48_151, %c0_152] : memref<128x32xf32, #tpu.memory_space<vmem>>, vector<2x16xf32>
    tpu.vector_store %arg14[%c48_151, %c0_152], %318 {strides = array<i32>} : memref<128x32xf32, #tpu.memory_space<vmem>>, vector<2x16xf32>,
    %c72_153 = arith.constant 72 : index
    %c0_154 = arith.constant 0 : index
    %321 = vector.load %arg14[%c72_153, %c0_154] : memref<128x32xf32, #tpu.memory_space<vmem>>, vector<2x16xf32>
    tpu.vector_store %arg14[%c72_153, %c0_154], %318 {strides = array<i32>} : memref<128x32xf32, #tpu.memory_space<vmem>>, vector<2x16xf32>,
    %c64_155 = arith.constant 64 : index
    %c16_156 = arith.constant 16 : index
    %322 = vector.load %arg14[%c64_155, %c16_156] : memref<128x32xf32, #tpu.memory_space<vmem>>, vector<2x16xf32>
    tpu.vector_store %arg14[%c64_155, %c16_156], %319 {strides = array<i32>} : memref<128x32xf32, #tpu.memory_space<vmem>>, vector<2x16xf32>,
    %c56_157 = arith.constant 56 : index
    %c16_158 = arith.constant 16 : index
    %323 = vector.load %arg14[%c56_157, %c16_158] : memref<128x32xf32, #tpu.memory_space<vmem>>, vector<2x16xf32>
    tpu.vector_store %arg14[%c56_157, %c16_158], %319 {strides = array<i32>} : memref<128x32xf32, #tpu.memory_space<vmem>>, vector<2x16xf32>,
    %c64_159 = arith.constant 64 : index
    %c0_160 = arith.constant 0 : index
    %324 = vector.load %arg12[%c64_159, %c0_160] : memref<128x128xf32, #tpu.memory_space<vmem>>, vector<16x128xf32>
    %cst_161 = arith.constant dense<0.000000e+00> : vector<16x128xf32>
    %325 = tpu.matmul %317, %215, %cst_161 {dimension_numbers = #tpu.dot_dimension_numbers<[1], [0], [0], [1], [0, 0, 1, 1], [], []>} : vector<16x32xf32>, vector<32x128xf32>, vector<16x128xf32> -> vector<16x128xf32>
    %326 = arith.addf %324, %325 : vector<16x128xf32>
    %327 = vector.extract_strided_slice %326 {offsets = [0, 0], sizes = [16, 96], strides = [1, 1]} : vector<16x128xf32> to vector<16x96xf32>
    %328 = arith.negf %327 : vector<16x96xf32>
    %329 = math.exp %328 : vector<16x96xf32>
    %cst_162 = arith.constant 1.000000e+00 : f32
    %330 = vector.broadcast %cst_162 : f32 to vector<16x96xf32>
    %331 = arith.addf %330, %329 : vector<16x96xf32>
    %332 = arith.divf %330, %331 : vector<16x96xf32>
    %333 = vector.extract_strided_slice %326 {offsets = [0, 96], sizes = [16, 32], strides = [1, 1]} : vector<16x128xf32> to vector<16x32xf32>
    %334 = math.tanh %333 : vector<16x32xf32>
    %335 = vector.extract_strided_slice %332 {offsets = [0, 0], sizes = [16, 32], strides = [1, 1]} : vector<16x96xf32> to vector<16x32xf32>
    %336 = vector.extract_strided_slice %332 {offsets = [0, 32], sizes = [16, 32], strides = [1, 1]} : vector<16x96xf32> to vector<16x32xf32>
    %337 = vector.extract_strided_slice %332 {offsets = [0, 64], sizes = [16, 32], strides = [1, 1]} : vector<16x96xf32> to vector<16x32xf32>
    %338 = arith.mulf %336, %315 : vector<16x32xf32>
    %339 = arith.mulf %335, %334 : vector<16x32xf32>
    %340 = arith.addf %338, %339 : vector<16x32xf32>
    %341 = math.tanh %340 : vector<16x32xf32>
    %342 = arith.mulf %337, %341 : vector<16x32xf32>
    %343 = vector.extract_strided_slice %342 {offsets = [0, 0], sizes = [2, 16], strides = [1, 1]} : vector<16x32xf32> to vector<2x16xf32>
    %344 = vector.extract_strided_slice %342 {offsets = [8, 16], sizes = [2, 16], strides = [1, 1]} : vector<16x32xf32> to vector<2x16xf32>
    %c64_163 = arith.constant 64 : index
    %c0_164 = arith.constant 0 : index
    %345 = vector.load %arg14[%c64_163, %c0_164] : memref<128x32xf32, #tpu.memory_space<vmem>>, vector<2x16xf32>
    tpu.vector_store %arg14[%c64_163, %c0_164], %343 {strides = array<i32>} : memref<128x32xf32, #tpu.memory_space<vmem>>, vector<2x16xf32>,
    %c56_165 = arith.constant 56 : index
    %c0_166 = arith.constant 0 : index
    %346 = vector.load %arg14[%c56_165, %c0_166] : memref<128x32xf32, #tpu.memory_space<vmem>>, vector<2x16xf32>
    tpu.vector_store %arg14[%c56_165, %c0_166], %343 {strides = array<i32>} : memref<128x32xf32, #tpu.memory_space<vmem>>, vector<2x16xf32>,
    %c48_167 = arith.constant 48 : index
    %c16_168 = arith.constant 16 : index
    %347 = vector.load %arg14[%c48_167, %c16_168] : memref<128x32xf32, #tpu.memory_space<vmem>>, vector<2x16xf32>
    tpu.vector_store %arg14[%c48_167, %c16_168], %344 {strides = array<i32>} : memref<128x32xf32, #tpu.memory_space<vmem>>, vector<2x16xf32>,
    %c72_169 = arith.constant 72 : index
    %c16_170 = arith.constant 16 : index
    %348 = vector.load %arg14[%c72_169, %c16_170] : memref<128x32xf32, #tpu.memory_space<vmem>>, vector<2x16xf32>
    tpu.vector_store %arg14[%c72_169, %c16_170], %344 {strides = array<i32>} : memref<128x32xf32, #tpu.memory_space<vmem>>, vector<2x16xf32>,
    %c80_171 = arith.constant 80 : index
    %c0_172 = arith.constant 0 : index
    %349 = vector.load %arg12[%c80_171, %c0_172] : memref<128x128xf32, #tpu.memory_space<vmem>>, vector<16x128xf32>
    %cst_173 = arith.constant dense<0.000000e+00> : vector<16x128xf32>
    %350 = tpu.matmul %342, %215, %cst_173 {dimension_numbers = #tpu.dot_dimension_numbers<[1], [0], [0], [1], [0, 0, 1, 1], [], []>} : vector<16x32xf32>, vector<32x128xf32>, vector<16x128xf32> -> vector<16x128xf32>
    %351 = arith.addf %349, %350 : vector<16x128xf32>
    %352 = vector.extract_strided_slice %351 {offsets = [0, 0], sizes = [16, 96], strides = [1, 1]} : vector<16x128xf32> to vector<16x96xf32>
    %353 = arith.negf %352 : vector<16x96xf32>
    %354 = math.exp %353 : vector<16x96xf32>
    %cst_174 = arith.constant 1.000000e+00 : f32
    %355 = vector.broadcast %cst_174 : f32 to vector<16x96xf32>
    %356 = arith.addf %355, %354 : vector<16x96xf32>
    %357 = arith.divf %355, %356 : vector<16x96xf32>
    %358 = vector.extract_strided_slice %351 {offsets = [0, 96], sizes = [16, 32], strides = [1, 1]} : vector<16x128xf32> to vector<16x32xf32>
    %359 = math.tanh %358 : vector<16x32xf32>
    %360 = vector.extract_strided_slice %357 {offsets = [0, 0], sizes = [16, 32], strides = [1, 1]} : vector<16x96xf32> to vector<16x32xf32>
    %361 = vector.extract_strided_slice %357 {offsets = [0, 32], sizes = [16, 32], strides = [1, 1]} : vector<16x96xf32> to vector<16x32xf32>
    %362 = vector.extract_strided_slice %357 {offsets = [0, 64], sizes = [16, 32], strides = [1, 1]} : vector<16x96xf32> to vector<16x32xf32>
    %363 = arith.mulf %361, %340 : vector<16x32xf32>
    %364 = arith.mulf %360, %359 : vector<16x32xf32>
    %365 = arith.addf %363, %364 : vector<16x32xf32>
    %366 = math.tanh %365 : vector<16x32xf32>
    %367 = arith.mulf %362, %366 : vector<16x32xf32>
    %368 = vector.extract_strided_slice %367 {offsets = [0, 0], sizes = [2, 16], strides = [1, 1]} : vector<16x32xf32> to vector<2x16xf32>
    %369 = vector.extract_strided_slice %367 {offsets = [8, 16], sizes = [2, 16], strides = [1, 1]} : vector<16x32xf32> to vector<2x16xf32>
    %c80_175 = arith.constant 80 : index
    %c0_176 = arith.constant 0 : index
    %370 = vector.load %arg14[%c80_175, %c0_176] : memref<128x32xf32, #tpu.memory_space<vmem>>, vector<2x16xf32>
    tpu.vector_store %arg14[%c80_175, %c0_176], %368 {strides = array<i32>} : memref<128x32xf32, #tpu.memory_space<vmem>>, vector<2x16xf32>,
    %c40_177 = arith.constant 40 : index
    %c0_178 = arith.constant 0 : index
    %371 = vector.load %arg14[%c40_177, %c0_178] : memref<128x32xf32, #tpu.memory_space<vmem>>, vector<2x16xf32>
    tpu.vector_store %arg14[%c40_177, %c0_178], %368 {strides = array<i32>} : memref<128x32xf32, #tpu.memory_space<vmem>>, vector<2x16xf32>,
    %c32_179 = arith.constant 32 : index
    %c16_180 = arith.constant 16 : index
    %372 = vector.load %arg14[%c32_179, %c16_180] : memref<128x32xf32, #tpu.memory_space<vmem>>, vector<2x16xf32>
    tpu.vector_store %arg14[%c32_179, %c16_180], %369 {strides = array<i32>} : memref<128x32xf32, #tpu.memory_space<vmem>>, vector<2x16xf32>,
    %c88_181 = arith.constant 88 : index
    %c16_182 = arith.constant 16 : index
    %373 = vector.load %arg14[%c88_181, %c16_182] : memref<128x32xf32, #tpu.memory_space<vmem>>, vector<2x16xf32>
    tpu.vector_store %arg14[%c88_181, %c16_182], %369 {strides = array<i32>} : memref<128x32xf32, #tpu.memory_space<vmem>>, vector<2x16xf32>,
    %c96_183 = arith.constant 96 : index
    %c0_184 = arith.constant 0 : index
    %374 = vector.load %arg12[%c96_183, %c0_184] : memref<128x128xf32, #tpu.memory_space<vmem>>, vector<16x128xf32>
    %cst_185 = arith.constant dense<0.000000e+00> : vector<16x128xf32>
    %375 = tpu.matmul %367, %215, %cst_185 {dimension_numbers = #tpu.dot_dimension_numbers<[1], [0], [0], [1], [0, 0, 1, 1], [], []>} : vector<16x32xf32>, vector<32x128xf32>, vector<16x128xf32> -> vector<16x128xf32>
    %376 = arith.addf %374, %375 : vector<16x128xf32>
    %377 = vector.extract_strided_slice %376 {offsets = [0, 0], sizes = [16, 96], strides = [1, 1]} : vector<16x128xf32> to vector<16x96xf32>
    %378 = arith.negf %377 : vector<16x96xf32>
    %379 = math.exp %378 : vector<16x96xf32>
    %cst_186 = arith.constant 1.000000e+00 : f32
    %380 = vector.broadcast %cst_186 : f32 to vector<16x96xf32>
    %381 = arith.addf %380, %379 : vector<16x96xf32>
    %382 = arith.divf %380, %381 : vector<16x96xf32>
    %383 = vector.extract_strided_slice %376 {offsets = [0, 96], sizes = [16, 32], strides = [1, 1]} : vector<16x128xf32> to vector<16x32xf32>
    %384 = math.tanh %383 : vector<16x32xf32>
    %385 = vector.extract_strided_slice %382 {offsets = [0, 0], sizes = [16, 32], strides = [1, 1]} : vector<16x96xf32> to vector<16x32xf32>
    %386 = vector.extract_strided_slice %382 {offsets = [0, 32], sizes = [16, 32], strides = [1, 1]} : vector<16x96xf32> to vector<16x32xf32>
    %387 = vector.extract_strided_slice %382 {offsets = [0, 64], sizes = [16, 32], strides = [1, 1]} : vector<16x96xf32> to vector<16x32xf32>
    %388 = arith.mulf %386, %365 : vector<16x32xf32>
    %389 = arith.mulf %385, %384 : vector<16x32xf32>
    %390 = arith.addf %388, %389 : vector<16x32xf32>
    %391 = math.tanh %390 : vector<16x32xf32>
    %392 = arith.mulf %387, %391 : vector<16x32xf32>
    %393 = vector.extract_strided_slice %392 {offsets = [0, 0], sizes = [2, 16], strides = [1, 1]} : vector<16x32xf32> to vector<2x16xf32>
    %394 = vector.extract_strided_slice %392 {offsets = [8, 16], sizes = [2, 16], strides = [1, 1]} : vector<16x32xf32> to vector<2x16xf32>
    %c96_187 = arith.constant 96 : index
    %c0_188 = arith.constant 0 : index
    %395 = vector.load %arg14[%c96_187, %c0_188] : memref<128x32xf32, #tpu.memory_space<vmem>>, vector<2x16xf32>
    tpu.vector_store %arg14[%c96_187, %c0_188], %393 {strides = array<i32>} : memref<128x32xf32, #tpu.memory_space<vmem>>, vector<2x16xf32>,
    %c24_189 = arith.constant 24 : index
    %c0_190 = arith.constant 0 : index
    %396 = vector.load %arg14[%c24_189, %c0_190] : memref<128x32xf32, #tpu.memory_space<vmem>>, vector<2x16xf32>
    tpu.vector_store %arg14[%c24_189, %c0_190], %393 {strides = array<i32>} : memref<128x32xf32, #tpu.memory_space<vmem>>, vector<2x16xf32>,
    %c16_191 = arith.constant 16 : index
    %c16_192 = arith.constant 16 : index
    %397 = vector.load %arg14[%c16_191, %c16_192] : memref<128x32xf32, #tpu.memory_space<vmem>>, vector<2x16xf32>
    tpu.vector_store %arg14[%c16_191, %c16_192], %394 {strides = array<i32>} : memref<128x32xf32, #tpu.memory_space<vmem>>, vector<2x16xf32>,
    %c104_193 = arith.constant 104 : index
    %c16_194 = arith.constant 16 : index
    %398 = vector.load %arg14[%c104_193, %c16_194] : memref<128x32xf32, #tpu.memory_space<vmem>>, vector<2x16xf32>
    tpu.vector_store %arg14[%c104_193, %c16_194], %394 {strides = array<i32>} : memref<128x32xf32, #tpu.memory_space<vmem>>, vector<2x16xf32>,
    %c112_195 = arith.constant 112 : index
    %c0_196 = arith.constant 0 : index
    %399 = vector.load %arg12[%c112_195, %c0_196] : memref<128x128xf32, #tpu.memory_space<vmem>>, vector<16x128xf32>
    %cst_197 = arith.constant dense<0.000000e+00> : vector<16x128xf32>
    %400 = tpu.matmul %392, %215, %cst_197 {dimension_numbers = #tpu.dot_dimension_numbers<[1], [0], [0], [1], [0, 0, 1, 1], [], []>} : vector<16x32xf32>, vector<32x128xf32>, vector<16x128xf32> -> vector<16x128xf32>
    %401 = arith.addf %399, %400 : vector<16x128xf32>
    %402 = vector.extract_strided_slice %401 {offsets = [0, 0], sizes = [16, 96], strides = [1, 1]} : vector<16x128xf32> to vector<16x96xf32>
    %403 = arith.negf %402 : vector<16x96xf32>
    %404 = math.exp %403 : vector<16x96xf32>
    %cst_198 = arith.constant 1.000000e+00 : f32
    %405 = vector.broadcast %cst_198 : f32 to vector<16x96xf32>
    %406 = arith.addf %405, %404 : vector<16x96xf32>
    %407 = arith.divf %405, %406 : vector<16x96xf32>
    %408 = vector.extract_strided_slice %401 {offsets = [0, 96], sizes = [16, 32], strides = [1, 1]} : vector<16x128xf32> to vector<16x32xf32>
    %409 = math.tanh %408 : vector<16x32xf32>
    %410 = vector.extract_strided_slice %407 {offsets = [0, 0], sizes = [16, 32], strides = [1, 1]} : vector<16x96xf32> to vector<16x32xf32>
    %411 = vector.extract_strided_slice %407 {offsets = [0, 32], sizes = [16, 32], strides = [1, 1]} : vector<16x96xf32> to vector<16x32xf32>
    %412 = vector.extract_strided_slice %407 {offsets = [0, 64], sizes = [16, 32], strides = [1, 1]} : vector<16x96xf32> to vector<16x32xf32>
    %413 = arith.mulf %411, %390 : vector<16x32xf32>
    %414 = arith.mulf %410, %409 : vector<16x32xf32>
    %415 = arith.addf %413, %414 : vector<16x32xf32>
    %416 = math.tanh %415 : vector<16x32xf32>
    %417 = arith.mulf %412, %416 : vector<16x32xf32>
    %418 = vector.extract_strided_slice %417 {offsets = [0, 0], sizes = [2, 16], strides = [1, 1]} : vector<16x32xf32> to vector<2x16xf32>
    %419 = vector.extract_strided_slice %417 {offsets = [8, 16], sizes = [2, 16], strides = [1, 1]} : vector<16x32xf32> to vector<2x16xf32>
    %c112_199 = arith.constant 112 : index
    %c0_200 = arith.constant 0 : index
    %420 = vector.load %arg14[%c112_199, %c0_200] : memref<128x32xf32, #tpu.memory_space<vmem>>, vector<2x16xf32>
    tpu.vector_store %arg14[%c112_199, %c0_200], %418 {strides = array<i32>} : memref<128x32xf32, #tpu.memory_space<vmem>>, vector<2x16xf32>,
    %c8_201 = arith.constant 8 : index
    %c0_202 = arith.constant 0 : index
    %421 = vector.load %arg14[%c8_201, %c0_202] : memref<128x32xf32, #tpu.memory_space<vmem>>, vector<2x16xf32>
    tpu.vector_store %arg14[%c8_201, %c0_202], %418 {strides = array<i32>} : memref<128x32xf32, #tpu.memory_space<vmem>>, vector<2x16xf32>,
    %c0_203 = arith.constant 0 : index
    %c16_204 = arith.constant 16 : index
    %422 = vector.load %arg14[%c0_203, %c16_204] : memref<128x32xf32, #tpu.memory_space<vmem>>, vector<2x16xf32>
    tpu.vector_store %arg14[%c0_203, %c16_204], %419 {strides = array<i32>} : memref<128x32xf32, #tpu.memory_space<vmem>>, vector<2x16xf32>,
    %c120_205 = arith.constant 120 : index
    %c16_206 = arith.constant 16 : index
    %423 = vector.load %arg14[%c120_205, %c16_206] : memref<128x32xf32, #tpu.memory_space<vmem>>, vector<2x16xf32>
    tpu.vector_store %arg14[%c120_205, %c16_206], %419 {strides = array<i32>} : memref<128x32xf32, #tpu.memory_space<vmem>>, vector<2x16xf32>,
    %c0_207 = arith.constant 0 : index
    %c0_208 = arith.constant 0 : index
    %424 = vector.load %arg7[%c0_207, %c0_208] : memref<32x128xf32, #tpu.memory_space<vmem>>, vector<32x128xf32>
    %c0_209 = arith.constant 0 : index
    %c0_210 = arith.constant 0 : index
    %425 = vector.load %arg8[%c0_209, %c0_210] : memref<32x128xf32, #tpu.memory_space<vmem>>, vector<32x128xf32>
    %c0_211 = arith.constant 0 : index
    %c0_212 = arith.constant 0 : index
    %426 = vector.load %arg9[%c0_211, %c0_212] : memref<1x128xf32, #tpu.memory_space<vmem>>, vector<1x128xf32>
    %c0_213 = arith.constant 0 : index
    %c0_214 = arith.constant 0 : index
    %427 = vector.load %arg14[%c0_213, %c0_214] : memref<128x32xf32, #tpu.memory_space<vmem>>, vector<128x32xf32>
    %cst_215 = arith.constant dense<0.000000e+00> : vector<128x128xf32>
    %428 = tpu.matmul %427, %424, %cst_215 {dimension_numbers = #tpu.dot_dimension_numbers<[1], [0], [0], [1], [0, 0, 1, 1], [], []>} : vector<128x32xf32>, vector<32x128xf32>, vector<128x128xf32> -> vector<128x128xf32>
    %429 = vector.broadcast %426 : vector<1x128xf32> to vector<128x128xf32>
    %430 = arith.addf %428, %429 : vector<128x128xf32>
    %c0_216 = arith.constant 0 : index
    %c0_217 = arith.constant 0 : index
    %431 = vector.load %arg12[%c0_216, %c0_217] : memref<128x128xf32, #tpu.memory_space<vmem>>, vector<128x128xf32>
    tpu.vector_store %arg12[%c0_216, %c0_217], %430 {strides = array<i32>} : memref<128x128xf32, #tpu.memory_space<vmem>>, vector<128x128xf32>,
    %cst_218 = arith.constant 0.000000e+00 : f32
    %432 = vector.broadcast %cst_218 : f32 to vector<16x32xf32>
    %cst_219 = arith.constant 0.000000e+00 : f32
    %433 = vector.broadcast %cst_219 : f32 to vector<16x32xf32>
    %c0_220 = arith.constant 0 : index
    %c0_221 = arith.constant 0 : index
    %434 = vector.load %arg12[%c0_220, %c0_221] : memref<128x128xf32, #tpu.memory_space<vmem>>, vector<16x128xf32>
    %cst_222 = arith.constant dense<0.000000e+00> : vector<16x128xf32>
    %435 = tpu.matmul %432, %425, %cst_222 {dimension_numbers = #tpu.dot_dimension_numbers<[1], [0], [0], [1], [0, 0, 1, 1], [], []>} : vector<16x32xf32>, vector<32x128xf32>, vector<16x128xf32> -> vector<16x128xf32>
    %436 = arith.addf %434, %435 : vector<16x128xf32>
    %437 = vector.extract_strided_slice %436 {offsets = [0, 0], sizes = [16, 96], strides = [1, 1]} : vector<16x128xf32> to vector<16x96xf32>
    %438 = arith.negf %437 : vector<16x96xf32>
    %439 = math.exp %438 : vector<16x96xf32>
    %cst_223 = arith.constant 1.000000e+00 : f32
    %440 = vector.broadcast %cst_223 : f32 to vector<16x96xf32>
    %441 = arith.addf %440, %439 : vector<16x96xf32>
    %442 = arith.divf %440, %441 : vector<16x96xf32>
    %443 = vector.extract_strided_slice %436 {offsets = [0, 96], sizes = [16, 32], strides = [1, 1]} : vector<16x128xf32> to vector<16x32xf32>
    %444 = math.tanh %443 : vector<16x32xf32>
    %445 = vector.extract_strided_slice %442 {offsets = [0, 0], sizes = [16, 32], strides = [1, 1]} : vector<16x96xf32> to vector<16x32xf32>
    %446 = vector.extract_strided_slice %442 {offsets = [0, 32], sizes = [16, 32], strides = [1, 1]} : vector<16x96xf32> to vector<16x32xf32>
    %447 = vector.extract_strided_slice %442 {offsets = [0, 64], sizes = [16, 32], strides = [1, 1]} : vector<16x96xf32> to vector<16x32xf32>
    %448 = arith.mulf %446, %433 : vector<16x32xf32>
    %449 = arith.mulf %445, %444 : vector<16x32xf32>
    %450 = arith.addf %448, %449 : vector<16x32xf32>
    %451 = math.tanh %450 : vector<16x32xf32>
    %452 = arith.mulf %447, %451 : vector<16x32xf32>
    %453 = vector.extract_strided_slice %452 {offsets = [0, 0], sizes = [2, 16], strides = [1, 1]} : vector<16x32xf32> to vector<2x16xf32>
    %454 = vector.extract_strided_slice %452 {offsets = [8, 16], sizes = [2, 16], strides = [1, 1]} : vector<16x32xf32> to vector<2x16xf32>
    %c0_224 = arith.constant 0 : index
    %c0_225 = arith.constant 0 : index
    %455 = vector.load %arg13[%c0_224, %c0_225] : memref<128x32xf32, #tpu.memory_space<vmem>>, vector<2x16xf32>
    tpu.vector_store %arg13[%c0_224, %c0_225], %453 {strides = array<i32>} : memref<128x32xf32, #tpu.memory_space<vmem>>, vector<2x16xf32>,
    %c120_226 = arith.constant 120 : index
    %c0_227 = arith.constant 0 : index
    %456 = vector.load %arg13[%c120_226, %c0_227] : memref<128x32xf32, #tpu.memory_space<vmem>>, vector<2x16xf32>
    tpu.vector_store %arg13[%c120_226, %c0_227], %453 {strides = array<i32>} : memref<128x32xf32, #tpu.memory_space<vmem>>, vector<2x16xf32>,
    %c112_228 = arith.constant 112 : index
    %c16_229 = arith.constant 16 : index
    %457 = vector.load %arg13[%c112_228, %c16_229] : memref<128x32xf32, #tpu.memory_space<vmem>>, vector<2x16xf32>
    tpu.vector_store %arg13[%c112_228, %c16_229], %454 {strides = array<i32>} : memref<128x32xf32, #tpu.memory_space<vmem>>, vector<2x16xf32>,
    %c8_230 = arith.constant 8 : index
    %c16_231 = arith.constant 16 : index
    %458 = vector.load %arg13[%c8_230, %c16_231] : memref<128x32xf32, #tpu.memory_space<vmem>>, vector<2x16xf32>
    tpu.vector_store %arg13[%c8_230, %c16_231], %454 {strides = array<i32>} : memref<128x32xf32, #tpu.memory_space<vmem>>, vector<2x16xf32>,
    %c16_232 = arith.constant 16 : index
    %c0_233 = arith.constant 0 : index
    %459 = vector.load %arg12[%c16_232, %c0_233] : memref<128x128xf32, #tpu.memory_space<vmem>>, vector<16x128xf32>
    %cst_234 = arith.constant dense<0.000000e+00> : vector<16x128xf32>
    %460 = tpu.matmul %452, %425, %cst_234 {dimension_numbers = #tpu.dot_dimension_numbers<[1], [0], [0], [1], [0, 0, 1, 1], [], []>} : vector<16x32xf32>, vector<32x128xf32>, vector<16x128xf32> -> vector<16x128xf32>
    %461 = arith.addf %459, %460 : vector<16x128xf32>
    %462 = vector.extract_strided_slice %461 {offsets = [0, 0], sizes = [16, 96], strides = [1, 1]} : vector<16x128xf32> to vector<16x96xf32>
    %463 = arith.negf %462 : vector<16x96xf32>
    %464 = math.exp %463 : vector<16x96xf32>
    %cst_235 = arith.constant 1.000000e+00 : f32
    %465 = vector.broadcast %cst_235 : f32 to vector<16x96xf32>
    %466 = arith.addf %465, %464 : vector<16x96xf32>
    %467 = arith.divf %465, %466 : vector<16x96xf32>
    %468 = vector.extract_strided_slice %461 {offsets = [0, 96], sizes = [16, 32], strides = [1, 1]} : vector<16x128xf32> to vector<16x32xf32>
    %469 = math.tanh %468 : vector<16x32xf32>
    %470 = vector.extract_strided_slice %467 {offsets = [0, 0], sizes = [16, 32], strides = [1, 1]} : vector<16x96xf32> to vector<16x32xf32>
    %471 = vector.extract_strided_slice %467 {offsets = [0, 32], sizes = [16, 32], strides = [1, 1]} : vector<16x96xf32> to vector<16x32xf32>
    %472 = vector.extract_strided_slice %467 {offsets = [0, 64], sizes = [16, 32], strides = [1, 1]} : vector<16x96xf32> to vector<16x32xf32>
    %473 = arith.mulf %471, %450 : vector<16x32xf32>
    %474 = arith.mulf %470, %469 : vector<16x32xf32>
    %475 = arith.addf %473, %474 : vector<16x32xf32>
    %476 = math.tanh %475 : vector<16x32xf32>
    %477 = arith.mulf %472, %476 : vector<16x32xf32>
    %478 = vector.extract_strided_slice %477 {offsets = [0, 0], sizes = [2, 16], strides = [1, 1]} : vector<16x32xf32> to vector<2x16xf32>
    %479 = vector.extract_strided_slice %477 {offsets = [8, 16], sizes = [2, 16], strides = [1, 1]} : vector<16x32xf32> to vector<2x16xf32>
    %c16_236 = arith.constant 16 : index
    %c0_237 = arith.constant 0 : index
    %480 = vector.load %arg13[%c16_236, %c0_237] : memref<128x32xf32, #tpu.memory_space<vmem>>, vector<2x16xf32>
    tpu.vector_store %arg13[%c16_236, %c0_237], %478 {strides = array<i32>} : memref<128x32xf32, #tpu.memory_space<vmem>>, vector<2x16xf32>,
    %c104_238 = arith.constant 104 : index
    %c0_239 = arith.constant 0 : index
    %481 = vector.load %arg13[%c104_238, %c0_239] : memref<128x32xf32, #tpu.memory_space<vmem>>, vector<2x16xf32>
    tpu.vector_store %arg13[%c104_238, %c0_239], %478 {strides = array<i32>} : memref<128x32xf32, #tpu.memory_space<vmem>>, vector<2x16xf32>,
    %c96_240 = arith.constant 96 : index
    %c16_241 = arith.constant 16 : index
    %482 = vector.load %arg13[%c96_240, %c16_241] : memref<128x32xf32, #tpu.memory_space<vmem>>, vector<2x16xf32>
    tpu.vector_store %arg13[%c96_240, %c16_241], %479 {strides = array<i32>} : memref<128x32xf32, #tpu.memory_space<vmem>>, vector<2x16xf32>,
    %c24_242 = arith.constant 24 : index
    %c16_243 = arith.constant 16 : index
    %483 = vector.load %arg13[%c24_242, %c16_243] : memref<128x32xf32, #tpu.memory_space<vmem>>, vector<2x16xf32>
    tpu.vector_store %arg13[%c24_242, %c16_243], %479 {strides = array<i32>} : memref<128x32xf32, #tpu.memory_space<vmem>>, vector<2x16xf32>,
    %c32_244 = arith.constant 32 : index
    %c0_245 = arith.constant 0 : index
    %484 = vector.load %arg12[%c32_244, %c0_245] : memref<128x128xf32, #tpu.memory_space<vmem>>, vector<16x128xf32>
    %cst_246 = arith.constant dense<0.000000e+00> : vector<16x128xf32>
    %485 = tpu.matmul %477, %425, %cst_246 {dimension_numbers = #tpu.dot_dimension_numbers<[1], [0], [0], [1], [0, 0, 1, 1], [], []>} : vector<16x32xf32>, vector<32x128xf32>, vector<16x128xf32> -> vector<16x128xf32>
    %486 = arith.addf %484, %485 : vector<16x128xf32>
    %487 = vector.extract_strided_slice %486 {offsets = [0, 0], sizes = [16, 96], strides = [1, 1]} : vector<16x128xf32> to vector<16x96xf32>
    %488 = arith.negf %487 : vector<16x96xf32>
    %489 = math.exp %488 : vector<16x96xf32>
    %cst_247 = arith.constant 1.000000e+00 : f32
    %490 = vector.broadcast %cst_247 : f32 to vector<16x96xf32>
    %491 = arith.addf %490, %489 : vector<16x96xf32>
    %492 = arith.divf %490, %491 : vector<16x96xf32>
    %493 = vector.extract_strided_slice %486 {offsets = [0, 96], sizes = [16, 32], strides = [1, 1]} : vector<16x128xf32> to vector<16x32xf32>
    %494 = math.tanh %493 : vector<16x32xf32>
    %495 = vector.extract_strided_slice %492 {offsets = [0, 0], sizes = [16, 32], strides = [1, 1]} : vector<16x96xf32> to vector<16x32xf32>
    %496 = vector.extract_strided_slice %492 {offsets = [0, 32], sizes = [16, 32], strides = [1, 1]} : vector<16x96xf32> to vector<16x32xf32>
    %497 = vector.extract_strided_slice %492 {offsets = [0, 64], sizes = [16, 32], strides = [1, 1]} : vector<16x96xf32> to vector<16x32xf32>
    %498 = arith.mulf %496, %475 : vector<16x32xf32>
    %499 = arith.mulf %495, %494 : vector<16x32xf32>
    %500 = arith.addf %498, %499 : vector<16x32xf32>
    %501 = math.tanh %500 : vector<16x32xf32>
    %502 = arith.mulf %497, %501 : vector<16x32xf32>
    %503 = vector.extract_strided_slice %502 {offsets = [0, 0], sizes = [2, 16], strides = [1, 1]} : vector<16x32xf32> to vector<2x16xf32>
    %504 = vector.extract_strided_slice %502 {offsets = [8, 16], sizes = [2, 16], strides = [1, 1]} : vector<16x32xf32> to vector<2x16xf32>
    %c32_248 = arith.constant 32 : index
    %c0_249 = arith.constant 0 : index
    %505 = vector.load %arg13[%c32_248, %c0_249] : memref<128x32xf32, #tpu.memory_space<vmem>>, vector<2x16xf32>
    tpu.vector_store %arg13[%c32_248, %c0_249], %503 {strides = array<i32>} : memref<128x32xf32, #tpu.memory_space<vmem>>, vector<2x16xf32>,
    %c88_250 = arith.constant 88 : index
    %c0_251 = arith.constant 0 : index
    %506 = vector.load %arg13[%c88_250, %c0_251] : memref<128x32xf32, #tpu.memory_space<vmem>>, vector<2x16xf32>
    tpu.vector_store %arg13[%c88_250, %c0_251], %503 {strides = array<i32>} : memref<128x32xf32, #tpu.memory_space<vmem>>, vector<2x16xf32>,
    %c80_252 = arith.constant 80 : index
    %c16_253 = arith.constant 16 : index
    %507 = vector.load %arg13[%c80_252, %c16_253] : memref<128x32xf32, #tpu.memory_space<vmem>>, vector<2x16xf32>
    tpu.vector_store %arg13[%c80_252, %c16_253], %504 {strides = array<i32>} : memref<128x32xf32, #tpu.memory_space<vmem>>, vector<2x16xf32>,
    %c40_254 = arith.constant 40 : index
    %c16_255 = arith.constant 16 : index
    %508 = vector.load %arg13[%c40_254, %c16_255] : memref<128x32xf32, #tpu.memory_space<vmem>>, vector<2x16xf32>
    tpu.vector_store %arg13[%c40_254, %c16_255], %504 {strides = array<i32>} : memref<128x32xf32, #tpu.memory_space<vmem>>, vector<2x16xf32>,
    %c48_256 = arith.constant 48 : index
    %c0_257 = arith.constant 0 : index
    %509 = vector.load %arg12[%c48_256, %c0_257] : memref<128x128xf32, #tpu.memory_space<vmem>>, vector<16x128xf32>
    %cst_258 = arith.constant dense<0.000000e+00> : vector<16x128xf32>
    %510 = tpu.matmul %502, %425, %cst_258 {dimension_numbers = #tpu.dot_dimension_numbers<[1], [0], [0], [1], [0, 0, 1, 1], [], []>} : vector<16x32xf32>, vector<32x128xf32>, vector<16x128xf32> -> vector<16x128xf32>
    %511 = arith.addf %509, %510 : vector<16x128xf32>
    %512 = vector.extract_strided_slice %511 {offsets = [0, 0], sizes = [16, 96], strides = [1, 1]} : vector<16x128xf32> to vector<16x96xf32>
    %513 = arith.negf %512 : vector<16x96xf32>
    %514 = math.exp %513 : vector<16x96xf32>
    %cst_259 = arith.constant 1.000000e+00 : f32
    %515 = vector.broadcast %cst_259 : f32 to vector<16x96xf32>
    %516 = arith.addf %515, %514 : vector<16x96xf32>
    %517 = arith.divf %515, %516 : vector<16x96xf32>
    %518 = vector.extract_strided_slice %511 {offsets = [0, 96], sizes = [16, 32], strides = [1, 1]} : vector<16x128xf32> to vector<16x32xf32>
    %519 = math.tanh %518 : vector<16x32xf32>
    %520 = vector.extract_strided_slice %517 {offsets = [0, 0], sizes = [16, 32], strides = [1, 1]} : vector<16x96xf32> to vector<16x32xf32>
    %521 = vector.extract_strided_slice %517 {offsets = [0, 32], sizes = [16, 32], strides = [1, 1]} : vector<16x96xf32> to vector<16x32xf32>
    %522 = vector.extract_strided_slice %517 {offsets = [0, 64], sizes = [16, 32], strides = [1, 1]} : vector<16x96xf32> to vector<16x32xf32>
    %523 = arith.mulf %521, %500 : vector<16x32xf32>
    %524 = arith.mulf %520, %519 : vector<16x32xf32>
    %525 = arith.addf %523, %524 : vector<16x32xf32>
    %526 = math.tanh %525 : vector<16x32xf32>
    %527 = arith.mulf %522, %526 : vector<16x32xf32>
    %528 = vector.extract_strided_slice %527 {offsets = [0, 0], sizes = [2, 16], strides = [1, 1]} : vector<16x32xf32> to vector<2x16xf32>
    %529 = vector.extract_strided_slice %527 {offsets = [8, 16], sizes = [2, 16], strides = [1, 1]} : vector<16x32xf32> to vector<2x16xf32>
    %c48_260 = arith.constant 48 : index
    %c0_261 = arith.constant 0 : index
    %530 = vector.load %arg13[%c48_260, %c0_261] : memref<128x32xf32, #tpu.memory_space<vmem>>, vector<2x16xf32>
    tpu.vector_store %arg13[%c48_260, %c0_261], %528 {strides = array<i32>} : memref<128x32xf32, #tpu.memory_space<vmem>>, vector<2x16xf32>,
    %c72_262 = arith.constant 72 : index
    %c0_263 = arith.constant 0 : index
    %531 = vector.load %arg13[%c72_262, %c0_263] : memref<128x32xf32, #tpu.memory_space<vmem>>, vector<2x16xf32>
    tpu.vector_store %arg13[%c72_262, %c0_263], %528 {strides = array<i32>} : memref<128x32xf32, #tpu.memory_space<vmem>>, vector<2x16xf32>,
    %c64_264 = arith.constant 64 : index
    %c16_265 = arith.constant 16 : index
    %532 = vector.load %arg13[%c64_264, %c16_265] : memref<128x32xf32, #tpu.memory_space<vmem>>, vector<2x16xf32>
    tpu.vector_store %arg13[%c64_264, %c16_265], %529 {strides = array<i32>} : memref<128x32xf32, #tpu.memory_space<vmem>>, vector<2x16xf32>,
    %c56_266 = arith.constant 56 : index
    %c16_267 = arith.constant 16 : index
    %533 = vector.load %arg13[%c56_266, %c16_267] : memref<128x32xf32, #tpu.memory_space<vmem>>, vector<2x16xf32>
    tpu.vector_store %arg13[%c56_266, %c16_267], %529 {strides = array<i32>} : memref<128x32xf32, #tpu.memory_space<vmem>>, vector<2x16xf32>,
    %c64_268 = arith.constant 64 : index
    %c0_269 = arith.constant 0 : index
    %534 = vector.load %arg12[%c64_268, %c0_269] : memref<128x128xf32, #tpu.memory_space<vmem>>, vector<16x128xf32>
    %cst_270 = arith.constant dense<0.000000e+00> : vector<16x128xf32>
    %535 = tpu.matmul %527, %425, %cst_270 {dimension_numbers = #tpu.dot_dimension_numbers<[1], [0], [0], [1], [0, 0, 1, 1], [], []>} : vector<16x32xf32>, vector<32x128xf32>, vector<16x128xf32> -> vector<16x128xf32>
    %536 = arith.addf %534, %535 : vector<16x128xf32>
    %537 = vector.extract_strided_slice %536 {offsets = [0, 0], sizes = [16, 96], strides = [1, 1]} : vector<16x128xf32> to vector<16x96xf32>
    %538 = arith.negf %537 : vector<16x96xf32>
    %539 = math.exp %538 : vector<16x96xf32>
    %cst_271 = arith.constant 1.000000e+00 : f32
    %540 = vector.broadcast %cst_271 : f32 to vector<16x96xf32>
    %541 = arith.addf %540, %539 : vector<16x96xf32>
    %542 = arith.divf %540, %541 : vector<16x96xf32>
    %543 = vector.extract_strided_slice %536 {offsets = [0, 96], sizes = [16, 32], strides = [1, 1]} : vector<16x128xf32> to vector<16x32xf32>
    %544 = math.tanh %543 : vector<16x32xf32>
    %545 = vector.extract_strided_slice %542 {offsets = [0, 0], sizes = [16, 32], strides = [1, 1]} : vector<16x96xf32> to vector<16x32xf32>
    %546 = vector.extract_strided_slice %542 {offsets = [0, 32], sizes = [16, 32], strides = [1, 1]} : vector<16x96xf32> to vector<16x32xf32>
    %547 = vector.extract_strided_slice %542 {offsets = [0, 64], sizes = [16, 32], strides = [1, 1]} : vector<16x96xf32> to vector<16x32xf32>
    %548 = arith.mulf %546, %525 : vector<16x32xf32>
    %549 = arith.mulf %545, %544 : vector<16x32xf32>
    %550 = arith.addf %548, %549 : vector<16x32xf32>
    %551 = math.tanh %550 : vector<16x32xf32>
    %552 = arith.mulf %547, %551 : vector<16x32xf32>
    %553 = vector.extract_strided_slice %552 {offsets = [0, 0], sizes = [2, 16], strides = [1, 1]} : vector<16x32xf32> to vector<2x16xf32>
    %554 = vector.extract_strided_slice %552 {offsets = [8, 16], sizes = [2, 16], strides = [1, 1]} : vector<16x32xf32> to vector<2x16xf32>
    %c64_272 = arith.constant 64 : index
    %c0_273 = arith.constant 0 : index
    %555 = vector.load %arg13[%c64_272, %c0_273] : memref<128x32xf32, #tpu.memory_space<vmem>>, vector<2x16xf32>
    tpu.vector_store %arg13[%c64_272, %c0_273], %553 {strides = array<i32>} : memref<128x32xf32, #tpu.memory_space<vmem>>, vector<2x16xf32>,
    %c56_274 = arith.constant 56 : index
    %c0_275 = arith.constant 0 : index
    %556 = vector.load %arg13[%c56_274, %c0_275] : memref<128x32xf32, #tpu.memory_space<vmem>>, vector<2x16xf32>
    tpu.vector_store %arg13[%c56_274, %c0_275], %553 {strides = array<i32>} : memref<128x32xf32, #tpu.memory_space<vmem>>, vector<2x16xf32>,
    %c48_276 = arith.constant 48 : index
    %c16_277 = arith.constant 16 : index
    %557 = vector.load %arg13[%c48_276, %c16_277] : memref<128x32xf32, #tpu.memory_space<vmem>>, vector<2x16xf32>
    tpu.vector_store %arg13[%c48_276, %c16_277], %554 {strides = array<i32>} : memref<128x32xf32, #tpu.memory_space<vmem>>, vector<2x16xf32>,
    %c72_278 = arith.constant 72 : index
    %c16_279 = arith.constant 16 : index
    %558 = vector.load %arg13[%c72_278, %c16_279] : memref<128x32xf32, #tpu.memory_space<vmem>>, vector<2x16xf32>
    tpu.vector_store %arg13[%c72_278, %c16_279], %554 {strides = array<i32>} : memref<128x32xf32, #tpu.memory_space<vmem>>, vector<2x16xf32>,
    %c80_280 = arith.constant 80 : index
    %c0_281 = arith.constant 0 : index
    %559 = vector.load %arg12[%c80_280, %c0_281] : memref<128x128xf32, #tpu.memory_space<vmem>>, vector<16x128xf32>
    %cst_282 = arith.constant dense<0.000000e+00> : vector<16x128xf32>
    %560 = tpu.matmul %552, %425, %cst_282 {dimension_numbers = #tpu.dot_dimension_numbers<[1], [0], [0], [1], [0, 0, 1, 1], [], []>} : vector<16x32xf32>, vector<32x128xf32>, vector<16x128xf32> -> vector<16x128xf32>
    %561 = arith.addf %559, %560 : vector<16x128xf32>
    %562 = vector.extract_strided_slice %561 {offsets = [0, 0], sizes = [16, 96], strides = [1, 1]} : vector<16x128xf32> to vector<16x96xf32>
    %563 = arith.negf %562 : vector<16x96xf32>
    %564 = math.exp %563 : vector<16x96xf32>
    %cst_283 = arith.constant 1.000000e+00 : f32
    %565 = vector.broadcast %cst_283 : f32 to vector<16x96xf32>
    %566 = arith.addf %565, %564 : vector<16x96xf32>
    %567 = arith.divf %565, %566 : vector<16x96xf32>
    %568 = vector.extract_strided_slice %561 {offsets = [0, 96], sizes = [16, 32], strides = [1, 1]} : vector<16x128xf32> to vector<16x32xf32>
    %569 = math.tanh %568 : vector<16x32xf32>
    %570 = vector.extract_strided_slice %567 {offsets = [0, 0], sizes = [16, 32], strides = [1, 1]} : vector<16x96xf32> to vector<16x32xf32>
    %571 = vector.extract_strided_slice %567 {offsets = [0, 32], sizes = [16, 32], strides = [1, 1]} : vector<16x96xf32> to vector<16x32xf32>
    %572 = vector.extract_strided_slice %567 {offsets = [0, 64], sizes = [16, 32], strides = [1, 1]} : vector<16x96xf32> to vector<16x32xf32>
    %573 = arith.mulf %571, %550 : vector<16x32xf32>
    %574 = arith.mulf %570, %569 : vector<16x32xf32>
    %575 = arith.addf %573, %574 : vector<16x32xf32>
    %576 = math.tanh %575 : vector<16x32xf32>
    %577 = arith.mulf %572, %576 : vector<16x32xf32>
    %578 = vector.extract_strided_slice %577 {offsets = [0, 0], sizes = [2, 16], strides = [1, 1]} : vector<16x32xf32> to vector<2x16xf32>
    %579 = vector.extract_strided_slice %577 {offsets = [8, 16], sizes = [2, 16], strides = [1, 1]} : vector<16x32xf32> to vector<2x16xf32>
    %c80_284 = arith.constant 80 : index
    %c0_285 = arith.constant 0 : index
    %580 = vector.load %arg13[%c80_284, %c0_285] : memref<128x32xf32, #tpu.memory_space<vmem>>, vector<2x16xf32>
    tpu.vector_store %arg13[%c80_284, %c0_285], %578 {strides = array<i32>} : memref<128x32xf32, #tpu.memory_space<vmem>>, vector<2x16xf32>,
    %c40_286 = arith.constant 40 : index
    %c0_287 = arith.constant 0 : index
    %581 = vector.load %arg13[%c40_286, %c0_287] : memref<128x32xf32, #tpu.memory_space<vmem>>, vector<2x16xf32>
    tpu.vector_store %arg13[%c40_286, %c0_287], %578 {strides = array<i32>} : memref<128x32xf32, #tpu.memory_space<vmem>>, vector<2x16xf32>,
    %c32_288 = arith.constant 32 : index
    %c16_289 = arith.constant 16 : index
    %582 = vector.load %arg13[%c32_288, %c16_289] : memref<128x32xf32, #tpu.memory_space<vmem>>, vector<2x16xf32>
    tpu.vector_store %arg13[%c32_288, %c16_289], %579 {strides = array<i32>} : memref<128x32xf32, #tpu.memory_space<vmem>>, vector<2x16xf32>,
    %c88_290 = arith.constant 88 : index
    %c16_291 = arith.constant 16 : index
    %583 = vector.load %arg13[%c88_290, %c16_291] : memref<128x32xf32, #tpu.memory_space<vmem>>, vector<2x16xf32>
    tpu.vector_store %arg13[%c88_290, %c16_291], %579 {strides = array<i32>} : memref<128x32xf32, #tpu.memory_space<vmem>>, vector<2x16xf32>,
    %c96_292 = arith.constant 96 : index
    %c0_293 = arith.constant 0 : index
    %584 = vector.load %arg12[%c96_292, %c0_293] : memref<128x128xf32, #tpu.memory_space<vmem>>, vector<16x128xf32>
    %cst_294 = arith.constant dense<0.000000e+00> : vector<16x128xf32>
    %585 = tpu.matmul %577, %425, %cst_294 {dimension_numbers = #tpu.dot_dimension_numbers<[1], [0], [0], [1], [0, 0, 1, 1], [], []>} : vector<16x32xf32>, vector<32x128xf32>, vector<16x128xf32> -> vector<16x128xf32>
    %586 = arith.addf %584, %585 : vector<16x128xf32>
    %587 = vector.extract_strided_slice %586 {offsets = [0, 0], sizes = [16, 96], strides = [1, 1]} : vector<16x128xf32> to vector<16x96xf32>
    %588 = arith.negf %587 : vector<16x96xf32>
    %589 = math.exp %588 : vector<16x96xf32>
    %cst_295 = arith.constant 1.000000e+00 : f32
    %590 = vector.broadcast %cst_295 : f32 to vector<16x96xf32>
    %591 = arith.addf %590, %589 : vector<16x96xf32>
    %592 = arith.divf %590, %591 : vector<16x96xf32>
    %593 = vector.extract_strided_slice %586 {offsets = [0, 96], sizes = [16, 32], strides = [1, 1]} : vector<16x128xf32> to vector<16x32xf32>
    %594 = math.tanh %593 : vector<16x32xf32>
    %595 = vector.extract_strided_slice %592 {offsets = [0, 0], sizes = [16, 32], strides = [1, 1]} : vector<16x96xf32> to vector<16x32xf32>
    %596 = vector.extract_strided_slice %592 {offsets = [0, 32], sizes = [16, 32], strides = [1, 1]} : vector<16x96xf32> to vector<16x32xf32>
    %597 = vector.extract_strided_slice %592 {offsets = [0, 64], sizes = [16, 32], strides = [1, 1]} : vector<16x96xf32> to vector<16x32xf32>
    %598 = arith.mulf %596, %575 : vector<16x32xf32>
    %599 = arith.mulf %595, %594 : vector<16x32xf32>
    %600 = arith.addf %598, %599 : vector<16x32xf32>
    %601 = math.tanh %600 : vector<16x32xf32>
    %602 = arith.mulf %597, %601 : vector<16x32xf32>
    %603 = vector.extract_strided_slice %602 {offsets = [0, 0], sizes = [2, 16], strides = [1, 1]} : vector<16x32xf32> to vector<2x16xf32>
    %604 = vector.extract_strided_slice %602 {offsets = [8, 16], sizes = [2, 16], strides = [1, 1]} : vector<16x32xf32> to vector<2x16xf32>
    %c96_296 = arith.constant 96 : index
    %c0_297 = arith.constant 0 : index
    %605 = vector.load %arg13[%c96_296, %c0_297] : memref<128x32xf32, #tpu.memory_space<vmem>>, vector<2x16xf32>
    tpu.vector_store %arg13[%c96_296, %c0_297], %603 {strides = array<i32>} : memref<128x32xf32, #tpu.memory_space<vmem>>, vector<2x16xf32>,
    %c24_298 = arith.constant 24 : index
    %c0_299 = arith.constant 0 : index
    %606 = vector.load %arg13[%c24_298, %c0_299] : memref<128x32xf32, #tpu.memory_space<vmem>>, vector<2x16xf32>
    tpu.vector_store %arg13[%c24_298, %c0_299], %603 {strides = array<i32>} : memref<128x32xf32, #tpu.memory_space<vmem>>, vector<2x16xf32>,
    %c16_300 = arith.constant 16 : index
    %c16_301 = arith.constant 16 : index
    %607 = vector.load %arg13[%c16_300, %c16_301] : memref<128x32xf32, #tpu.memory_space<vmem>>, vector<2x16xf32>
    tpu.vector_store %arg13[%c16_300, %c16_301], %604 {strides = array<i32>} : memref<128x32xf32, #tpu.memory_space<vmem>>, vector<2x16xf32>,
    %c104_302 = arith.constant 104 : index
    %c16_303 = arith.constant 16 : index
    %608 = vector.load %arg13[%c104_302, %c16_303] : memref<128x32xf32, #tpu.memory_space<vmem>>, vector<2x16xf32>
    tpu.vector_store %arg13[%c104_302, %c16_303], %604 {strides = array<i32>} : memref<128x32xf32, #tpu.memory_space<vmem>>, vector<2x16xf32>,
    %c112_304 = arith.constant 112 : index
    %c0_305 = arith.constant 0 : index
    %609 = vector.load %arg12[%c112_304, %c0_305] : memref<128x128xf32, #tpu.memory_space<vmem>>, vector<16x128xf32>
    %cst_306 = arith.constant dense<0.000000e+00> : vector<16x128xf32>
    %610 = tpu.matmul %602, %425, %cst_306 {dimension_numbers = #tpu.dot_dimension_numbers<[1], [0], [0], [1], [0, 0, 1, 1], [], []>} : vector<16x32xf32>, vector<32x128xf32>, vector<16x128xf32> -> vector<16x128xf32>
    %611 = arith.addf %609, %610 : vector<16x128xf32>
    %612 = vector.extract_strided_slice %611 {offsets = [0, 0], sizes = [16, 96], strides = [1, 1]} : vector<16x128xf32> to vector<16x96xf32>
    %613 = arith.negf %612 : vector<16x96xf32>
    %614 = math.exp %613 : vector<16x96xf32>
    %cst_307 = arith.constant 1.000000e+00 : f32
    %615 = vector.broadcast %cst_307 : f32 to vector<16x96xf32>
    %616 = arith.addf %615, %614 : vector<16x96xf32>
    %617 = arith.divf %615, %616 : vector<16x96xf32>
    %618 = vector.extract_strided_slice %611 {offsets = [0, 96], sizes = [16, 32], strides = [1, 1]} : vector<16x128xf32> to vector<16x32xf32>
    %619 = math.tanh %618 : vector<16x32xf32>
    %620 = vector.extract_strided_slice %617 {offsets = [0, 0], sizes = [16, 32], strides = [1, 1]} : vector<16x96xf32> to vector<16x32xf32>
    %621 = vector.extract_strided_slice %617 {offsets = [0, 32], sizes = [16, 32], strides = [1, 1]} : vector<16x96xf32> to vector<16x32xf32>
    %622 = vector.extract_strided_slice %617 {offsets = [0, 64], sizes = [16, 32], strides = [1, 1]} : vector<16x96xf32> to vector<16x32xf32>
    %623 = arith.mulf %621, %600 : vector<16x32xf32>
    %624 = arith.mulf %620, %619 : vector<16x32xf32>
    %625 = arith.addf %623, %624 : vector<16x32xf32>
    %626 = math.tanh %625 : vector<16x32xf32>
    %627 = arith.mulf %622, %626 : vector<16x32xf32>
    %628 = vector.extract_strided_slice %627 {offsets = [0, 0], sizes = [2, 16], strides = [1, 1]} : vector<16x32xf32> to vector<2x16xf32>
    %629 = vector.extract_strided_slice %627 {offsets = [8, 16], sizes = [2, 16], strides = [1, 1]} : vector<16x32xf32> to vector<2x16xf32>
    %c112_308 = arith.constant 112 : index
    %c0_309 = arith.constant 0 : index
    %630 = vector.load %arg13[%c112_308, %c0_309] : memref<128x32xf32, #tpu.memory_space<vmem>>, vector<2x16xf32>
    tpu.vector_store %arg13[%c112_308, %c0_309], %628 {strides = array<i32>} : memref<128x32xf32, #tpu.memory_space<vmem>>, vector<2x16xf32>,
    %c8_310 = arith.constant 8 : index
    %c0_311 = arith.constant 0 : index
    %631 = vector.load %arg13[%c8_310, %c0_311] : memref<128x32xf32, #tpu.memory_space<vmem>>, vector<2x16xf32>
    tpu.vector_store %arg13[%c8_310, %c0_311], %628 {strides = array<i32>} : memref<128x32xf32, #tpu.memory_space<vmem>>, vector<2x16xf32>,
    %c0_312 = arith.constant 0 : index
    %c16_313 = arith.constant 16 : index
    %632 = vector.load %arg13[%c0_312, %c16_313] : memref<128x32xf32, #tpu.memory_space<vmem>>, vector<2x16xf32>
    tpu.vector_store %arg13[%c0_312, %c16_313], %629 {strides = array<i32>} : memref<128x32xf32, #tpu.memory_space<vmem>>, vector<2x16xf32>,
    %c120_314 = arith.constant 120 : index
    %c16_315 = arith.constant 16 : index
    %633 = vector.load %arg13[%c120_314, %c16_315] : memref<128x32xf32, #tpu.memory_space<vmem>>, vector<2x16xf32>
    tpu.vector_store %arg13[%c120_314, %c16_315], %629 {strides = array<i32>} : memref<128x32xf32, #tpu.memory_space<vmem>>, vector<2x16xf32>,
    %cst_316 = arith.constant 0.000000e+00 : f32
    %634 = vector.broadcast %cst_316 : f32 to vector<8x32xf32>
    %c0_317 = arith.constant 0 : index
    %c0_318 = arith.constant 0 : index
    %635 = vector.load %arg13[%c0_317, %c0_318] : memref<128x32xf32, #tpu.memory_space<vmem>>, vector<8x32xf32>
    %c0_319 = arith.constant 0 : index
    %c0_320 = arith.constant 0 : index
    %636 = vector.load %arg10[%c0_319, %c0_320] : memref<64x32xf32, #tpu.memory_space<vmem>>, vector<8x32xf32>
    %637 = arith.mulf %635, %636 : vector<8x32xf32>
    %638 = arith.addf %634, %637 : vector<8x32xf32>
    %c16_321 = arith.constant 16 : index
    %c0_322 = arith.constant 0 : index
    %639 = vector.load %arg13[%c16_321, %c0_322] : memref<128x32xf32, #tpu.memory_space<vmem>>, vector<8x32xf32>
    %c8_323 = arith.constant 8 : index
    %c0_324 = arith.constant 0 : index
    %640 = vector.load %arg10[%c8_323, %c0_324] : memref<64x32xf32, #tpu.memory_space<vmem>>, vector<8x32xf32>
    %641 = arith.mulf %639, %640 : vector<8x32xf32>
    %642 = arith.addf %638, %641 : vector<8x32xf32>
    %c32_325 = arith.constant 32 : index
    %c0_326 = arith.constant 0 : index
    %643 = vector.load %arg13[%c32_325, %c0_326] : memref<128x32xf32, #tpu.memory_space<vmem>>, vector<8x32xf32>
    %c16_327 = arith.constant 16 : index
    %c0_328 = arith.constant 0 : index
    %644 = vector.load %arg10[%c16_327, %c0_328] : memref<64x32xf32, #tpu.memory_space<vmem>>, vector<8x32xf32>
    %645 = arith.mulf %643, %644 : vector<8x32xf32>
    %646 = arith.addf %642, %645 : vector<8x32xf32>
    %c48_329 = arith.constant 48 : index
    %c0_330 = arith.constant 0 : index
    %647 = vector.load %arg13[%c48_329, %c0_330] : memref<128x32xf32, #tpu.memory_space<vmem>>, vector<8x32xf32>
    %c24_331 = arith.constant 24 : index
    %c0_332 = arith.constant 0 : index
    %648 = vector.load %arg10[%c24_331, %c0_332] : memref<64x32xf32, #tpu.memory_space<vmem>>, vector<8x32xf32>
    %649 = arith.mulf %647, %648 : vector<8x32xf32>
    %650 = arith.addf %646, %649 : vector<8x32xf32>
    %c64_333 = arith.constant 64 : index
    %c0_334 = arith.constant 0 : index
    %651 = vector.load %arg13[%c64_333, %c0_334] : memref<128x32xf32, #tpu.memory_space<vmem>>, vector<8x32xf32>
    %c32_335 = arith.constant 32 : index
    %c0_336 = arith.constant 0 : index
    %652 = vector.load %arg10[%c32_335, %c0_336] : memref<64x32xf32, #tpu.memory_space<vmem>>, vector<8x32xf32>
    %653 = arith.mulf %651, %652 : vector<8x32xf32>
    %654 = arith.addf %650, %653 : vector<8x32xf32>
    %c80_337 = arith.constant 80 : index
    %c0_338 = arith.constant 0 : index
    %655 = vector.load %arg13[%c80_337, %c0_338] : memref<128x32xf32, #tpu.memory_space<vmem>>, vector<8x32xf32>
    %c40_339 = arith.constant 40 : index
    %c0_340 = arith.constant 0 : index
    %656 = vector.load %arg10[%c40_339, %c0_340] : memref<64x32xf32, #tpu.memory_space<vmem>>, vector<8x32xf32>
    %657 = arith.mulf %655, %656 : vector<8x32xf32>
    %658 = arith.addf %654, %657 : vector<8x32xf32>
    %c96_341 = arith.constant 96 : index
    %c0_342 = arith.constant 0 : index
    %659 = vector.load %arg13[%c96_341, %c0_342] : memref<128x32xf32, #tpu.memory_space<vmem>>, vector<8x32xf32>
    %c48_343 = arith.constant 48 : index
    %c0_344 = arith.constant 0 : index
    %660 = vector.load %arg10[%c48_343, %c0_344] : memref<64x32xf32, #tpu.memory_space<vmem>>, vector<8x32xf32>
    %661 = arith.mulf %659, %660 : vector<8x32xf32>
    %662 = arith.addf %658, %661 : vector<8x32xf32>
    %c112_345 = arith.constant 112 : index
    %c0_346 = arith.constant 0 : index
    %663 = vector.load %arg13[%c112_345, %c0_346] : memref<128x32xf32, #tpu.memory_space<vmem>>, vector<8x32xf32>
    %c56_347 = arith.constant 56 : index
    %c0_348 = arith.constant 0 : index
    %664 = vector.load %arg10[%c56_347, %c0_348] : memref<64x32xf32, #tpu.memory_space<vmem>>, vector<8x32xf32>
    %665 = arith.mulf %663, %664 : vector<8x32xf32>
    %666 = arith.addf %662, %665 : vector<8x32xf32>
    %cst_349 = arith.constant dense<0.000000e+00> : vector<8xf32>
    %667 = vector.multi_reduction <add>, %666, %cst_349 [1] : vector<8x32xf32> to vector<8xf32>
    %668 = vector.shape_cast %667 : vector<8xf32> to vector<8x1xf32>
    %669 = vector.extract_strided_slice %668 {offsets = [0, 0], sizes = [2, 1], strides = [1, 1]} : vector<8x1xf32> to vector<2x1xf32>
    %c0_350 = arith.constant 0 : index
    %c0_351 = arith.constant 0 : index
    %670 = vector.load %arg11[%c0_350, %c0_351] : memref<2x1xf32, #tpu.memory_space<vmem>>, vector<2x1xf32>
    tpu.vector_store %arg11[%c0_350, %c0_351], %669 {strides = array<i32>} : memref<2x1xf32, #tpu.memory_space<vmem>>, vector<2x1xf32>,
    return
  }
}

</mosaic_0001>

<llo_original>
// kernel: dilated_net_forward.1
$region0: #{dilated_net_forward.1}
  #allocation0 [shape = 'u32[]', space=smem, size = 0x4, offset = 0x4, fixed_abs, tag = 'smem constant byte address 0x4 - core index']
  #allocation1 [shape = 'u32[144,128]{1,0:T(1,128)}', space=vmem, size = 0x12000, scoped, tag = 'internal scratch']
  #allocation2 [shape = 'f32[128,128]{1,0:T(8,128)}', space=vmem, size = 0x10000, scoped, tag = 'scratch operand']
  #allocation3 [shape = 'f32[128,32]{1,0:T(8,128)}', space=vmem, size = 0x10000, scoped, tag = 'scratch operand']
  #allocation4 [shape = 'f32[128,32]{1,0:T(8,128)}', space=vmem, size = 0x10000, scoped, tag = 'scratch operand']
  %s0 = inlined_call_operand.vmem [shape: f32[128,4], index: 0, kind: input, shape index: {}]
  %s1 = inlined_call_operand.vmem [shape: f32[4,128], index: 1, kind: input, shape index: {}]
  %s2 = inlined_call_operand.vmem [shape: f32[32,128], index: 2, kind: input, shape index: {}]
  %s3 = inlined_call_operand.vmem [shape: f32[1,128], index: 3, kind: input, shape index: {}]
  %s4 = inlined_call_operand.vmem [shape: f32[32,128], index: 4, kind: input, shape index: {}]
  %s5 = inlined_call_operand.vmem [shape: f32[32,128], index: 5, kind: input, shape index: {}]
  %s6 = inlined_call_operand.vmem [shape: f32[1,128], index: 6, kind: input, shape index: {}]
  %s7 = inlined_call_operand.vmem [shape: f32[32,128], index: 7, kind: input, shape index: {}]
  %s8 = inlined_call_operand.vmem [shape: f32[32,128], index: 8, kind: input, shape index: {}]
  %s9 = inlined_call_operand.vmem [shape: f32[1,128], index: 9, kind: input, shape index: {}]
  %s10 = inlined_call_operand.vmem [shape: f32[64,32], index: 10, kind: input, shape index: {}]
  %s11 = inlined_call_operand.vmem [shape: f32[2,1], index: 11, kind: output, shape index: {}]
  %s12 = sld [smem:[#allocation0]]
  $region54: #{dilated_net_forward.1} parent=0
    _
  %s14 = ssub.s32 1, %s12
  %s15 = scalar_select 0, %s14, %s12
  // Predicated region
  $region2: #{dilated_net_forward.1} parent=0 // pred_check
    _
  $region3: #{dilated_net_forward.1} parent=0 // pred_check_branch
    %17 = sbr.rel (0) target = $region5
  $region4: #{dilated_net_forward.1} parent=0 // pred_region
    _
  $region5: #{dilated_net_forward.1} parent=0 // pred_fallthru
    _
  // Predicated region
  $region6: #{dilated_net_forward.1} parent=0 // pred_check
    _
  $region7: #{dilated_net_forward.1} parent=0 // pred_check_branch
    %19 = sbr.rel (0) target = $region9
  $region8: #{dilated_net_forward.1} parent=0 // pred_region
    _
  $region9: #{dilated_net_forward.1} parent=0 // pred_fallthru
    _
  // Predicated region
  $region10: #{dilated_net_forward.1} parent=0 // pred_check
    _
  $region11: #{dilated_net_forward.1} parent=0 // pred_check_branch
    %21 = sbr.rel (0) target = $region13
  $region12: #{dilated_net_forward.1} parent=0 // pred_region
    _
  $region13: #{dilated_net_forward.1} parent=0 // pred_fallthru
    _
  // Predicated region
  $region14: #{dilated_net_forward.1} parent=0 // pred_check
    _
  $region15: #{dilated_net_forward.1} parent=0 // pred_check_branch
    %23 = sbr.rel (0) target = $region17
  $region16: #{dilated_net_forward.1} parent=0 // pred_region
    _
  $region17: #{dilated_net_forward.1} parent=0 // pred_fallthru
    _
  // Predicated region
  $region18: #{dilated_net_forward.1} parent=0 // pred_check
    _
  $region19: #{dilated_net_forward.1} parent=0 // pred_check_branch
    %25 = sbr.rel (0) target = $region21
  $region20: #{dilated_net_forward.1} parent=0 // pred_region
    _
  $region21: #{dilated_net_forward.1} parent=0 // pred_fallthru
    _
  // Predicated region
  $region22: #{dilated_net_forward.1} parent=0 // pred_check
    _
  $region23: #{dilated_net_forward.1} parent=0 // pred_check_branch
    %27 = sbr.rel (0) target = $region25
  $region24: #{dilated_net_forward.1} parent=0 // pred_region
    _
  $region25: #{dilated_net_forward.1} parent=0 // pred_fallthru
    _
  // Predicated region
  $region26: #{dilated_net_forward.1} parent=0 // pred_check
    _
  $region27: #{dilated_net_forward.1} parent=0 // pred_check_branch
    %29 = sbr.rel (0) target = $region29
  $region28: #{dilated_net_forward.1} parent=0 // pred_region
    _
  $region29: #{dilated_net_forward.1} parent=0 // pred_fallthru
    _
  // Predicated region
  $region30: #{dilated_net_forward.1} parent=0 // pred_check
    _
  $region31: #{dilated_net_forward.1} parent=0 // pred_check_branch
    %31 = sbr.rel (0) target = $region33
  $region32: #{dilated_net_forward.1} parent=0 // pred_region
    _
  $region33: #{dilated_net_forward.1} parent=0 // pred_fallthru
    _
  // Predicated region
  $region34: #{dilated_net_forward.1} parent=0 // pred_check
    _
  $region35: #{dilated_net_forward.1} parent=0 // pred_check_branch
    %33 = sbr.rel (0) target = $region37
  $region36: #{dilated_net_forward.1} parent=0 // pred_region
    _
  $region37: #{dilated_net_forward.1} parent=0 // pred_fallthru
    _
  // Predicated region
  $region38: #{dilated_net_forward.1} parent=0 // pred_check
    _
  $region39: #{dilated_net_forward.1} parent=0 // pred_check_branch
    %35 = sbr.rel (0) target = $region41
  $region40: #{dilated_net_forward.1} parent=0 // pred_region
    _
  $region41: #{dilated_net_forward.1} parent=0 // pred_fallthru
    _
  // Predicated region
  $region42: #{dilated_net_forward.1} parent=0 // pred_check
    _
  $region43: #{dilated_net_forward.1} parent=0 // pred_check_branch
    %37 = sbr.rel (0) target = $region45
  $region44: #{dilated_net_forward.1} parent=0 // pred_region
    _
  $region45: #{dilated_net_forward.1} parent=0 // pred_fallthru
    _
  %vm38 = vcmask 261120
  %39 = vst.msk [vmem:[#allocation3] sm:$0xff] %vm38, 0.0
  %40 = vst.msk [vmem:[#allocation3 + $0x8] sm:$0xff] %vm38, 0.0
  %41 = vst.msk [vmem:[#allocation3 + $0x10] sm:$0xff] %vm38, 0.0
  %42 = vst.msk [vmem:[#allocation3 + $0x18] sm:$0xff] %vm38, 0.0
  %43 = vst.msk [vmem:[#allocation3 + $0x20] sm:$0xff] %vm38, 0.0
  %44 = vst.msk [vmem:[#allocation3 + $0x28] sm:$0xff] %vm38, 0.0
  %45 = vst.msk [vmem:[#allocation3 + $0x30] sm:$0xff] %vm38, 0.0
  %46 = vst.msk [vmem:[#allocation3 + $0x38] sm:$0xff] %vm38, 0.0
  %47 = vst.msk [vmem:[#allocation3 + $0x40] sm:$0xff] %vm38, 0.0
  %48 = vst.msk [vmem:[#allocation3 + $0x48] sm:$0xff] %vm38, 0.0
  %49 = vst.msk [vmem:[#allocation3 + $0x50] sm:$0xff] %vm38, 0.0
  %50 = vst.msk [vmem:[#allocation3 + $0x58] sm:$0xff] %vm38, 0.0
  %51 = vst.msk [vmem:[#allocation3 + $0x60] sm:$0xff] %vm38, 0.0
  %52 = vst.msk [vmem:[#allocation3 + $0x68] sm:$0xff] %vm38, 0.0
  %53 = vst.msk [vmem:[#allocation3 + $0x70] sm:$0xff] %vm38, 0.0
  %54 = vst.msk [vmem:[#allocation3 + $0x78] sm:$0xff] %vm38, 0.0
  %55 = vst.msk [vmem:[#allocation4] sm:$0xff] %vm38, 0.0
  %56 = vst.msk [vmem:[#allocation4 + $0x8] sm:$0xff] %vm38, 0.0
  %57 = vst.msk [vmem:[#allocation4 + $0x10] sm:$0xff] %vm38, 0.0
  %58 = vst.msk [vmem:[#allocation4 + $0x18] sm:$0xff] %vm38, 0.0
  %59 = vst.msk [vmem:[#allocation4 + $0x20] sm:$0xff] %vm38, 0.0
  %60 = vst.msk [vmem:[#allocation4 + $0x28] sm:$0xff] %vm38, 0.0
  %61 = vst.msk [vmem:[#allocation4 + $0x30] sm:$0xff] %vm38, 0.0
  %62 = vst.msk [vmem:[#allocation4 + $0x38] sm:$0xff] %vm38, 0.0
  %63 = vst.msk [vmem:[#allocation4 + $0x40] sm:$0xff] %vm38, 0.0
  %64 = vst.msk [vmem:[#allocation4 + $0x48] sm:$0xff] %vm38, 0.0
  %65 = vst.msk [vmem:[#allocation4 + $0x50] sm:$0xff] %vm38, 0.0
  %66 = vst.msk [vmem:[#allocation4 + $0x58] sm:$0xff] %vm38, 0.0
  %67 = vst.msk [vmem:[#allocation4 + $0x60] sm:$0xff] %vm38, 0.0
  %68 = vst.msk [vmem:[#allocation4 + $0x68] sm:$0xff] %vm38, 0.0
  %69 = vst.msk [vmem:[#allocation4 + $0x70] sm:$0xff] %vm38, 0.0
  %70 = vst.msk [vmem:[#allocation4 + $0x78] sm:$0xff] %vm38, 0.0
  %v71 = vld [vmem:[%s1] sm:$0xf]
  %v72 = vld [vmem:[%s2] sm:$0xff]
  %v73 = vld [vmem:[%s2 + $0x8] sm:$0xff]
  %v74 = vld [vmem:[%s2 + $0x10] sm:$0xff]
  %v75 = vld [vmem:[%s2 + $0x18] sm:$0xff]
  %v76 = vld [vmem:[%s3] sm:$0x1]
  %v77 = vld [vmem:[%s0] sm:$0xff]
  %v78 = vld [vmem:[%s0 + $0x8] sm:$0xff]
  %v79 = vld [vmem:[%s0 + $0x10] sm:$0xff]
  %v80 = vld [vmem:[%s0 + $0x18] sm:$0xff]
  %v81 = vld [vmem:[%s0 + $0x20] sm:$0xff]
  %v82 = vld [vmem:[%s0 + $0x28] sm:$0xff]
  %v83 = vld [vmem:[%s0 + $0x30] sm:$0xff]
  %v84 = vld [vmem:[%s0 + $0x38] sm:$0xff]
  %v85 = vld [vmem:[%s0 + $0x40] sm:$0xff]
  %v86 = vld [vmem:[%s0 + $0x48] sm:$0xff]
  %v87 = vld [vmem:[%s0 + $0x50] sm:$0xff]
  %v88 = vld [vmem:[%s0 + $0x58] sm:$0xff]
  %v89 = vld [vmem:[%s0 + $0x60] sm:$0xff]
  %v90 = vld [vmem:[%s0 + $0x68] sm:$0xff]
  %v91 = vld [vmem:[%s0 + $0x70] sm:$0xff]
  %v92 = vld [vmem:[%s0 + $0x78] sm:$0xff]
  %v94 = vlaneseq
  %v95 = vshrl.u32 %v94, 7
  %v96 = vsub.s32 0, %v95
  %v97 = vrot.slane %v76, %v96
  %vm99 = vcmask 31744
  %v101 = vsel %vm99, %v77, 0
  %v104 = vsel %vm99, %v78, 0
  %v107 = vsel %vm99, %v79, 0
  %v110 = vsel %vm99, %v80, 0
  %v113 = vsel %vm99, %v81, 0
  %v116 = vsel %vm99, %v82, 0
  %v119 = vsel %vm99, %v83, 0
  %v122 = vsel %vm99, %v84, 0
  %v125 = vsel %vm99, %v85, 0
  %v128 = vsel %vm99, %v86, 0
  %v131 = vsel %vm99, %v87, 0
  %v134 = vsel %vm99, %v88, 0
  %v137 = vsel %vm99, %v89, 0
  %v140 = vsel %vm99, %v90, 0
  %v143 = vsel %vm99, %v91, 0
  %v146 = vsel %vm99, %v92, 0
  %vm148 = vcmask 1043456
  %v150 = vsel %vm148, %v71, 0
  %152 = vmatprep.subr.mxu0 0.0
  %153 = vmatpush1.msra.mxu0 %v150
  %154 = vmatprep.subr.mxu0 0.0
  %155 = vmatpush1.msra.mxu0 0.0
  %156 = vmatprep.subr.mxu0 0.0
  %157 = vmatpush1.msra.mxu0 0.0
  %158 = vmatprep.subr.mxu0 0.0
  %159 = vmatpush1.msra.mxu0 0.0
  %160 = vmatprep.subr.mxu0 0.0
  %161 = vmatpush1.msra.mxu0 0.0
  %162 = vmatprep.subr.mxu0 0.0
  %163 = vmatpush1.msra.mxu0 0.0
  %164 = vmatprep.subr.mxu0 0.0
  %165 = vmatpush1.msra.mxu0 0.0
  %166 = vmatprep.subr.mxu0 0.0
  %167 = vmatpush1.msra.mxu0 0.0
  %168 = vmatprep.subr.mxu0 0.0
  %169 = vmatpush1.msra.mxu0 0.0
  %170 = vmatprep.subr.mxu0 0.0
  %171 = vmatpush1.msra.mxu0 0.0
  %172 = vmatprep.subr.mxu0 0.0
  %173 = vmatpush1.msra.mxu0 0.0
  %174 = vmatprep.subr.mxu0 0.0
  %175 = vmatpush1.msra.mxu0 0.0
  %176 = vmatprep.subr.mxu0 0.0
  %177 = vmatpush1.msra.mxu0 0.0
  %178 = vmatprep.subr.mxu0 0.0
  %179 = vmatpush1.msra.mxu0 0.0
  %180 = vmatprep.subr.mxu0 0.0
  %181 = vmatpush1.msra.mxu0 0.0
  %182 = vmatprep.subr.mxu0 0.0
  %183 = vmatpush1.msra.mxu0 0.0
  %184 = vmatprep.subr.mxu0 0.0
  %185 = vmatpush1.msra.mxu0 0.0
  %186 = vmatprep.subr.mxu0 0.0
  %187 = vmatpush1.msra.mxu0 0.0
  %188 = vmatprep.subr.mxu0 0.0
  %189 = vmatpush1.msra.mxu0 0.0
  %190 = vmatprep.subr.mxu0 0.0
  %191 = vmatpush1.msra.mxu0 0.0
  %192 = vmatprep.subr.mxu0 0.0
  %193 = vmatpush1.msra.mxu0 0.0
  %194 = vmatprep.subr.mxu0 0.0
  %195 = vmatpush1.msra.mxu0 0.0
  %196 = vmatprep.subr.mxu0 0.0
  %197 = vmatpush1.msra.mxu0 0.0
  %198 = vmatprep.subr.mxu0 0.0
  %199 = vmatpush1.msra.mxu0 0.0
  %200 = vmatprep.subr.mxu0 0.0
  %201 = vmatpush1.msra.mxu0 0.0
  %202 = vmatprep.subr.mxu0 0.0
  %203 = vmatpush1.msra.mxu0 0.0
  %204 = vmatprep.subr.mxu0 0.0
  %205 = vmatpush1.msra.mxu0 0.0
  %206 = vmatprep.subr.mxu0 0.0
  %207 = vmatpush1.msra.mxu0 0.0
  %208 = vmatprep.subr.mxu0 0.0
  %209 = vmatpush1.msra.mxu0 0.0
  %210 = vmatprep.subr.mxu0 0.0
  %211 = vmatpush1.msra.mxu0 0.0
  %212 = vmatprep.subr.mxu0 0.0
  %213 = vmatpush1.msra.mxu0 0.0
  %214 = vmatprep.subr.mxu0 0.0
  %215 = vmatpush1.msra.mxu0 0.0
  %216 = vmatprep.mubr.f32.mxu0 0.0
  %217 = vmatmul.mubr.f32.gmra.mrb[0].mxu0 %v101
  %v218 = vpop.f32.mrb[0].mxu0
  %v219 = vadd.f32 %v97, %v218
  %v220 = vpop.f32.mrb[0].mxu0
  %221 = vmatprep.mubr.f32.mxu0 0.0
  %222 = vmatmul.mubr.f32.gmra.mrb[0].mxu0 %v104
  %v223 = vpop.f32.mrb[0].mxu0
  %v224 = vadd.f32 %v97, %v223
  %v225 = vpop.f32.mrb[0].mxu0
  %226 = vmatprep.mubr.f32.mxu0 0.0
  %227 = vmatmul.mubr.f32.gmra.mrb[0].mxu0 %v107
  %v228 = vpop.f32.mrb[0].mxu0
  %v229 = vadd.f32 %v97, %v228
  %v230 = vpop.f32.mrb[0].mxu0
  %231 = vmatprep.mubr.f32.mxu0 0.0
  %232 = vmatmul.mubr.f32.gmra.mrb[0].mxu0 %v110
  %v233 = vpop.f32.mrb[0].mxu0
  %v234 = vadd.f32 %v97, %v233
  %v235 = vpop.f32.mrb[0].mxu0
  %236 = vmatprep.mubr.f32.mxu0 0.0
  %237 = vmatmul.mubr.f32.gmra.mrb[0].mxu0 %v113
  %v238 = vpop.f32.mrb[0].mxu0
  %v239 = vadd.f32 %v97, %v238
  %v240 = vpop.f32.mrb[0].mxu0
  %241 = vmatprep.mubr.f32.mxu0 0.0
  %242 = vmatmul.mubr.f32.gmra.mrb[0].mxu0 %v116
  %v243 = vpop.f32.mrb[0].mxu0
  %v244 = vadd.f32 %v97, %v243
  %v245 = vpop.f32.mrb[0].mxu0
  %246 = vmatprep.mubr.f32.mxu0 0.0
  %247 = vmatmul.mubr.f32.gmra.mrb[0].mxu0 %v119
  %v248 = vpop.f32.mrb[0].mxu0
  %v249 = vadd.f32 %v97, %v248
  %v250 = vpop.f32.mrb[0].mxu0
  %251 = vmatprep.mubr.f32.mxu0 0.0
  %252 = vmatmul.mubr.f32.gmra.mrb[0].mxu0 %v122
  %v253 = vpop.f32.mrb[0].mxu0
  %v254 = vadd.f32 %v97, %v253
  %v255 = vpop.f32.mrb[0].mxu0
  %256 = vmatprep.mubr.f32.mxu0 0.0
  %257 = vmatmul.mubr.f32.gmra.mrb[0].mxu0 %v125
  %v258 = vpop.f32.mrb[0].mxu0
  %v259 = vadd.f32 %v97, %v258
  %v260 = vpop.f32.mrb[0].mxu0
  %261 = vmatprep.mubr.f32.mxu0 0.0
  %262 = vmatmul.mubr.f32.gmra.mrb[0].mxu0 %v128
  %v263 = vpop.f32.mrb[0].mxu0
  %v264 = vadd.f32 %v97, %v263
  %v265 = vpop.f32.mrb[0].mxu0
  %266 = vmatprep.mubr.f32.mxu0 0.0
  %267 = vmatmul.mubr.f32.gmra.mrb[0].mxu0 %v131
  %v268 = vpop.f32.mrb[0].mxu0
  %v269 = vadd.f32 %v97, %v268
  %v270 = vpop.f32.mrb[0].mxu0
  %271 = vmatprep.mubr.f32.mxu0 0.0
  %272 = vmatmul.mubr.f32.gmra.mrb[0].mxu0 %v134
  %v273 = vpop.f32.mrb[0].mxu0
  %v274 = vadd.f32 %v97, %v273
  %v275 = vpop.f32.mrb[0].mxu0
  %276 = vmatprep.mubr.f32.mxu0 0.0
  %277 = vmatmul.mubr.f32.gmra.mrb[0].mxu0 %v137
  %v278 = vpop.f32.mrb[0].mxu0
  %v279 = vadd.f32 %v97, %v278
  %v280 = vpop.f32.mrb[0].mxu0
  %281 = vmatprep.mubr.f32.mxu0 0.0
  %282 = vmatmul.mubr.f32.gmra.mrb[0].mxu0 %v140
  %v283 = vpop.f32.mrb[0].mxu0
  %v284 = vadd.f32 %v97, %v283
  %v285 = vpop.f32.mrb[0].mxu0
  %286 = vmatprep.mubr.f32.mxu0 0.0
  %287 = vmatmul.mubr.f32.gmra.mrb[0].mxu0 %v143
  %v288 = vpop.f32.mrb[0].mxu0
  %v289 = vadd.f32 %v97, %v288
  %v290 = vpop.f32.mrb[0].mxu0
  %291 = vmatprep.mubr.f32.mxu0 0.0
  %292 = vmatmul.mubr.f32.gmra.mrb[0].mxu0 %v146
  %v293 = vpop.f32.mrb[0].mxu0
  %v294 = vadd.f32 %v97, %v293
  %v295 = vpop.f32.mrb[0].mxu0
  %296 = vdwg.mxu0
  %297 = vst [vmem:[#allocation2] sm:$0xff] %v219
  %298 = vst [vmem:[#allocation2 + $0x8] sm:$0xff] %v224
  %299 = vst [vmem:[#allocation2 + $0x10] sm:$0xff] %v229
  %300 = vst [vmem:[#allocation2 + $0x18] sm:$0xff] %v234
  %301 = vst [vmem:[#allocation2 + $0x20] sm:$0xff] %v239
  %302 = vst [vmem:[#allocation2 + $0x28] sm:$0xff] %v244
  %303 = vst [vmem:[#allocation2 + $0x30] sm:$0xff] %v249
  %304 = vst [vmem:[#allocation2 + $0x38] sm:$0xff] %v254
  %305 = vst [vmem:[#allocation2 + $0x40] sm:$0xff] %v259
  %306 = vst [vmem:[#allocation2 + $0x48] sm:$0xff] %v264
  %307 = vst [vmem:[#allocation2 + $0x50] sm:$0xff] %v269
  %308 = vst [vmem:[#allocation2 + $0x58] sm:$0xff] %v274
  %309 = vst [vmem:[#allocation2 + $0x60] sm:$0xff] %v279
  %310 = vst [vmem:[#allocation2 + $0x68] sm:$0xff] %v284
  %311 = vst [vmem:[#allocation2 + $0x70] sm:$0xff] %v289
  %312 = vst [vmem:[#allocation2 + $0x78] sm:$0xff] %v294
  %v313 = vld [vmem:[#allocation2] sm:$0xff]
  %v314 = vld [vmem:[#allocation2 + $0x8] sm:$0xff]
  %v316 = vsel %vm38, 0.0, 0
  %318 = vmatprep.subr.mxu0 0.0
  %319 = vmatpush1.msra.mxu0 %v72
  %320 = vmatprep.subr.mxu0 0.0
  %321 = vmatpush1.msra.mxu0 %v73
  %322 = vmatprep.subr.mxu0 0.0
  %323 = vmatpush1.msra.mxu0 %v74
  %324 = vmatprep.subr.mxu0 0.0
  %325 = vmatpush1.msra.mxu0 %v75
  %326 = vmatprep.subr.mxu0 0.0
  %327 = vmatpush1.msra.mxu0 0.0
  %328 = vmatprep.subr.mxu0 0.0
  %329 = vmatpush1.msra.mxu0 0.0
  %330 = vmatprep.subr.mxu0 0.0
  %331 = vmatpush1.msra.mxu0 0.0
  %332 = vmatprep.subr.mxu0 0.0
  %333 = vmatpush1.msra.mxu0 0.0
  %334 = vmatprep.subr.mxu0 0.0
  %335 = vmatpush1.msra.mxu0 0.0
  %336 = vmatprep.subr.mxu0 0.0
  %337 = vmatpush1.msra.mxu0 0.0
  %338 = vmatprep.subr.mxu0 0.0
  %339 = vmatpush1.msra.mxu0 0.0
  %340 = vmatprep.subr.mxu0 0.0
  %341 = vmatpush1.msra.mxu0 0.0
  %342 = vmatprep.subr.mxu0 0.0
  %343 = vmatpush1.msra.mxu0 0.0
  %344 = vmatprep.subr.mxu0 0.0
  %345 = vmatpush1.msra.mxu0 0.0
  %346 = vmatprep.subr.mxu0 0.0
  %347 = vmatpush1.msra.mxu0 0.0
  %348 = vmatprep.subr.mxu0 0.0
  %349 = vmatpush1.msra.mxu0 0.0
  %350 = vmatprep.subr.mxu0 0.0
  %351 = vmatpush1.msra.mxu0 0.0
  %352 = vmatprep.subr.mxu0 0.0
  %353 = vmatpush1.msra.mxu0 0.0
  %354 = vmatprep.subr.mxu0 0.0
  %355 = vmatpush1.msra.mxu0 0.0
  %356 = vmatprep.subr.mxu0 0.0
  %357 = vmatpush1.msra.mxu0 0.0
  %358 = vmatprep.subr.mxu0 0.0
  %359 = vmatpush1.msra.mxu0 0.0
  %360 = vmatprep.subr.mxu0 0.0
  %361 = vmatpush1.msra.mxu0 0.0
  %362 = vmatprep.subr.mxu0 0.0
  %363 = vmatpush1.msra.mxu0 0.0
  %364 = vmatprep.subr.mxu0 0.0
  %365 = vmatpush1.msra.mxu0 0.0
  %366 = vmatprep.subr.mxu0 0.0
  %367 = vmatpush1.msra.mxu0 0.0
  %368 = vmatprep.subr.mxu0 0.0
  %369 = vmatpush1.msra.mxu0 0.0
  %370 = vmatprep.subr.mxu0 0.0
  %371 = vmatpush1.msra.mxu0 0.0
  %372 = vmatprep.subr.mxu0 0.0
  %373 = vmatpush1.msra.mxu0 0.0
  %374 = vmatprep.subr.mxu0 0.0
  %375 = vmatpush1.msra.mxu0 0.0
  %376 = vmatprep.subr.mxu0 0.0
  %377 = vmatpush1.msra.mxu0 0.0
  %378 = vmatprep.subr.mxu0 0.0
  %379 = vmatpush1.msra.mxu0 0.0
  %380 = vmatprep.subr.mxu0 0.0
  %381 = vmatpush1.msra.mxu0 0.0
  %382 = vmatprep.mubr.f32.mxu0 0.0
  %383 = vmatmul.mubr.f32.gmra.mrb[0].mxu0 %v316
  %v384 = vpop.f32.mrb[0].mxu0
  %v385 = vadd.f32 0.0, %v384
  %v386 = vpop.f32.mrb[0].mxu0
  %387 = vmatprep.mubr.f32.mxu0 0.0
  %388 = vmatmul.mubr.f32.gmra.mrb[0].mxu0 %v316
  %v389 = vpop.f32.mrb[0].mxu0
  %v390 = vadd.f32 0.0, %v389
  %v391 = vpop.f32.mrb[0].mxu0
  %392 = vdwg.mxu0
  %v393 = vadd.f32 %v313, %v385
  %v394 = vadd.f32 %v314, %v390
  %v395 = vxor.u32 %v393, 2147483648
  %v396 = vxor.u32 %v394, 2147483648
  %v397 = vmul.f32 %v395, 1.442695
  %v398 = vpow.pop %v397
  %v399 = vmul.f32 %v396, 1.442695
  %v400 = vpow.pop %v399
  %v401 = vadd.f32 %v398, 1.0
  %v402 = vadd.f32 %v400, 1.0
  %v403 = vrcp.pop %v401
  %v404 = vmul.f32 1.0, %v403
  %v405 = vrcp.pop %v402
  %v406 = vmul.f32 1.0, %v405
  %v407 = vtanh.pop %v393
  %v408 = vtanh.pop %v394
  %v409 = vmul.f32 %v404, 0.0
  %v410 = vmul.f32 %v406, 0.0
  %413 = vrot.lane.b32.xlu0 %v407, 32
  %v414 = vpop.permute.xlu0 %413
  %415 = vrot.lane.b32.xlu0 %v408, 32
  %v416 = vpop.permute.xlu0 %415
  %v419 = vmul.f32 %v404, %v414
  %v420 = vmul.f32 %v406, %v416
  %423 = vrot.lane.b32.xlu0 %v419, 32
  %v424 = vpop.permute.xlu0 %423
  %425 = vrot.lane.b32.xlu0 %v420, 32
  %v426 = vpop.permute.xlu0 %425
  %v429 = vadd.f32 %v409, %v424
  %v430 = vadd.f32 %v410, %v426
  %v431 = vtanh.pop %v429
  %v432 = vtanh.pop %v430
  %435 = vrot.lane.b32.xlu0 %v431, 32
  %v436 = vpop.permute.xlu0 %435
  %437 = vrot.lane.b32.xlu0 %v432, 32
  %v438 = vpop.permute.xlu0 %437
  %v441 = vmul.f32 %v404, %v436
  %v442 = vmul.f32 %v406, %v438
  %444 = vrot.lane.b32.xlu0 %v441, 64
  %v445 = vpop.permute.xlu0 %444
  %vm447 = vcmask 123904
  %448 = vst.msk [vmem:[#allocation3] sm:$0x3] %vm447, %v445
  %449 = vst.msk [vmem:[#allocation3 + $0x78] sm:$0x3] %vm447, %v445
  %451 = vrot.lane.b32.xlu0 %v442, 64
  %v452 = vpop.permute.xlu0 %451
  %vm454 = vcmask 255104
  %455 = vst.msk [vmem:[#allocation3 + $0x70] sm:$0x3] %vm454, %v452
  %456 = vst.msk [vmem:[#allocation3 + $0x8] sm:$0x3] %vm454, %v452
  %v457 = vld [vmem:[#allocation2 + $0x10] sm:$0xff]
  %v458 = vld [vmem:[#allocation2 + $0x18] sm:$0xff]
  %v459 = vsel %vm38, %v445, 0
  %v461 = vsel %vm38, %v452, 0
  %463 = vmatprep.subr.mxu0 0.0
  %464 = vmatpush1.msra.mxu0 %v72
  %465 = vmatprep.subr.mxu0 0.0
  %466 = vmatpush1.msra.mxu0 %v73
  %467 = vmatprep.subr.mxu0 0.0
  %468 = vmatpush1.msra.mxu0 %v74
  %469 = vmatprep.subr.mxu0 0.0
  %470 = vmatpush1.msra.mxu0 %v75
  %471 = vmatprep.subr.mxu0 0.0
  %472 = vmatpush1.msra.mxu0 0.0
  %473 = vmatprep.subr.mxu0 0.0
  %474 = vmatpush1.msra.mxu0 0.0
  %475 = vmatprep.subr.mxu0 0.0
  %476 = vmatpush1.msra.mxu0 0.0
  %477 = vmatprep.subr.mxu0 0.0
  %478 = vmatpush1.msra.mxu0 0.0
  %479 = vmatprep.subr.mxu0 0.0
  %480 = vmatpush1.msra.mxu0 0.0
  %481 = vmatprep.subr.mxu0 0.0
  %482 = vmatpush1.msra.mxu0 0.0
  %483 = vmatprep.subr.mxu0 0.0
  %484 = vmatpush1.msra.mxu0 0.0
  %485 = vmatprep.subr.mxu0 0.0
  %486 = vmatpush1.msra.mxu0 0.0
  %487 = vmatprep.subr.mxu0 0.0
  %488 = vmatpush1.msra.mxu0 0.0
  %489 = vmatprep.subr.mxu0 0.0
  %490 = vmatpush1.msra.mxu0 0.0
  %491 = vmatprep.subr.mxu0 0.0
  %492 = vmatpush1.msra.mxu0 0.0
  %493 = vmatprep.subr.mxu0 0.0
  %494 = vmatpush1.msra.mxu0 0.0
  %495 = vmatprep.subr.mxu0 0.0
  %496 = vmatpush1.msra.mxu0 0.0
  %497 = vmatprep.subr.mxu0 0.0
  %498 = vmatpush1.msra.mxu0 0.0
  %499 = vmatprep.subr.mxu0 0.0
  %500 = vmatpush1.msra.mxu0 0.0
  %501 = vmatprep.subr.mxu0 0.0
  %502 = vmatpush1.msra.mxu0 0.0
  %503 = vmatprep.subr.mxu0 0.0
  %504 = vmatpush1.msra.mxu0 0.0
  %505 = vmatprep.subr.mxu0 0.0
  %506 = vmatpush1.msra.mxu0 0.0
  %507 = vmatprep.subr.mxu0 0.0
  %508 = vmatpush1.msra.mxu0 0.0
  %509 = vmatprep.subr.mxu0 0.0
  %510 = vmatpush1.msra.mxu0 0.0
  %511 = vmatprep.subr.mxu0 0.0
  %512 = vmatpush1.msra.mxu0 0.0
  %513 = vmatprep.subr.mxu0 0.0
  %514 = vmatpush1.msra.mxu0 0.0
  %515 = vmatprep.subr.mxu0 0.0
  %516 = vmatpush1.msra.mxu0 0.0
  %517 = vmatprep.subr.mxu0 0.0
  %518 = vmatpush1.msra.mxu0 0.0
  %519 = vmatprep.subr.mxu0 0.0
  %520 = vmatpush1.msra.mxu0 0.0
  %521 = vmatprep.subr.mxu0 0.0
  %522 = vmatpush1.msra.mxu0 0.0
  %523 = vmatprep.subr.mxu0 0.0
  %524 = vmatpush1.msra.mxu0 0.0
  %525 = vmatprep.subr.mxu0 0.0
  %526 = vmatpush1.msra.mxu0 0.0
  %527 = vmatprep.mubr.f32.mxu0 0.0
  %528 = vmatmul.mubr.f32.gmra.mrb[0].mxu0 %v459
  %v529 = vpop.f32.mrb[0].mxu0
  %v530 = vadd.f32 0.0, %v529
  %v531 = vpop.f32.mrb[0].mxu0
  %532 = vmatprep.mubr.f32.mxu0 0.0
  %533 = vmatmul.mubr.f32.gmra.mrb[0].mxu0 %v461
  %v534 = vpop.f32.mrb[0].mxu0
  %v535 = vadd.f32 0.0, %v534
  %v536 = vpop.f32.mrb[0].mxu0
  %537 = vdwg.mxu0
  %v538 = vadd.f32 %v457, %v530
  %v539 = vadd.f32 %v458, %v535
  %v540 = vxor.u32 %v538, 2147483648
  %v541 = vxor.u32 %v539, 2147483648
  %v542 = vmul.f32 %v540, 1.442695
  %v543 = vpow.pop %v542
  %v544 = vmul.f32 %v541, 1.442695
  %v545 = vpow.pop %v544
  %v546 = vadd.f32 %v543, 1.0
  %v547 = vadd.f32 %v545, 1.0
  %v548 = vrcp.pop %v546
  %v549 = vmul.f32 1.0, %v548
  %v550 = vrcp.pop %v547
  %v551 = vmul.f32 1.0, %v550
  %v552 = vtanh.pop %v538
  %v553 = vtanh.pop %v539
  %v554 = vmul.f32 %v549, %v429
  %v555 = vmul.f32 %v551, %v430
  %558 = vrot.lane.b32.xlu0 %v552, 32
  %v559 = vpop.permute.xlu0 %558
  %560 = vrot.lane.b32.xlu0 %v553, 32
  %v561 = vpop.permute.xlu0 %560
  %v564 = vmul.f32 %v549, %v559
  %v565 = vmul.f32 %v551, %v561
  %568 = vrot.lane.b32.xlu0 %v564, 32
  %v569 = vpop.permute.xlu0 %568
  %570 = vrot.lane.b32.xlu0 %v565, 32
  %v571 = vpop.permute.xlu0 %570
  %v574 = vadd.f32 %v554, %v569
  %v575 = vadd.f32 %v555, %v571
  %v576 = vtanh.pop %v574
  %v577 = vtanh.pop %v575
  %580 = vrot.lane.b32.xlu0 %v576, 32
  %v581 = vpop.permute.xlu0 %580
  %582 = vrot.lane.b32.xlu0 %v577, 32
  %v583 = vpop.permute.xlu0 %582
  %v586 = vmul.f32 %v549, %v581
  %v587 = vmul.f32 %v551, %v583
  %589 = vrot.lane.b32.xlu0 %v586, 64
  %v590 = vpop.permute.xlu0 %589
  %592 = vst.msk [vmem:[#allocation3 + $0x10] sm:$0x3] %vm447, %v590
  %593 = vst.msk [vmem:[#allocation3 + $0x68] sm:$0x3] %vm447, %v590
  %595 = vrot.lane.b32.xlu0 %v587, 64
  %v596 = vpop.permute.xlu0 %595
  %598 = vst.msk [vmem:[#allocation3 + $0x60] sm:$0x3] %vm454, %v596
  %599 = vst.msk [vmem:[#allocation3 + $0x18] sm:$0x3] %vm454, %v596
  %v600 = vld [vmem:[#allocation2 + $0x20] sm:$0xff]
  %v601 = vld [vmem:[#allocation2 + $0x28] sm:$0xff]
  %v602 = vsel %vm38, %v590, 0
  %v604 = vsel %vm38, %v596, 0
  %606 = vmatprep.subr.mxu0 0.0
  %607 = vmatpush1.msra.mxu0 %v72
  %608 = vmatprep.subr.mxu0 0.0
  %609 = vmatpush1.msra.mxu0 %v73
  %610 = vmatprep.subr.mxu0 0.0
  %611 = vmatpush1.msra.mxu0 %v74
  %612 = vmatprep.subr.mxu0 0.0
  %613 = vmatpush1.msra.mxu0 %v75
  %614 = vmatprep.subr.mxu0 0.0
  %615 = vmatpush1.msra.mxu0 0.0
  %616 = vmatprep.subr.mxu0 0.0
  %617 = vmatpush1.msra.mxu0 0.0
  %618 = vmatprep.subr.mxu0 0.0
  %619 = vmatpush1.msra.mxu0 0.0
  %620 = vmatprep.subr.mxu0 0.0
  %621 = vmatpush1.msra.mxu0 0.0
  %622 = vmatprep.subr.mxu0 0.0
  %623 = vmatpush1.msra.mxu0 0.0
  %624 = vmatprep.subr.mxu0 0.0
  %625 = vmatpush1.msra.mxu0 0.0
  %626 = vmatprep.subr.mxu0 0.0
  %627 = vmatpush1.msra.mxu0 0.0
  %628 = vmatprep.subr.mxu0 0.0
  %629 = vmatpush1.msra.mxu0 0.0
  %630 = vmatprep.subr.mxu0 0.0
  %631 = vmatpush1.msra.mxu0 0.0
  %632 = vmatprep.subr.mxu0 0.0
  %633 = vmatpush1.msra.mxu0 0.0
  %634 = vmatprep.subr.mxu0 0.0
  %635 = vmatpush1.msra.mxu0 0.0
  %636 = vmatprep.subr.mxu0 0.0
  %637 = vmatpush1.msra.mxu0 0.0
  %638 = vmatprep.subr.mxu0 0.0
  %639 = vmatpush1.msra.mxu0 0.0
  %640 = vmatprep.subr.mxu0 0.0
  %641 = vmatpush1.msra.mxu0 0.0
  %642 = vmatprep.subr.mxu0 0.0
  %643 = vmatpush1.msra.mxu0 0.0
  %644 = vmatprep.subr.mxu0 0.0
  %645 = vmatpush1.msra.mxu0 0.0
  %646 = vmatprep.subr.mxu0 0.0
  %647 = vmatpush1.msra.mxu0 0.0
  %648 = vmatprep.subr.mxu0 0.0
  %649 = vmatpush1.msra.mxu0 0.0
  %650 = vmatprep.subr.mxu0 0.0
  %651 = vmatpush1.msra.mxu0 0.0
  %652 = vmatprep.subr.mxu0 0.0
  %653 = vmatpush1.msra.mxu0 0.0
  %654 = vmatprep.subr.mxu0 0.0
  %655 = vmatpush1.msra.mxu0 0.0
  %656 = vmatprep.subr.mxu0 0.0
  %657 = vmatpush1.msra.mxu0 0.0
  %658 = vmatprep.subr.mxu0 0.0
  %659 = vmatpush1.msra.mxu0 0.0
  %660 = vmatprep.subr.mxu0 0.0
  %661 = vmatpush1.msra.mxu0 0.0
  %662 = vmatprep.subr.mxu0 0.0
  %663 = vmatpush1.msra.mxu0 0.0
  %664 = vmatprep.subr.mxu0 0.0
  %665 = vmatpush1.msra.mxu0 0.0
  %666 = vmatprep.subr.mxu0 0.0
  %667 = vmatpush1.msra.mxu0 0.0
  %668 = vmatprep.subr.mxu0 0.0
  %669 = vmatpush1.msra.mxu0 0.0
  %670 = vmatprep.mubr.f32.mxu0 0.0
  %671 = vmatmul.mubr.f32.gmra.mrb[0].mxu0 %v602
  %v672 = vpop.f32.mrb[0].mxu0
  %v673 = vadd.f32 0.0, %v672
  %v674 = vpop.f32.mrb[0].mxu0
  %675 = vmatprep.mubr.f32.mxu0 0.0
  %676 = vmatmul.mubr.f32.gmra.mrb[0].mxu0 %v604
  %v677 = vpop.f32.mrb[0].mxu0
  %v678 = vadd.f32 0.0, %v677
  %v679 = vpop.f32.mrb[0].mxu0
  %680 = vdwg.mxu0
  %v681 = vadd.f32 %v600, %v673
  %v682 = vadd.f32 %v601, %v678
  %v683 = vxor.u32 %v681, 2147483648
  %v684 = vxor.u32 %v682, 2147483648
  %v685 = vmul.f32 %v683, 1.442695
  %v686 = vpow.pop %v685
  %v687 = vmul.f32 %v684, 1.442695
  %v688 = vpow.pop %v687
  %v689 = vadd.f32 %v686, 1.0
  %v690 = vadd.f32 %v688, 1.0
  %v691 = vrcp.pop %v689
  %v692 = vmul.f32 1.0, %v691
  %v693 = vrcp.pop %v690
  %v694 = vmul.f32 1.0, %v693
  %v695 = vtanh.pop %v681
  %v696 = vtanh.pop %v682
  %v697 = vmul.f32 %v692, %v574
  %v698 = vmul.f32 %v694, %v575
  %701 = vrot.lane.b32.xlu0 %v695, 32
  %v702 = vpop.permute.xlu0 %701
  %703 = vrot.lane.b32.xlu0 %v696, 32
  %v704 = vpop.permute.xlu0 %703
  %v707 = vmul.f32 %v692, %v702
  %v708 = vmul.f32 %v694, %v704
  %711 = vrot.lane.b32.xlu0 %v707, 32
  %v712 = vpop.permute.xlu0 %711
  %713 = vrot.lane.b32.xlu0 %v708, 32
  %v714 = vpop.permute.xlu0 %713
  %v717 = vadd.f32 %v697, %v712
  %v718 = vadd.f32 %v698, %v714
  %v719 = vtanh.pop %v717
  %v720 = vtanh.pop %v718
  %723 = vrot.lane.b32.xlu0 %v719, 32
  %v724 = vpop.permute.xlu0 %723
  %725 = vrot.lane.b32.xlu0 %v720, 32
  %v726 = vpop.permute.xlu0 %725
  %v729 = vmul.f32 %v692, %v724
  %v730 = vmul.f32 %v694, %v726
  %732 = vrot.lane.b32.xlu0 %v729, 64
  %v733 = vpop.permute.xlu0 %732
  %735 = vst.msk [vmem:[#allocation3 + $0x20] sm:$0x3] %vm447, %v733
  %736 = vst.msk [vmem:[#allocation3 + $0x58] sm:$0x3] %vm447, %v733
  %738 = vrot.lane.b32.xlu0 %v730, 64
  %v739 = vpop.permute.xlu0 %738
  %741 = vst.msk [vmem:[#allocation3 + $0x50] sm:$0x3] %vm454, %v739
  %742 = vst.msk [vmem:[#allocation3 + $0x28] sm:$0x3] %vm454, %v739
  %v743 = vld [vmem:[#allocation2 + $0x30] sm:$0xff]
  %v744 = vld [vmem:[#allocation2 + $0x38] sm:$0xff]
  %v745 = vsel %vm38, %v733, 0
  %v747 = vsel %vm38, %v739, 0
  %749 = vmatprep.subr.mxu0 0.0
  %750 = vmatpush1.msra.mxu0 %v72
  %751 = vmatprep.subr.mxu0 0.0
  %752 = vmatpush1.msra.mxu0 %v73
  %753 = vmatprep.subr.mxu0 0.0
  %754 = vmatpush1.msra.mxu0 %v74
  %755 = vmatprep.subr.mxu0 0.0
  %756 = vmatpush1.msra.mxu0 %v75
  %757 = vmatprep.subr.mxu0 0.0
  %758 = vmatpush1.msra.mxu0 0.0
  %759 = vmatprep.subr.mxu0 0.0
  %760 = vmatpush1.msra.mxu0 0.0
  %761 = vmatprep.subr.mxu0 0.0
  %762 = vmatpush1.msra.mxu0 0.0
  %763 = vmatprep.subr.mxu0 0.0
  %764 = vmatpush1.msra.mxu0 0.0
  %765 = vmatprep.subr.mxu0 0.0
  %766 = vmatpush1.msra.mxu0 0.0
  %767 = vmatprep.subr.mxu0 0.0
  %768 = vmatpush1.msra.mxu0 0.0
  %769 = vmatprep.subr.mxu0 0.0
  %770 = vmatpush1.msra.mxu0 0.0
  %771 = vmatprep.subr.mxu0 0.0
  %772 = vmatpush1.msra.mxu0 0.0
  %773 = vmatprep.subr.mxu0 0.0
  %774 = vmatpush1.msra.mxu0 0.0
  %775 = vmatprep.subr.mxu0 0.0
  %776 = vmatpush1.msra.mxu0 0.0
  %777 = vmatprep.subr.mxu0 0.0
  %778 = vmatpush1.msra.mxu0 0.0
  %779 = vmatprep.subr.mxu0 0.0
  %780 = vmatpush1.msra.mxu0 0.0
  %781 = vmatprep.subr.mxu0 0.0
  %782 = vmatpush1.msra.mxu0 0.0
  %783 = vmatprep.subr.mxu0 0.0
  %784 = vmatpush1.msra.mxu0 0.0
  %785 = vmatprep.subr.mxu0 0.0
  %786 = vmatpush1.msra.mxu0 0.0
  %787 = vmatprep.subr.mxu0 0.0
  %788 = vmatpush1.msra.mxu0 0.0
  %789 = vmatprep.subr.mxu0 0.0
  %790 = vmatpush1.msra.mxu0 0.0
  %791 = vmatprep.subr.mxu0 0.0
  %792 = vmatpush1.msra.mxu0 0.0
  %793 = vmatprep.subr.mxu0 0.0
  %794 = vmatpush1.msra.mxu0 0.0
  %795 = vmatprep.subr.mxu0 0.0
  %796 = vmatpush1.msra.mxu0 0.0
  %797 = vmatprep.subr.mxu0 0.0
  %798 = vmatpush1.msra.mxu0 0.0
  %799 = vmatprep.subr.mxu0 0.0
  %800 = vmatpush1.msra.mxu0 0.0
  %801 = vmatprep.subr.mxu0 0.0
  %802 = vmatpush1.msra.mxu0 0.0
  %803 = vmatprep.subr.mxu0 0.0
  %804 = vmatpush1.msra.mxu0 0.0
  %805 = vmatprep.subr.mxu0 0.0
  %806 = vmatpush1.msra.mxu0 0.0
  %807 = vmatprep.subr.mxu0 0.0
  %808 = vmatpush1.msra.mxu0 0.0
  %809 = vmatprep.subr.mxu0 0.0
  %810 = vmatpush1.msra.mxu0 0.0
  %811 = vmatprep.subr.mxu0 0.0
  %812 = vmatpush1.msra.mxu0 0.0
  %813 = vmatprep.mubr.f32.mxu0 0.0
  %814 = vmatmul.mubr.f32.gmra.mrb[0].mxu0 %v745
  %v815 = vpop.f32.mrb[0].mxu0
  %v816 = vadd.f32 0.0, %v815
  %v817 = vpop.f32.mrb[0].mxu0
  %818 = vmatprep.mubr.f32.mxu0 0.0
  %819 = vmatmul.mubr.f32.gmra.mrb[0].mxu0 %v747
  %v820 = vpop.f32.mrb[0].mxu0
  %v821 = vadd.f32 0.0, %v820
  %v822 = vpop.f32.mrb[0].mxu0
  %823 = vdwg.mxu0
  %v824 = vadd.f32 %v743, %v816
  %v825 = vadd.f32 %v744, %v821
  %v826 = vxor.u32 %v824, 2147483648
  %v827 = vxor.u32 %v825, 2147483648
  %v828 = vmul.f32 %v826, 1.442695
  %v829 = vpow.pop %v828
  %v830 = vmul.f32 %v827, 1.442695
  %v831 = vpow.pop %v830
  %v832 = vadd.f32 %v829, 1.0
  %v833 = vadd.f32 %v831, 1.0
  %v834 = vrcp.pop %v832
  %v835 = vmul.f32 1.0, %v834
  %v836 = vrcp.pop %v833
  %v837 = vmul.f32 1.0, %v836
  %v838 = vtanh.pop %v824
  %v839 = vtanh.pop %v825
  %v840 = vmul.f32 %v835, %v717
  %v841 = vmul.f32 %v837, %v718
  %844 = vrot.lane.b32.xlu0 %v838, 32
  %v845 = vpop.permute.xlu0 %844
  %846 = vrot.lane.b32.xlu0 %v839, 32
  %v847 = vpop.permute.xlu0 %846
  %v850 = vmul.f32 %v835, %v845
  %v851 = vmul.f32 %v837, %v847
  %854 = vrot.lane.b32.xlu0 %v850, 32
  %v855 = vpop.permute.xlu0 %854
  %856 = vrot.lane.b32.xlu0 %v851, 32
  %v857 = vpop.permute.xlu0 %856
  %v860 = vadd.f32 %v840, %v855
  %v861 = vadd.f32 %v841, %v857
  %v862 = vtanh.pop %v860
  %v863 = vtanh.pop %v861
  %866 = vrot.lane.b32.xlu0 %v862, 32
  %v867 = vpop.permute.xlu0 %866
  %868 = vrot.lane.b32.xlu0 %v863, 32
  %v869 = vpop.permute.xlu0 %868
  %v872 = vmul.f32 %v835, %v867
  %v873 = vmul.f32 %v837, %v869
  %875 = vrot.lane.b32.xlu0 %v872, 64
  %v876 = vpop.permute.xlu0 %875
  %878 = vst.msk [vmem:[#allocation3 + $0x30] sm:$0x3] %vm447, %v876
  %879 = vst.msk [vmem:[#allocation3 + $0x48] sm:$0x3] %vm447, %v876
  %881 = vrot.lane.b32.xlu0 %v873, 64
  %v882 = vpop.permute.xlu0 %881
  %884 = vst.msk [vmem:[#allocation3 + $0x40] sm:$0x3] %vm454, %v882
  %885 = vst.msk [vmem:[#allocation3 + $0x38] sm:$0x3] %vm454, %v882
  %v886 = vld [vmem:[#allocation2 + $0x40] sm:$0xff]
  %v887 = vld [vmem:[#allocation2 + $0x48] sm:$0xff]
  %v888 = vsel %vm38, %v876, 0
  %v890 = vsel %vm38, %v882, 0
  %892 = vmatprep.subr.mxu0 0.0
  %893 = vmatpush1.msra.mxu0 %v72
  %894 = vmatprep.subr.mxu0 0.0
  %895 = vmatpush1.msra.mxu0 %v73
  %896 = vmatprep.subr.mxu0 0.0
  %897 = vmatpush1.msra.mxu0 %v74
  %898 = vmatprep.subr.mxu0 0.0
  %899 = vmatpush1.msra.mxu0 %v75
  %900 = vmatprep.subr.mxu0 0.0
  %901 = vmatpush1.msra.mxu0 0.0
  %902 = vmatprep.subr.mxu0 0.0
  %903 = vmatpush1.msra.mxu0 0.0
  %904 = vmatprep.subr.mxu0 0.0
  %905 = vmatpush1.msra.mxu0 0.0
  %906 = vmatprep.subr.mxu0 0.0
  %907 = vmatpush1.msra.mxu0 0.0
  %908 = vmatprep.subr.mxu0 0.0
  %909 = vmatpush1.msra.mxu0 0.0
  %910 = vmatprep.subr.mxu0 0.0
  %911 = vmatpush1.msra.mxu0 0.0
  %912 = vmatprep.subr.mxu0 0.0
  %913 = vmatpush1.msra.mxu0 0.0
  %914 = vmatprep.subr.mxu0 0.0
  %915 = vmatpush1.msra.mxu0 0.0
  %916 = vmatprep.subr.mxu0 0.0
  %917 = vmatpush1.msra.mxu0 0.0
  %918 = vmatprep.subr.mxu0 0.0
  %919 = vmatpush1.msra.mxu0 0.0
  %920 = vmatprep.subr.mxu0 0.0
  %921 = vmatpush1.msra.mxu0 0.0
  %922 = vmatprep.subr.mxu0 0.0
  %923 = vmatpush1.msra.mxu0 0.0
  %924 = vmatprep.subr.mxu0 0.0
  %925 = vmatpush1.msra.mxu0 0.0
  %926 = vmatprep.subr.mxu0 0.0
  %927 = vmatpush1.msra.mxu0 0.0
  %928 = vmatprep.subr.mxu0 0.0
  %929 = vmatpush1.msra.mxu0 0.0
  %930 = vmatprep.subr.mxu0 0.0
  %931 = vmatpush1.msra.mxu0 0.0
  %932 = vmatprep.subr.mxu0 0.0
  %933 = vmatpush1.msra.mxu0 0.0
  %934 = vmatprep.subr.mxu0 0.0
  %935 = vmatpush1.msra.mxu0 0.0
  %936 = vmatprep.subr.mxu0 0.0
  %937 = vmatpush1.msra.mxu0 0.0
  %938 = vmatprep.subr.mxu0 0.0
  %939 = vmatpush1.msra.mxu0 0.0
  %940 = vmatprep.subr.mxu0 0.0
  %941 = vmatpush1.msra.mxu0 0.0
  %942 = vmatprep.subr.mxu0 0.0
  %943 = vmatpush1.msra.mxu0 0.0
  %944 = vmatprep.subr.mxu0 0.0
  %945 = vmatpush1.msra.mxu0 0.0
  %946 = vmatprep.subr.mxu0 0.0
  %947 = vmatpush1.msra.mxu0 0.0
  %948 = vmatprep.subr.mxu0 0.0
  %949 = vmatpush1.msra.mxu0 0.0
  %950 = vmatprep.subr.mxu0 0.0
  %951 = vmatpush1.msra.mxu0 0.0
  %952 = vmatprep.subr.mxu0 0.0
  %953 = vmatpush1.msra.mxu0 0.0
  %954 = vmatprep.subr.mxu0 0.0
  %955 = vmatpush1.msra.mxu0 0.0
  %956 = vmatprep.mubr.f32.mxu0 0.0
  %957 = vmatmul.mubr.f32.gmra.mrb[0].mxu0 %v888
  %v958 = vpop.f32.mrb[0].mxu0
  %v959 = vadd.f32 0.0, %v958
  %v960 = vpop.f32.mrb[0].mxu0
  %961 = vmatprep.mubr.f32.mxu0 0.0
  %962 = vmatmul.mubr.f32.gmra.mrb[0].mxu0 %v890
  %v963 = vpop.f32.mrb[0].mxu0
  %v964 = vadd.f32 0.0, %v963
  %v965 = vpop.f32.mrb[0].mxu0
  %966 = vdwg.mxu0
  %v967 = vadd.f32 %v886, %v959
  %v968 = vadd.f32 %v887, %v964
  %v969 = vxor.u32 %v967, 2147483648
  %v970 = vxor.u32 %v968, 2147483648
  %v971 = vmul.f32 %v969, 1.442695
  %v972 = vpow.pop %v971
  %v973 = vmul.f32 %v970, 1.442695
  %v974 = vpow.pop %v973
  %v975 = vadd.f32 %v972, 1.0
  %v976 = vadd.f32 %v974, 1.0
  %v977 = vrcp.pop %v975
  %v978 = vmul.f32 1.0, %v977
  %v979 = vrcp.pop %v976
  %v980 = vmul.f32 1.0, %v979
  %v981 = vtanh.pop %v967
  %v982 = vtanh.pop %v968
  %v983 = vmul.f32 %v978, %v860
  %v984 = vmul.f32 %v980, %v861
  %987 = vrot.lane.b32.xlu0 %v981, 32
  %v988 = vpop.permute.xlu0 %987
  %989 = vrot.lane.b32.xlu0 %v982, 32
  %v990 = vpop.permute.xlu0 %989
  %v993 = vmul.f32 %v978, %v988
  %v994 = vmul.f32 %v980, %v990
  %997 = vrot.lane.b32.xlu0 %v993, 32
  %v998 = vpop.permute.xlu0 %997
  %999 = vrot.lane.b32.xlu0 %v994, 32
  %v1000 = vpop.permute.xlu0 %999
  %v1003 = vadd.f32 %v983, %v998
  %v1004 = vadd.f32 %v984, %v1000
  %v1005 = vtanh.pop %v1003
  %v1006 = vtanh.pop %v1004
  %1009 = vrot.lane.b32.xlu0 %v1005, 32
  %v1010 = vpop.permute.xlu0 %1009
  %1011 = vrot.lane.b32.xlu0 %v1006, 32
  %v1012 = vpop.permute.xlu0 %1011
  %v1015 = vmul.f32 %v978, %v1010
  %v1016 = vmul.f32 %v980, %v1012
  %1018 = vrot.lane.b32.xlu0 %v1015, 64
  %v1019 = vpop.permute.xlu0 %1018
  %1021 = vst.msk [vmem:[#allocation3 + $0x40] sm:$0x3] %vm447, %v1019
  %1022 = vst.msk [vmem:[#allocation3 + $0x38] sm:$0x3] %vm447, %v1019
  %1024 = vrot.lane.b32.xlu0 %v1016, 64
  %v1025 = vpop.permute.xlu0 %1024
  %1027 = vst.msk [vmem:[#allocation3 + $0x30] sm:$0x3] %vm454, %v1025
  %1028 = vst.msk [vmem:[#allocation3 + $0x48] sm:$0x3] %vm454, %v1025
  %v1029 = vld [vmem:[#allocation2 + $0x50] sm:$0xff]
  %v1030 = vld [vmem:[#allocation2 + $0x58] sm:$0xff]
  %v1031 = vsel %vm38, %v1019, 0
  %v1033 = vsel %vm38, %v1025, 0
  %1035 = vmatprep.subr.mxu0 0.0
  %1036 = vmatpush1.msra.mxu0 %v72
  %1037 = vmatprep.subr.mxu0 0.0
  %1038 = vmatpush1.msra.mxu0 %v73
  %1039 = vmatprep.subr.mxu0 0.0
  %1040 = vmatpush1.msra.mxu0 %v74
  %1041 = vmatprep.subr.mxu0 0.0
  %1042 = vmatpush1.msra.mxu0 %v75
  %1043 = vmatprep.subr.mxu0 0.0
  %1044 = vmatpush1.msra.mxu0 0.0
  %1045 = vmatprep.subr.mxu0 0.0
  %1046 = vmatpush1.msra.mxu0 0.0
  %1047 = vmatprep.subr.mxu0 0.0
  %1048 = vmatpush1.msra.mxu0 0.0
  %1049 = vmatprep.subr.mxu0 0.0
  %1050 = vmatpush1.msra.mxu0 0.0
  %1051 = vmatprep.subr.mxu0 0.0
  %1052 = vmatpush1.msra.mxu0 0.0
  %1053 = vmatprep.subr.mxu0 0.0
  %1054 = vmatpush1.msra.mxu0 0.0
  %1055 = vmatprep.subr.mxu0 0.0
  %1056 = vmatpush1.msra.mxu0 0.0
  %1057 = vmatprep.subr.mxu0 0.0
  %1058 = vmatpush1.msra.mxu0 0.0
  %1059 = vmatprep.subr.mxu0 0.0
  %1060 = vmatpush1.msra.mxu0 0.0
  %1061 = vmatprep.subr.mxu0 0.0
  %1062 = vmatpush1.msra.mxu0 0.0
  %1063 = vmatprep.subr.mxu0 0.0
  %1064 = vmatpush1.msra.mxu0 0.0
  %1065 = vmatprep.subr.mxu0 0.0
  %1066 = vmatpush1.msra.mxu0 0.0
  %1067 = vmatprep.subr.mxu0 0.0
  %1068 = vmatpush1.msra.mxu0 0.0
  %1069 = vmatprep.subr.mxu0 0.0
  %1070 = vmatpush1.msra.mxu0 0.0
  %1071 = vmatprep.subr.mxu0 0.0
  %1072 = vmatpush1.msra.mxu0 0.0
  %1073 = vmatprep.subr.mxu0 0.0
  %1074 = vmatpush1.msra.mxu0 0.0
  %1075 = vmatprep.subr.mxu0 0.0
  %1076 = vmatpush1.msra.mxu0 0.0
  %1077 = vmatprep.subr.mxu0 0.0
  %1078 = vmatpush1.msra.mxu0 0.0
  %1079 = vmatprep.subr.mxu0 0.0
  %1080 = vmatpush1.msra.mxu0 0.0
  %1081 = vmatprep.subr.mxu0 0.0
  %1082 = vmatpush1.msra.mxu0 0.0
  %1083 = vmatprep.subr.mxu0 0.0
  %1084 = vmatpush1.msra.mxu0 0.0
  %1085 = vmatprep.subr.mxu0 0.0
  %1086 = vmatpush1.msra.mxu0 0.0
  %1087 = vmatprep.subr.mxu0 0.0
  %1088 = vmatpush1.msra.mxu0 0.0
  %1089 = vmatprep.subr.mxu0 0.0
  %1090 = vmatpush1.msra.mxu0 0.0
  %1091 = vmatprep.subr.mxu0 0.0
  %1092 = vmatpush1.msra.mxu0 0.0
  %1093 = vmatprep.subr.mxu0 0.0
  %1094 = vmatpush1.msra.mxu0 0.0
  %1095 = vmatprep.subr.mxu0 0.0
  %1096 = vmatpush1.msra.mxu0 0.0
  %1097 = vmatprep.subr.mxu0 0.0
  %1098 = vmatpush1.msra.mxu0 0.0
  %1099 = vmatprep.mubr.f32.mxu0 0.0
  %1100 = vmatmul.mubr.f32.gmra.mrb[0].mxu0 %v1031
  %v1101 = vpop.f32.mrb[0].mxu0
  %v1102 = vadd.f32 0.0, %v1101
  %v1103 = vpop.f32.mrb[0].mxu0
  %1104 = vmatprep.mubr.f32.mxu0 0.0
  %1105 = vmatmul.mubr.f32.gmra.mrb[0].mxu0 %v1033
  %v1106 = vpop.f32.mrb[0].mxu0
  %v1107 = vadd.f32 0.0, %v1106
  %v1108 = vpop.f32.mrb[0].mxu0
  %1109 = vdwg.mxu0
  %v1110 = vadd.f32 %v1029, %v1102
  %v1111 = vadd.f32 %v1030, %v1107
  %v1112 = vxor.u32 %v1110, 2147483648
  %v1113 = vxor.u32 %v1111, 2147483648
  %v1114 = vmul.f32 %v1112, 1.442695
  %v1115 = vpow.pop %v1114
  %v1116 = vmul.f32 %v1113, 1.442695
  %v1117 = vpow.pop %v1116
  %v1118 = vadd.f32 %v1115, 1.0
  %v1119 = vadd.f32 %v1117, 1.0
  %v1120 = vrcp.pop %v1118
  %v1121 = vmul.f32 1.0, %v1120
  %v1122 = vrcp.pop %v1119
  %v1123 = vmul.f32 1.0, %v1122
  %v1124 = vtanh.pop %v1110
  %v1125 = vtanh.pop %v1111
  %v1126 = vmul.f32 %v1121, %v1003
  %v1127 = vmul.f32 %v1123, %v1004
  %1130 = vrot.lane.b32.xlu0 %v1124, 32
  %v1131 = vpop.permute.xlu0 %1130
  %1132 = vrot.lane.b32.xlu0 %v1125, 32
  %v1133 = vpop.permute.xlu0 %1132
  %v1136 = vmul.f32 %v1121, %v1131
  %v1137 = vmul.f32 %v1123, %v1133
  %1140 = vrot.lane.b32.xlu0 %v1136, 32
  %v1141 = vpop.permute.xlu0 %1140
  %1142 = vrot.lane.b32.xlu0 %v1137, 32
  %v1143 = vpop.permute.xlu0 %1142
  %v1146 = vadd.f32 %v1126, %v1141
  %v1147 = vadd.f32 %v1127, %v1143
  %v1148 = vtanh.pop %v1146
  %v1149 = vtanh.pop %v1147
  %1152 = vrot.lane.b32.xlu0 %v1148, 32
  %v1153 = vpop.permute.xlu0 %1152
  %1154 = vrot.lane.b32.xlu0 %v1149, 32
  %v1155 = vpop.permute.xlu0 %1154
  %v1158 = vmul.f32 %v1121, %v1153
  %v1159 = vmul.f32 %v1123, %v1155
  %1161 = vrot.lane.b32.xlu0 %v1158, 64
  %v1162 = vpop.permute.xlu0 %1161
  %1164 = vst.msk [vmem:[#allocation3 + $0x50] sm:$0x3] %vm447, %v1162
  %1165 = vst.msk [vmem:[#allocation3 + $0x28] sm:$0x3] %vm447, %v1162
  %1167 = vrot.lane.b32.xlu0 %v1159, 64
  %v1168 = vpop.permute.xlu0 %1167
  %1170 = vst.msk [vmem:[#allocation3 + $0x20] sm:$0x3] %vm454, %v1168
  %1171 = vst.msk [vmem:[#allocation3 + $0x58] sm:$0x3] %vm454, %v1168
  %v1172 = vld [vmem:[#allocation2 + $0x60] sm:$0xff]
  %v1173 = vld [vmem:[#allocation2 + $0x68] sm:$0xff]
  %v1174 = vsel %vm38, %v1162, 0
  %v1176 = vsel %vm38, %v1168, 0
  %1178 = vmatprep.subr.mxu0 0.0
  %1179 = vmatpush1.msra.mxu0 %v72
  %1180 = vmatprep.subr.mxu0 0.0
  %1181 = vmatpush1.msra.mxu0 %v73
  %1182 = vmatprep.subr.mxu0 0.0
  %1183 = vmatpush1.msra.mxu0 %v74
  %1184 = vmatprep.subr.mxu0 0.0
  %1185 = vmatpush1.msra.mxu0 %v75
  %1186 = vmatprep.subr.mxu0 0.0
  %1187 = vmatpush1.msra.mxu0 0.0
  %1188 = vmatprep.subr.mxu0 0.0
  %1189 = vmatpush1.msra.mxu0 0.0
  %1190 = vmatprep.subr.mxu0 0.0
  %1191 = vmatpush1.msra.mxu0 0.0
  %1192 = vmatprep.subr.mxu0 0.0
  %1193 = vmatpush1.msra.mxu0 0.0
  %1194 = vmatprep.subr.mxu0 0.0
  %1195 = vmatpush1.msra.mxu0 0.0
  %1196 = vmatprep.subr.mxu0 0.0
  %1197 = vmatpush1.msra.mxu0 0.0
  %1198 = vmatprep.subr.mxu0 0.0
  %1199 = vmatpush1.msra.mxu0 0.0
  %1200 = vmatprep.subr.mxu0 0.0
  %1201 = vmatpush1.msra.mxu0 0.0
  %1202 = vmatprep.subr.mxu0 0.0
  %1203 = vmatpush1.msra.mxu0 0.0
  %1204 = vmatprep.subr.mxu0 0.0
  %1205 = vmatpush1.msra.mxu0 0.0
  %1206 = vmatprep.subr.mxu0 0.0
  %1207 = vmatpush1.msra.mxu0 0.0
  %1208 = vmatprep.subr.mxu0 0.0
  %1209 = vmatpush1.msra.mxu0 0.0
  %1210 = vmatprep.subr.mxu0 0.0
  %1211 = vmatpush1.msra.mxu0 0.0
  %1212 = vmatprep.subr.mxu0 0.0
  %1213 = vmatpush1.msra.mxu0 0.0
  %1214 = vmatprep.subr.mxu0 0.0
  %1215 = vmatpush1.msra.mxu0 0.0
  %1216 = vmatprep.subr.mxu0 0.0
  %1217 = vmatpush1.msra.mxu0 0.0
  %1218 = vmatprep.subr.mxu0 0.0
  %1219 = vmatpush1.msra.mxu0 0.0
  %1220 = vmatprep.subr.mxu0 0.0
  %1221 = vmatpush1.msra.mxu0 0.0
  %1222 = vmatprep.subr.mxu0 0.0
  %1223 = vmatpush1.msra.mxu0 0.0
  %1224 = vmatprep.subr.mxu0 0.0
  %1225 = vmatpush1.msra.mxu0 0.0
  %1226 = vmatprep.subr.mxu0 0.0
  %1227 = vmatpush1.msra.mxu0 0.0
  %1228 = vmatprep.subr.mxu0 0.0
  %1229 = vmatpush1.msra.mxu0 0.0
  %1230 = vmatprep.subr.mxu0 0.0
  %1231 = vmatpush1.msra.mxu0 0.0
  %1232 = vmatprep.subr.mxu0 0.0
  %1233 = vmatpush1.msra.mxu0 0.0
  %1234 = vmatprep.subr.mxu0 0.0
  %1235 = vmatpush1.msra.mxu0 0.0
  %1236 = vmatprep.subr.mxu0 0.0
  %1237 = vmatpush1.msra.mxu0 0.0
  %1238 = vmatprep.subr.mxu0 0.0
  %1239 = vmatpush1.msra.mxu0 0.0
  %1240 = vmatprep.subr.mxu0 0.0
  %1241 = vmatpush1.msra.mxu0 0.0
  %1242 = vmatprep.mubr.f32.mxu0 0.0
  %1243 = vmatmul.mubr.f32.gmra.mrb[0].mxu0 %v1174
  %v1244 = vpop.f32.mrb[0].mxu0
  %v1245 = vadd.f32 0.0, %v1244
  %v1246 = vpop.f32.mrb[0].mxu0
  %1247 = vmatprep.mubr.f32.mxu0 0.0
  %1248 = vmatmul.mubr.f32.gmra.mrb[0].mxu0 %v1176
  %v1249 = vpop.f32.mrb[0].mxu0
  %v1250 = vadd.f32 0.0, %v1249
  %v1251 = vpop.f32.mrb[0].mxu0
  %1252 = vdwg.mxu0
  %v1253 = vadd.f32 %v1172, %v1245
  %v1254 = vadd.f32 %v1173, %v1250
  %v1255 = vxor.u32 %v1253, 2147483648
  %v1256 = vxor.u32 %v1254, 2147483648
  %v1257 = vmul.f32 %v1255, 1.442695
  %v1258 = vpow.pop %v1257
  %v1259 = vmul.f32 %v1256, 1.442695
  %v1260 = vpow.pop %v1259
  %v1261 = vadd.f32 %v1258, 1.0
  %v1262 = vadd.f32 %v1260, 1.0
  %v1263 = vrcp.pop %v1261
  %v1264 = vmul.f32 1.0, %v1263
  %v1265 = vrcp.pop %v1262
  %v1266 = vmul.f32 1.0, %v1265
  %v1267 = vtanh.pop %v1253
  %v1268 = vtanh.pop %v1254
  %v1269 = vmul.f32 %v1264, %v1146
  %v1270 = vmul.f32 %v1266, %v1147
  %1273 = vrot.lane.b32.xlu0 %v1267, 32
  %v1274 = vpop.permute.xlu0 %1273
  %1275 = vrot.lane.b32.xlu0 %v1268, 32
  %v1276 = vpop.permute.xlu0 %1275
  %v1279 = vmul.f32 %v1264, %v1274
  %v1280 = vmul.f32 %v1266, %v1276
  %1283 = vrot.lane.b32.xlu0 %v1279, 32
  %v1284 = vpop.permute.xlu0 %1283
  %1285 = vrot.lane.b32.xlu0 %v1280, 32
  %v1286 = vpop.permute.xlu0 %1285
  %v1289 = vadd.f32 %v1269, %v1284
  %v1290 = vadd.f32 %v1270, %v1286
  %v1291 = vtanh.pop %v1289
  %v1292 = vtanh.pop %v1290
  %1295 = vrot.lane.b32.xlu0 %v1291, 32
  %v1296 = vpop.permute.xlu0 %1295
  %1297 = vrot.lane.b32.xlu0 %v1292, 32
  %v1298 = vpop.permute.xlu0 %1297
  %v1301 = vmul.f32 %v1264, %v1296
  %v1302 = vmul.f32 %v1266, %v1298
  %1304 = vrot.lane.b32.xlu0 %v1301, 64
  %v1305 = vpop.permute.xlu0 %1304
  %1307 = vst.msk [vmem:[#allocation3 + $0x60] sm:$0x3] %vm447, %v1305
  %1308 = vst.msk [vmem:[#allocation3 + $0x18] sm:$0x3] %vm447, %v1305
  %1310 = vrot.lane.b32.xlu0 %v1302, 64
  %v1311 = vpop.permute.xlu0 %1310
  %1313 = vst.msk [vmem:[#allocation3 + $0x10] sm:$0x3] %vm454, %v1311
  %1314 = vst.msk [vmem:[#allocation3 + $0x68] sm:$0x3] %vm454, %v1311
  %v1315 = vld [vmem:[#allocation2 + $0x70] sm:$0xff]
  %v1316 = vld [vmem:[#allocation2 + $0x78] sm:$0xff]
  %v1317 = vsel %vm38, %v1305, 0
  %v1319 = vsel %vm38, %v1311, 0
  %1321 = vmatprep.subr.mxu0 0.0
  %1322 = vmatpush1.msra.mxu0 %v72
  %1323 = vmatprep.subr.mxu0 0.0
  %1324 = vmatpush1.msra.mxu0 %v73
  %1325 = vmatprep.subr.mxu0 0.0
  %1326 = vmatpush1.msra.mxu0 %v74
  %1327 = vmatprep.subr.mxu0 0.0
  %1328 = vmatpush1.msra.mxu0 %v75
  %1329 = vmatprep.subr.mxu0 0.0
  %1330 = vmatpush1.msra.mxu0 0.0
  %1331 = vmatprep.subr.mxu0 0.0
  %1332 = vmatpush1.msra.mxu0 0.0
  %1333 = vmatprep.subr.mxu0 0.0
  %1334 = vmatpush1.msra.mxu0 0.0
  %1335 = vmatprep.subr.mxu0 0.0
  %1336 = vmatpush1.msra.mxu0 0.0
  %1337 = vmatprep.subr.mxu0 0.0
  %1338 = vmatpush1.msra.mxu0 0.0
  %1339 = vmatprep.subr.mxu0 0.0
  %1340 = vmatpush1.msra.mxu0 0.0
  %1341 = vmatprep.subr.mxu0 0.0
  %1342 = vmatpush1.msra.mxu0 0.0
  %1343 = vmatprep.subr.mxu0 0.0
  %1344 = vmatpush1.msra.mxu0 0.0
  %1345 = vmatprep.subr.mxu0 0.0
  %1346 = vmatpush1.msra.mxu0 0.0
  %1347 = vmatprep.subr.mxu0 0.0
  %1348 = vmatpush1.msra.mxu0 0.0
  %1349 = vmatprep.subr.mxu0 0.0
  %1350 = vmatpush1.msra.mxu0 0.0
  %1351 = vmatprep.subr.mxu0 0.0
  %1352 = vmatpush1.msra.mxu0 0.0
  %1353 = vmatprep.subr.mxu0 0.0
  %1354 = vmatpush1.msra.mxu0 0.0
  %1355 = vmatprep.subr.mxu0 0.0
  %1356 = vmatpush1.msra.mxu0 0.0
  %1357 = vmatprep.subr.mxu0 0.0
  %1358 = vmatpush1.msra.mxu0 0.0
  %1359 = vmatprep.subr.mxu0 0.0
  %1360 = vmatpush1.msra.mxu0 0.0
  %1361 = vmatprep.subr.mxu0 0.0
  %1362 = vmatpush1.msra.mxu0 0.0
  %1363 = vmatprep.subr.mxu0 0.0
  %1364 = vmatpush1.msra.mxu0 0.0
  %1365 = vmatprep.subr.mxu0 0.0
  %1366 = vmatpush1.msra.mxu0 0.0
  %1367 = vmatprep.subr.mxu0 0.0
  %1368 = vmatpush1.msra.mxu0 0.0
  %1369 = vmatprep.subr.mxu0 0.0
  %1370 = vmatpush1.msra.mxu0 0.0
  %1371 = vmatprep.subr.mxu0 0.0
  %1372 = vmatpush1.msra.mxu0 0.0
  %1373 = vmatprep.subr.mxu0 0.0
  %1374 = vmatpush1.msra.mxu0 0.0
  %1375 = vmatprep.subr.mxu0 0.0
  %1376 = vmatpush1.msra.mxu0 0.0
  %1377 = vmatprep.subr.mxu0 0.0
  %1378 = vmatpush1.msra.mxu0 0.0
  %1379 = vmatprep.subr.mxu0 0.0
  %1380 = vmatpush1.msra.mxu0 0.0
  %1381 = vmatprep.subr.mxu0 0.0
  %1382 = vmatpush1.msra.mxu0 0.0
  %1383 = vmatprep.subr.mxu0 0.0
  %1384 = vmatpush1.msra.mxu0 0.0
  %1385 = vmatprep.mubr.f32.mxu0 0.0
  %1386 = vmatmul.mubr.f32.gmra.mrb[0].mxu0 %v1317
  %v1387 = vpop.f32.mrb[0].mxu0
  %v1388 = vadd.f32 0.0, %v1387
  %v1389 = vpop.f32.mrb[0].mxu0
  %1390 = vmatprep.mubr.f32.mxu0 0.0
  %1391 = vmatmul.mubr.f32.gmra.mrb[0].mxu0 %v1319
  %v1392 = vpop.f32.mrb[0].mxu0
  %v1393 = vadd.f32 0.0, %v1392
  %v1394 = vpop.f32.mrb[0].mxu0
  %1395 = vdwg.mxu0
  %v1396 = vadd.f32 %v1315, %v1388
  %v1397 = vadd.f32 %v1316, %v1393
  %v1398 = vxor.u32 %v1396, 2147483648
  %v1399 = vxor.u32 %v1397, 2147483648
  %v1400 = vmul.f32 %v1398, 1.442695
  %v1401 = vpow.pop %v1400
  %v1402 = vmul.f32 %v1399, 1.442695
  %v1403 = vpow.pop %v1402
  %v1404 = vadd.f32 %v1401, 1.0
  %v1405 = vadd.f32 %v1403, 1.0
  %v1406 = vrcp.pop %v1404
  %v1407 = vmul.f32 1.0, %v1406
  %v1408 = vrcp.pop %v1405
  %v1409 = vmul.f32 1.0, %v1408
  %v1410 = vtanh.pop %v1396
  %v1411 = vtanh.pop %v1397
  %v1412 = vmul.f32 %v1407, %v1289
  %v1413 = vmul.f32 %v1409, %v1290
  %1416 = vrot.lane.b32.xlu0 %v1410, 32
  %v1417 = vpop.permute.xlu0 %1416
  %1418 = vrot.lane.b32.xlu0 %v1411, 32
  %v1419 = vpop.permute.xlu0 %1418
  %v1422 = vmul.f32 %v1407, %v1417
  %v1423 = vmul.f32 %v1409, %v1419
  %1426 = vrot.lane.b32.xlu0 %v1422, 32
  %v1427 = vpop.permute.xlu0 %1426
  %1428 = vrot.lane.b32.xlu0 %v1423, 32
  %v1429 = vpop.permute.xlu0 %1428
  %v1432 = vadd.f32 %v1412, %v1427
  %v1433 = vadd.f32 %v1413, %v1429
  %v1434 = vtanh.pop %v1432
  %v1435 = vtanh.pop %v1433
  %1438 = vrot.lane.b32.xlu0 %v1434, 32
  %v1439 = vpop.permute.xlu0 %1438
  %1440 = vrot.lane.b32.xlu0 %v1435, 32
  %v1441 = vpop.permute.xlu0 %1440
  %v1444 = vmul.f32 %v1407, %v1439
  %v1445 = vmul.f32 %v1409, %v1441
  %1447 = vrot.lane.b32.xlu0 %v1444, 64
  %v1448 = vpop.permute.xlu0 %1447
  %1450 = vst.msk [vmem:[#allocation3 + $0x70] sm:$0x3] %vm447, %v1448
  %1451 = vst.msk [vmem:[#allocation3 + $0x8] sm:$0x3] %vm447, %v1448
  %1453 = vrot.lane.b32.xlu0 %v1445, 64
  %v1454 = vpop.permute.xlu0 %1453
  %1456 = vst.msk [vmem:[#allocation3] sm:$0x3] %vm454, %v1454
  %1457 = vst.msk [vmem:[#allocation3 + $0x78] sm:$0x3] %vm454, %v1454
  %v1458 = vld [vmem:[%s4] sm:$0xff]
  %v1459 = vld [vmem:[%s4 + $0x8] sm:$0xff]
  %v1460 = vld [vmem:[%s4 + $0x10] sm:$0xff]
  %v1461 = vld [vmem:[%s4 + $0x18] sm:$0xff]
  %v1462 = vld [vmem:[%s5] sm:$0xff]
  %v1463 = vld [vmem:[%s5 + $0x8] sm:$0xff]
  %v1464 = vld [vmem:[%s5 + $0x10] sm:$0xff]
  %v1465 = vld [vmem:[%s5 + $0x18] sm:$0xff]
  %v1466 = vld [vmem:[%s6] sm:$0x1]
  %v1467 = vld [vmem:[#allocation3] sm:$0xff]
  %v1468 = vld [vmem:[#allocation3 + $0x8] sm:$0xff]
  %v1469 = vld [vmem:[#allocation3 + $0x10] sm:$0xff]
  %v1470 = vld [vmem:[#allocation3 + $0x18] sm:$0xff]
  %v1471 = vld [vmem:[#allocation3 + $0x20] sm:$0xff]
  %v1472 = vld [vmem:[#allocation3 + $0x28] sm:$0xff]
  %v1473 = vld [vmem:[#allocation3 + $0x30] sm:$0xff]
  %v1474 = vld [vmem:[#allocation3 + $0x38] sm:$0xff]
  %v1475 = vld [vmem:[#allocation3 + $0x40] sm:$0xff]
  %v1476 = vld [vmem:[#allocation3 + $0x48] sm:$0xff]
  %v1477 = vld [vmem:[#allocation3 + $0x50] sm:$0xff]
  %v1478 = vld [vmem:[#allocation3 + $0x58] sm:$0xff]
  %v1479 = vld [vmem:[#allocation3 + $0x60] sm:$0xff]
  %v1480 = vld [vmem:[#allocation3 + $0x68] sm:$0xff]
  %v1481 = vld [vmem:[#allocation3 + $0x70] sm:$0xff]
  %v1482 = vld [vmem:[#allocation3 + $0x78] sm:$0xff]
  %v1484 = vlaneseq
  %v1485 = vshrl.u32 %v1484, 7
  %v1486 = vsub.s32 0, %v1485
  %v1487 = vrot.slane %v1466, %v1486
  %v1490 = vsel %vm38, %v1467, 0
  %v1493 = vsel %vm38, %v1468, 0
  %v1496 = vsel %vm38, %v1469, 0
  %v1499 = vsel %vm38, %v1470, 0
  %v1502 = vsel %vm38, %v1471, 0
  %v1505 = vsel %vm38, %v1472, 0
  %v1508 = vsel %vm38, %v1473, 0
  %v1511 = vsel %vm38, %v1474, 0
  %v1514 = vsel %vm38, %v1475, 0
  %v1517 = vsel %vm38, %v1476, 0
  %v1520 = vsel %vm38, %v1477, 0
  %v1523 = vsel %vm38, %v1478, 0
  %v1526 = vsel %vm38, %v1479, 0
  %v1529 = vsel %vm38, %v1480, 0
  %v1532 = vsel %vm38, %v1481, 0
  %v1535 = vsel %vm38, %v1482, 0
  %1537 = vmatprep.subr.mxu0 0.0
  %1538 = vmatpush1.msra.mxu0 %v1458
  %1539 = vmatprep.subr.mxu0 0.0
  %1540 = vmatpush1.msra.mxu0 %v1459
  %1541 = vmatprep.subr.mxu0 0.0
  %1542 = vmatpush1.msra.mxu0 %v1460
  %1543 = vmatprep.subr.mxu0 0.0
  %1544 = vmatpush1.msra.mxu0 %v1461
  %1545 = vmatprep.subr.mxu0 0.0
  %1546 = vmatpush1.msra.mxu0 0.0
  %1547 = vmatprep.subr.mxu0 0.0
  %1548 = vmatpush1.msra.mxu0 0.0
  %1549 = vmatprep.subr.mxu0 0.0
  %1550 = vmatpush1.msra.mxu0 0.0
  %1551 = vmatprep.subr.mxu0 0.0
  %1552 = vmatpush1.msra.mxu0 0.0
  %1553 = vmatprep.subr.mxu0 0.0
  %1554 = vmatpush1.msra.mxu0 0.0
  %1555 = vmatprep.subr.mxu0 0.0
  %1556 = vmatpush1.msra.mxu0 0.0
  %1557 = vmatprep.subr.mxu0 0.0
  %1558 = vmatpush1.msra.mxu0 0.0
  %1559 = vmatprep.subr.mxu0 0.0
  %1560 = vmatpush1.msra.mxu0 0.0
  %1561 = vmatprep.subr.mxu0 0.0
  %1562 = vmatpush1.msra.mxu0 0.0
  %1563 = vmatprep.subr.mxu0 0.0
  %1564 = vmatpush1.msra.mxu0 0.0
  %1565 = vmatprep.subr.mxu0 0.0
  %1566 = vmatpush1.msra.mxu0 0.0
  %1567 = vmatprep.subr.mxu0 0.0
  %1568 = vmatpush1.msra.mxu0 0.0
  %1569 = vmatprep.subr.mxu0 0.0
  %1570 = vmatpush1.msra.mxu0 0.0
  %1571 = vmatprep.subr.mxu0 0.0
  %1572 = vmatpush1.msra.mxu0 0.0
  %1573 = vmatprep.subr.mxu0 0.0
  %1574 = vmatpush1.msra.mxu0 0.0
  %1575 = vmatprep.subr.mxu0 0.0
  %1576 = vmatpush1.msra.mxu0 0.0
  %1577 = vmatprep.subr.mxu0 0.0
  %1578 = vmatpush1.msra.mxu0 0.0
  %1579 = vmatprep.subr.mxu0 0.0
  %1580 = vmatpush1.msra.mxu0 0.0
  %1581 = vmatprep.subr.mxu0 0.0
  %1582 = vmatpush1.msra.mxu0 0.0
  %1583 = vmatprep.subr.mxu0 0.0
  %1584 = vmatpush1.msra.mxu0 0.0
  %1585 = vmatprep.subr.mxu0 0.0
  %1586 = vmatpush1.msra.mxu0 0.0
  %1587 = vmatprep.subr.mxu0 0.0
  %1588 = vmatpush1.msra.mxu0 0.0
  %1589 = vmatprep.subr.mxu0 0.0
  %1590 = vmatpush1.msra.mxu0 0.0
  %1591 = vmatprep.subr.mxu0 0.0
  %1592 = vmatpush1.msra.mxu0 0.0
  %1593 = vmatprep.subr.mxu0 0.0
  %1594 = vmatpush1.msra.mxu0 0.0
  %1595 = vmatprep.subr.mxu0 0.0
  %1596 = vmatpush1.msra.mxu0 0.0
  %1597 = vmatprep.subr.mxu0 0.0
  %1598 = vmatpush1.msra.mxu0 0.0
  %1599 = vmatprep.subr.mxu0 0.0
  %1600 = vmatpush1.msra.mxu0 0.0
  %1601 = vmatprep.mubr.f32.mxu0 0.0
  %1602 = vmatmul.mubr.f32.gmra.mrb[0].mxu0 %v1490
  %v1603 = vpop.f32.mrb[0].mxu0
  %v1604 = vadd.f32 %v1487, %v1603
  %v1605 = vpop.f32.mrb[0].mxu0
  %1606 = vmatprep.mubr.f32.mxu0 0.0
  %1607 = vmatmul.mubr.f32.gmra.mrb[0].mxu0 %v1493
  %v1608 = vpop.f32.mrb[0].mxu0
  %v1609 = vadd.f32 %v1487, %v1608
  %v1610 = vpop.f32.mrb[0].mxu0
  %1611 = vmatprep.mubr.f32.mxu0 0.0
  %1612 = vmatmul.mubr.f32.gmra.mrb[0].mxu0 %v1496
  %v1613 = vpop.f32.mrb[0].mxu0
  %v1614 = vadd.f32 %v1487, %v1613
  %v1615 = vpop.f32.mrb[0].mxu0
  %1616 = vmatprep.mubr.f32.mxu0 0.0
  %1617 = vmatmul.mubr.f32.gmra.mrb[0].mxu0 %v1499
  %v1618 = vpop.f32.mrb[0].mxu0
  %v1619 = vadd.f32 %v1487, %v1618
  %v1620 = vpop.f32.mrb[0].mxu0
  %1621 = vmatprep.mubr.f32.mxu0 0.0
  %1622 = vmatmul.mubr.f32.gmra.mrb[0].mxu0 %v1502
  %v1623 = vpop.f32.mrb[0].mxu0
  %v1624 = vadd.f32 %v1487, %v1623
  %v1625 = vpop.f32.mrb[0].mxu0
  %1626 = vmatprep.mubr.f32.mxu0 0.0
  %1627 = vmatmul.mubr.f32.gmra.mrb[0].mxu0 %v1505
  %v1628 = vpop.f32.mrb[0].mxu0
  %v1629 = vadd.f32 %v1487, %v1628
  %v1630 = vpop.f32.mrb[0].mxu0
  %1631 = vmatprep.mubr.f32.mxu0 0.0
  %1632 = vmatmul.mubr.f32.gmra.mrb[0].mxu0 %v1508
  %v1633 = vpop.f32.mrb[0].mxu0
  %v1634 = vadd.f32 %v1487, %v1633
  %v1635 = vpop.f32.mrb[0].mxu0
  %1636 = vmatprep.mubr.f32.mxu0 0.0
  %1637 = vmatmul.mubr.f32.gmra.mrb[0].mxu0 %v1511
  %v1638 = vpop.f32.mrb[0].mxu0
  %v1639 = vadd.f32 %v1487, %v1638
  %v1640 = vpop.f32.mrb[0].mxu0
  %1641 = vmatprep.mubr.f32.mxu0 0.0
  %1642 = vmatmul.mubr.f32.gmra.mrb[0].mxu0 %v1514
  %v1643 = vpop.f32.mrb[0].mxu0
  %v1644 = vadd.f32 %v1487, %v1643
  %v1645 = vpop.f32.mrb[0].mxu0
  %1646 = vmatprep.mubr.f32.mxu0 0.0
  %1647 = vmatmul.mubr.f32.gmra.mrb[0].mxu0 %v1517
  %v1648 = vpop.f32.mrb[0].mxu0
  %v1649 = vadd.f32 %v1487, %v1648
  %v1650 = vpop.f32.mrb[0].mxu0
  %1651 = vmatprep.mubr.f32.mxu0 0.0
  %1652 = vmatmul.mubr.f32.gmra.mrb[0].mxu0 %v1520
  %v1653 = vpop.f32.mrb[0].mxu0
  %v1654 = vadd.f32 %v1487, %v1653
  %v1655 = vpop.f32.mrb[0].mxu0
  %1656 = vmatprep.mubr.f32.mxu0 0.0
  %1657 = vmatmul.mubr.f32.gmra.mrb[0].mxu0 %v1523
  %v1658 = vpop.f32.mrb[0].mxu0
  %v1659 = vadd.f32 %v1487, %v1658
  %v1660 = vpop.f32.mrb[0].mxu0
  %1661 = vmatprep.mubr.f32.mxu0 0.0
  %1662 = vmatmul.mubr.f32.gmra.mrb[0].mxu0 %v1526
  %v1663 = vpop.f32.mrb[0].mxu0
  %v1664 = vadd.f32 %v1487, %v1663
  %v1665 = vpop.f32.mrb[0].mxu0
  %1666 = vmatprep.mubr.f32.mxu0 0.0
  %1667 = vmatmul.mubr.f32.gmra.mrb[0].mxu0 %v1529
  %v1668 = vpop.f32.mrb[0].mxu0
  %v1669 = vadd.f32 %v1487, %v1668
  %v1670 = vpop.f32.mrb[0].mxu0
  %1671 = vmatprep.mubr.f32.mxu0 0.0
  %1672 = vmatmul.mubr.f32.gmra.mrb[0].mxu0 %v1532
  %v1673 = vpop.f32.mrb[0].mxu0
  %v1674 = vadd.f32 %v1487, %v1673
  %v1675 = vpop.f32.mrb[0].mxu0
  %1676 = vmatprep.mubr.f32.mxu0 0.0
  %1677 = vmatmul.mubr.f32.gmra.mrb[0].mxu0 %v1535
  %v1678 = vpop.f32.mrb[0].mxu0
  %v1679 = vadd.f32 %v1487, %v1678
  %v1680 = vpop.f32.mrb[0].mxu0
  %1681 = vdwg.mxu0
  %1682 = vst [vmem:[#allocation2] sm:$0xff] %v1604
  %1683 = vst [vmem:[#allocation2 + $0x8] sm:$0xff] %v1609
  %1684 = vst [vmem:[#allocation2 + $0x10] sm:$0xff] %v1614
  %1685 = vst [vmem:[#allocation2 + $0x18] sm:$0xff] %v1619
  %1686 = vst [vmem:[#allocation2 + $0x20] sm:$0xff] %v1624
  %1687 = vst [vmem:[#allocation2 + $0x28] sm:$0xff] %v1629
  %1688 = vst [vmem:[#allocation2 + $0x30] sm:$0xff] %v1634
  %1689 = vst [vmem:[#allocation2 + $0x38] sm:$0xff] %v1639
  %1690 = vst [vmem:[#allocation2 + $0x40] sm:$0xff] %v1644
  %1691 = vst [vmem:[#allocation2 + $0x48] sm:$0xff] %v1649
  %1692 = vst [vmem:[#allocation2 + $0x50] sm:$0xff] %v1654
  %1693 = vst [vmem:[#allocation2 + $0x58] sm:$0xff] %v1659
  %1694 = vst [vmem:[#allocation2 + $0x60] sm:$0xff] %v1664
  %1695 = vst [vmem:[#allocation2 + $0x68] sm:$0xff] %v1669
  %1696 = vst [vmem:[#allocation2 + $0x70] sm:$0xff] %v1674
  %1697 = vst [vmem:[#allocation2 + $0x78] sm:$0xff] %v1679
  %v1698 = vld [vmem:[#allocation2] sm:$0xff]
  %v1699 = vld [vmem:[#allocation2 + $0x8] sm:$0xff]
  %1700 = vmatprep.subr.mxu0 0.0
  %1701 = vmatpush1.msra.mxu0 %v1462
  %1702 = vmatprep.subr.mxu0 0.0
  %1703 = vmatpush1.msra.mxu0 %v1463
  %1704 = vmatprep.subr.mxu0 0.0
  %1705 = vmatpush1.msra.mxu0 %v1464
  %1706 = vmatprep.subr.mxu0 0.0
  %1707 = vmatpush1.msra.mxu0 %v1465
  %1708 = vmatprep.subr.mxu0 0.0
  %1709 = vmatpush1.msra.mxu0 0.0
  %1710 = vmatprep.subr.mxu0 0.0
  %1711 = vmatpush1.msra.mxu0 0.0
  %1712 = vmatprep.subr.mxu0 0.0
  %1713 = vmatpush1.msra.mxu0 0.0
  %1714 = vmatprep.subr.mxu0 0.0
  %1715 = vmatpush1.msra.mxu0 0.0
  %1716 = vmatprep.subr.mxu0 0.0
  %1717 = vmatpush1.msra.mxu0 0.0
  %1718 = vmatprep.subr.mxu0 0.0
  %1719 = vmatpush1.msra.mxu0 0.0
  %1720 = vmatprep.subr.mxu0 0.0
  %1721 = vmatpush1.msra.mxu0 0.0
  %1722 = vmatprep.subr.mxu0 0.0
  %1723 = vmatpush1.msra.mxu0 0.0
  %1724 = vmatprep.subr.mxu0 0.0
  %1725 = vmatpush1.msra.mxu0 0.0
  %1726 = vmatprep.subr.mxu0 0.0
  %1727 = vmatpush1.msra.mxu0 0.0
  %1728 = vmatprep.subr.mxu0 0.0
  %1729 = vmatpush1.msra.mxu0 0.0
  %1730 = vmatprep.subr.mxu0 0.0
  %1731 = vmatpush1.msra.mxu0 0.0
  %1732 = vmatprep.subr.mxu0 0.0
  %1733 = vmatpush1.msra.mxu0 0.0
  %1734 = vmatprep.subr.mxu0 0.0
  %1735 = vmatpush1.msra.mxu0 0.0
  %1736 = vmatprep.subr.mxu0 0.0
  %1737 = vmatpush1.msra.mxu0 0.0
  %1738 = vmatprep.subr.mxu0 0.0
  %1739 = vmatpush1.msra.mxu0 0.0
  %1740 = vmatprep.subr.mxu0 0.0
  %1741 = vmatpush1.msra.mxu0 0.0
  %1742 = vmatprep.subr.mxu0 0.0
  %1743 = vmatpush1.msra.mxu0 0.0
  %1744 = vmatprep.subr.mxu0 0.0
  %1745 = vmatpush1.msra.mxu0 0.0
  %1746 = vmatprep.subr.mxu0 0.0
  %1747 = vmatpush1.msra.mxu0 0.0
  %1748 = vmatprep.subr.mxu0 0.0
  %1749 = vmatpush1.msra.mxu0 0.0
  %1750 = vmatprep.subr.mxu0 0.0
  %1751 = vmatpush1.msra.mxu0 0.0
  %1752 = vmatprep.subr.mxu0 0.0
  %1753 = vmatpush1.msra.mxu0 0.0
  %1754 = vmatprep.subr.mxu0 0.0
  %1755 = vmatpush1.msra.mxu0 0.0
  %1756 = vmatprep.subr.mxu0 0.0
  %1757 = vmatpush1.msra.mxu0 0.0
  %1758 = vmatprep.subr.mxu0 0.0
  %1759 = vmatpush1.msra.mxu0 0.0
  %1760 = vmatprep.subr.mxu0 0.0
  %1761 = vmatpush1.msra.mxu0 0.0
  %1762 = vmatprep.subr.mxu0 0.0
  %1763 = vmatpush1.msra.mxu0 0.0
  %1764 = vmatprep.mubr.f32.mxu0 0.0
  %1765 = vmatmul.mubr.f32.gmra.mrb[0].mxu0 %v316
  %v1766 = vpop.f32.mrb[0].mxu0
  %v1767 = vadd.f32 0.0, %v1766
  %v1768 = vpop.f32.mrb[0].mxu0
  %1769 = vmatprep.mubr.f32.mxu0 0.0
  %1770 = vmatmul.mubr.f32.gmra.mrb[0].mxu0 %v316
  %v1771 = vpop.f32.mrb[0].mxu0
  %v1772 = vadd.f32 0.0, %v1771
  %v1773 = vpop.f32.mrb[0].mxu0
  %1774 = vdwg.mxu0
  %v1775 = vadd.f32 %v1698, %v1767
  %v1776 = vadd.f32 %v1699, %v1772
  %v1777 = vxor.u32 %v1775, 2147483648
  %v1778 = vxor.u32 %v1776, 2147483648
  %v1779 = vmul.f32 %v1777, 1.442695
  %v1780 = vpow.pop %v1779
  %v1781 = vmul.f32 %v1778, 1.442695
  %v1782 = vpow.pop %v1781
  %v1783 = vadd.f32 %v1780, 1.0
  %v1784 = vadd.f32 %v1782, 1.0
  %v1785 = vrcp.pop %v1783
  %v1786 = vmul.f32 1.0, %v1785
  %v1787 = vrcp.pop %v1784
  %v1788 = vmul.f32 1.0, %v1787
  %v1789 = vtanh.pop %v1775
  %v1790 = vtanh.pop %v1776
  %v1791 = vmul.f32 %v1786, 0.0
  %v1792 = vmul.f32 %v1788, 0.0
  %1795 = vrot.lane.b32.xlu0 %v1789, 32
  %v1796 = vpop.permute.xlu0 %1795
  %1797 = vrot.lane.b32.xlu0 %v1790, 32
  %v1798 = vpop.permute.xlu0 %1797
  %v1801 = vmul.f32 %v1786, %v1796
  %v1802 = vmul.f32 %v1788, %v1798
  %1805 = vrot.lane.b32.xlu0 %v1801, 32
  %v1806 = vpop.permute.xlu0 %1805
  %1807 = vrot.lane.b32.xlu0 %v1802, 32
  %v1808 = vpop.permute.xlu0 %1807
  %v1811 = vadd.f32 %v1791, %v1806
  %v1812 = vadd.f32 %v1792, %v1808
  %v1813 = vtanh.pop %v1811
  %v1814 = vtanh.pop %v1812
  %1817 = vrot.lane.b32.xlu0 %v1813, 32
  %v1818 = vpop.permute.xlu0 %1817
  %1819 = vrot.lane.b32.xlu0 %v1814, 32
  %v1820 = vpop.permute.xlu0 %1819
  %v1823 = vmul.f32 %v1786, %v1818
  %v1824 = vmul.f32 %v1788, %v1820
  %1826 = vrot.lane.b32.xlu0 %v1823, 64
  %v1827 = vpop.permute.xlu0 %1826
  %1829 = vst.msk [vmem:[#allocation4] sm:$0x3] %vm447, %v1827
  %1830 = vst.msk [vmem:[#allocation4 + $0x78] sm:$0x3] %vm447, %v1827
  %1832 = vrot.lane.b32.xlu0 %v1824, 64
  %v1833 = vpop.permute.xlu0 %1832
  %1835 = vst.msk [vmem:[#allocation4 + $0x70] sm:$0x3] %vm454, %v1833
  %1836 = vst.msk [vmem:[#allocation4 + $0x8] sm:$0x3] %vm454, %v1833
  %v1837 = vld [vmem:[#allocation2 + $0x10] sm:$0xff]
  %v1838 = vld [vmem:[#allocation2 + $0x18] sm:$0xff]
  %v1839 = vsel %vm38, %v1827, 0
  %v1841 = vsel %vm38, %v1833, 0
  %1843 = vmatprep.subr.mxu0 0.0
  %1844 = vmatpush1.msra.mxu0 %v1462
  %1845 = vmatprep.subr.mxu0 0.0
  %1846 = vmatpush1.msra.mxu0 %v1463
  %1847 = vmatprep.subr.mxu0 0.0
  %1848 = vmatpush1.msra.mxu0 %v1464
  %1849 = vmatprep.subr.mxu0 0.0
  %1850 = vmatpush1.msra.mxu0 %v1465
  %1851 = vmatprep.subr.mxu0 0.0
  %1852 = vmatpush1.msra.mxu0 0.0
  %1853 = vmatprep.subr.mxu0 0.0
  %1854 = vmatpush1.msra.mxu0 0.0
  %1855 = vmatprep.subr.mxu0 0.0
  %1856 = vmatpush1.msra.mxu0 0.0
  %1857 = vmatprep.subr.mxu0 0.0
  %1858 = vmatpush1.msra.mxu0 0.0
  %1859 = vmatprep.subr.mxu0 0.0
  %1860 = vmatpush1.msra.mxu0 0.0
  %1861 = vmatprep.subr.mxu0 0.0
  %1862 = vmatpush1.msra.mxu0 0.0
  %1863 = vmatprep.subr.mxu0 0.0
  %1864 = vmatpush1.msra.mxu0 0.0
  %1865 = vmatprep.subr.mxu0 0.0
  %1866 = vmatpush1.msra.mxu0 0.0
  %1867 = vmatprep.subr.mxu0 0.0
  %1868 = vmatpush1.msra.mxu0 0.0
  %1869 = vmatprep.subr.mxu0 0.0
  %1870 = vmatpush1.msra.mxu0 0.0
  %1871 = vmatprep.subr.mxu0 0.0
  %1872 = vmatpush1.msra.mxu0 0.0
  %1873 = vmatprep.subr.mxu0 0.0
  %1874 = vmatpush1.msra.mxu0 0.0
  %1875 = vmatprep.subr.mxu0 0.0
  %1876 = vmatpush1.msra.mxu0 0.0
  %1877 = vmatprep.subr.mxu0 0.0
  %1878 = vmatpush1.msra.mxu0 0.0
  %1879 = vmatprep.subr.mxu0 0.0
  %1880 = vmatpush1.msra.mxu0 0.0
  %1881 = vmatprep.subr.mxu0 0.0
  %1882 = vmatpush1.msra.mxu0 0.0
  %1883 = vmatprep.subr.mxu0 0.0
  %1884 = vmatpush1.msra.mxu0 0.0
  %1885 = vmatprep.subr.mxu0 0.0
  %1886 = vmatpush1.msra.mxu0 0.0
  %1887 = vmatprep.subr.mxu0 0.0
  %1888 = vmatpush1.msra.mxu0 0.0
  %1889 = vmatprep.subr.mxu0 0.0
  %1890 = vmatpush1.msra.mxu0 0.0
  %1891 = vmatprep.subr.mxu0 0.0
  %1892 = vmatpush1.msra.mxu0 0.0
  %1893 = vmatprep.subr.mxu0 0.0
  %1894 = vmatpush1.msra.mxu0 0.0
  %1895 = vmatprep.subr.mxu0 0.0
  %1896 = vmatpush1.msra.mxu0 0.0
  %1897 = vmatprep.subr.mxu0 0.0
  %1898 = vmatpush1.msra.mxu0 0.0
  %1899 = vmatprep.subr.mxu0 0.0
  %1900 = vmatpush1.msra.mxu0 0.0
  %1901 = vmatprep.subr.mxu0 0.0
  %1902 = vmatpush1.msra.mxu0 0.0
  %1903 = vmatprep.subr.mxu0 0.0
  %1904 = vmatpush1.msra.mxu0 0.0
  %1905 = vmatprep.subr.mxu0 0.0
  %1906 = vmatpush1.msra.mxu0 0.0
  %1907 = vmatprep.mubr.f32.mxu0 0.0
  %1908 = vmatmul.mubr.f32.gmra.mrb[0].mxu0 %v1839
  %v1909 = vpop.f32.mrb[0].mxu0
  %v1910 = vadd.f32 0.0, %v1909
  %v1911 = vpop.f32.mrb[0].mxu0
  %1912 = vmatprep.mubr.f32.mxu0 0.0
  %1913 = vmatmul.mubr.f32.gmra.mrb[0].mxu0 %v1841
  %v1914 = vpop.f32.mrb[0].mxu0
  %v1915 = vadd.f32 0.0, %v1914
  %v1916 = vpop.f32.mrb[0].mxu0
  %1917 = vdwg.mxu0
  %v1918 = vadd.f32 %v1837, %v1910
  %v1919 = vadd.f32 %v1838, %v1915
  %v1920 = vxor.u32 %v1918, 2147483648
  %v1921 = vxor.u32 %v1919, 2147483648
  %v1922 = vmul.f32 %v1920, 1.442695
  %v1923 = vpow.pop %v1922
  %v1924 = vmul.f32 %v1921, 1.442695
  %v1925 = vpow.pop %v1924
  %v1926 = vadd.f32 %v1923, 1.0
  %v1927 = vadd.f32 %v1925, 1.0
  %v1928 = vrcp.pop %v1926
  %v1929 = vmul.f32 1.0, %v1928
  %v1930 = vrcp.pop %v1927
  %v1931 = vmul.f32 1.0, %v1930
  %v1932 = vtanh.pop %v1918
  %v1933 = vtanh.pop %v1919
  %v1934 = vmul.f32 %v1929, %v1811
  %v1935 = vmul.f32 %v1931, %v1812
  %1938 = vrot.lane.b32.xlu0 %v1932, 32
  %v1939 = vpop.permute.xlu0 %1938
  %1940 = vrot.lane.b32.xlu0 %v1933, 32
  %v1941 = vpop.permute.xlu0 %1940
  %v1944 = vmul.f32 %v1929, %v1939
  %v1945 = vmul.f32 %v1931, %v1941
  %1948 = vrot.lane.b32.xlu0 %v1944, 32
  %v1949 = vpop.permute.xlu0 %1948
  %1950 = vrot.lane.b32.xlu0 %v1945, 32
  %v1951 = vpop.permute.xlu0 %1950
  %v1954 = vadd.f32 %v1934, %v1949
  %v1955 = vadd.f32 %v1935, %v1951
  %v1956 = vtanh.pop %v1954
  %v1957 = vtanh.pop %v1955
  %1960 = vrot.lane.b32.xlu0 %v1956, 32
  %v1961 = vpop.permute.xlu0 %1960
  %1962 = vrot.lane.b32.xlu0 %v1957, 32
  %v1963 = vpop.permute.xlu0 %1962
  %v1966 = vmul.f32 %v1929, %v1961
  %v1967 = vmul.f32 %v1931, %v1963
  %1969 = vrot.lane.b32.xlu0 %v1966, 64
  %v1970 = vpop.permute.xlu0 %1969
  %1972 = vst.msk [vmem:[#allocation4 + $0x10] sm:$0x3] %vm447, %v1970
  %1973 = vst.msk [vmem:[#allocation4 + $0x68] sm:$0x3] %vm447, %v1970
  %1975 = vrot.lane.b32.xlu0 %v1967, 64
  %v1976 = vpop.permute.xlu0 %1975
  %1978 = vst.msk [vmem:[#allocation4 + $0x60] sm:$0x3] %vm454, %v1976
  %1979 = vst.msk [vmem:[#allocation4 + $0x18] sm:$0x3] %vm454, %v1976
  %v1980 = vld [vmem:[#allocation2 + $0x20] sm:$0xff]
  %v1981 = vld [vmem:[#allocation2 + $0x28] sm:$0xff]
  %v1982 = vsel %vm38, %v1970, 0
  %v1984 = vsel %vm38, %v1976, 0
  %1986 = vmatprep.subr.mxu0 0.0
  %1987 = vmatpush1.msra.mxu0 %v1462
  %1988 = vmatprep.subr.mxu0 0.0
  %1989 = vmatpush1.msra.mxu0 %v1463
  %1990 = vmatprep.subr.mxu0 0.0
  %1991 = vmatpush1.msra.mxu0 %v1464
  %1992 = vmatprep.subr.mxu0 0.0
  %1993 = vmatpush1.msra.mxu0 %v1465
  %1994 = vmatprep.subr.mxu0 0.0
  %1995 = vmatpush1.msra.mxu0 0.0
  %1996 = vmatprep.subr.mxu0 0.0
  %1997 = vmatpush1.msra.mxu0 0.0
  %1998 = vmatprep.subr.mxu0 0.0
  %1999 = vmatpush1.msra.mxu0 0.0
  %2000 = vmatprep.subr.mxu0 0.0
  %2001 = vmatpush1.msra.mxu0 0.0
  %2002 = vmatprep.subr.mxu0 0.0
  %2003 = vmatpush1.msra.mxu0 0.0
  %2004 = vmatprep.subr.mxu0 0.0
  %2005 = vmatpush1.msra.mxu0 0.0
  %2006 = vmatprep.subr.mxu0 0.0
  %2007 = vmatpush1.msra.mxu0 0.0
  %2008 = vmatprep.subr.mxu0 0.0
  %2009 = vmatpush1.msra.mxu0 0.0
  %2010 = vmatprep.subr.mxu0 0.0
  %2011 = vmatpush1.msra.mxu0 0.0
  %2012 = vmatprep.subr.mxu0 0.0
  %2013 = vmatpush1.msra.mxu0 0.0
  %2014 = vmatprep.subr.mxu0 0.0
  %2015 = vmatpush1.msra.mxu0 0.0
  %2016 = vmatprep.subr.mxu0 0.0
  %2017 = vmatpush1.msra.mxu0 0.0
  %2018 = vmatprep.subr.mxu0 0.0
  %2019 = vmatpush1.msra.mxu0 0.0
  %2020 = vmatprep.subr.mxu0 0.0
  %2021 = vmatpush1.msra.mxu0 0.0
  %2022 = vmatprep.subr.mxu0 0.0
  %2023 = vmatpush1.msra.mxu0 0.0
  %2024 = vmatprep.subr.mxu0 0.0
  %2025 = vmatpush1.msra.mxu0 0.0
  %2026 = vmatprep.subr.mxu0 0.0
  %2027 = vmatpush1.msra.mxu0 0.0
  %2028 = vmatprep.subr.mxu0 0.0
  %2029 = vmatpush1.msra.mxu0 0.0
  %2030 = vmatprep.subr.mxu0 0.0
  %2031 = vmatpush1.msra.mxu0 0.0
  %2032 = vmatprep.subr.mxu0 0.0
  %2033 = vmatpush1.msra.mxu0 0.0
  %2034 = vmatprep.subr.mxu0 0.0
  %2035 = vmatpush1.msra.mxu0 0.0
  %2036 = vmatprep.subr.mxu0 0.0
  %2037 = vmatpush1.msra.mxu0 0.0
  %2038 = vmatprep.subr.mxu0 0.0
  %2039 = vmatpush1.msra.mxu0 0.0
  %2040 = vmatprep.subr.mxu0 0.0
  %2041 = vmatpush1.msra.mxu0 0.0
  %2042 = vmatprep.subr.mxu0 0.0
  %2043 = vmatpush1.msra.mxu0 0.0
  %2044 = vmatprep.subr.mxu0 0.0
  %2045 = vmatpush1.msra.mxu0 0.0
  %2046 = vmatprep.subr.mxu0 0.0
  %2047 = vmatpush1.msra.mxu0 0.0
  %2048 = vmatprep.subr.mxu0 0.0
  %2049 = vmatpush1.msra.mxu0 0.0
  %2050 = vmatprep.mubr.f32.mxu0 0.0
  %2051 = vmatmul.mubr.f32.gmra.mrb[0].mxu0 %v1982
  %v2052 = vpop.f32.mrb[0].mxu0
  %v2053 = vadd.f32 0.0, %v2052
  %v2054 = vpop.f32.mrb[0].mxu0
  %2055 = vmatprep.mubr.f32.mxu0 0.0
  %2056 = vmatmul.mubr.f32.gmra.mrb[0].mxu0 %v1984
  %v2057 = vpop.f32.mrb[0].mxu0
  %v2058 = vadd.f32 0.0, %v2057
  %v2059 = vpop.f32.mrb[0].mxu0
  %2060 = vdwg.mxu0
  %v2061 = vadd.f32 %v1980, %v2053
  %v2062 = vadd.f32 %v1981, %v2058
  %v2063 = vxor.u32 %v2061, 2147483648
  %v2064 = vxor.u32 %v2062, 2147483648
  %v2065 = vmul.f32 %v2063, 1.442695
  %v2066 = vpow.pop %v2065
  %v2067 = vmul.f32 %v2064, 1.442695
  %v2068 = vpow.pop %v2067
  %v2069 = vadd.f32 %v2066, 1.0
  %v2070 = vadd.f32 %v2068, 1.0
  %v2071 = vrcp.pop %v2069
  %v2072 = vmul.f32 1.0, %v2071
  %v2073 = vrcp.pop %v2070
  %v2074 = vmul.f32 1.0, %v2073
  %v2075 = vtanh.pop %v2061
  %v2076 = vtanh.pop %v2062
  %v2077 = vmul.f32 %v2072, %v1954
  %v2078 = vmul.f32 %v2074, %v1955
  %2081 = vrot.lane.b32.xlu0 %v2075, 32
  %v2082 = vpop.permute.xlu0 %2081
  %2083 = vrot.lane.b32.xlu0 %v2076, 32
  %v2084 = vpop.permute.xlu0 %2083
  %v2087 = vmul.f32 %v2072, %v2082
  %v2088 = vmul.f32 %v2074, %v2084
  %2091 = vrot.lane.b32.xlu0 %v2087, 32
  %v2092 = vpop.permute.xlu0 %2091
  %2093 = vrot.lane.b32.xlu0 %v2088, 32
  %v2094 = vpop.permute.xlu0 %2093
  %v2097 = vadd.f32 %v2077, %v2092
  %v2098 = vadd.f32 %v2078, %v2094
  %v2099 = vtanh.pop %v2097
  %v2100 = vtanh.pop %v2098
  %2103 = vrot.lane.b32.xlu0 %v2099, 32
  %v2104 = vpop.permute.xlu0 %2103
  %2105 = vrot.lane.b32.xlu0 %v2100, 32
  %v2106 = vpop.permute.xlu0 %2105
  %v2109 = vmul.f32 %v2072, %v2104
  %v2110 = vmul.f32 %v2074, %v2106
  %2112 = vrot.lane.b32.xlu0 %v2109, 64
  %v2113 = vpop.permute.xlu0 %2112
  %2115 = vst.msk [vmem:[#allocation4 + $0x20] sm:$0x3] %vm447, %v2113
  %2116 = vst.msk [vmem:[#allocation4 + $0x58] sm:$0x3] %vm447, %v2113
  %2118 = vrot.lane.b32.xlu0 %v2110, 64
  %v2119 = vpop.permute.xlu0 %2118
  %2121 = vst.msk [vmem:[#allocation4 + $0x50] sm:$0x3] %vm454, %v2119
  %2122 = vst.msk [vmem:[#allocation4 + $0x28] sm:$0x3] %vm454, %v2119
  %v2123 = vld [vmem:[#allocation2 + $0x30] sm:$0xff]
  %v2124 = vld [vmem:[#allocation2 + $0x38] sm:$0xff]
  %v2125 = vsel %vm38, %v2113, 0
  %v2127 = vsel %vm38, %v2119, 0
  %2129 = vmatprep.subr.mxu0 0.0
  %2130 = vmatpush1.msra.mxu0 %v1462
  %2131 = vmatprep.subr.mxu0 0.0
  %2132 = vmatpush1.msra.mxu0 %v1463
  %2133 = vmatprep.subr.mxu0 0.0
  %2134 = vmatpush1.msra.mxu0 %v1464
  %2135 = vmatprep.subr.mxu0 0.0
  %2136 = vmatpush1.msra.mxu0 %v1465
  %2137 = vmatprep.subr.mxu0 0.0
  %2138 = vmatpush1.msra.mxu0 0.0
  %2139 = vmatprep.subr.mxu0 0.0
  %2140 = vmatpush1.msra.mxu0 0.0
  %2141 = vmatprep.subr.mxu0 0.0
  %2142 = vmatpush1.msra.mxu0 0.0
  %2143 = vmatprep.subr.mxu0 0.0
  %2144 = vmatpush1.msra.mxu0 0.0
  %2145 = vmatprep.subr.mxu0 0.0
  %2146 = vmatpush1.msra.mxu0 0.0
  %2147 = vmatprep.subr.mxu0 0.0
  %2148 = vmatpush1.msra.mxu0 0.0
  %2149 = vmatprep.subr.mxu0 0.0
  %2150 = vmatpush1.msra.mxu0 0.0
  %2151 = vmatprep.subr.mxu0 0.0
  %2152 = vmatpush1.msra.mxu0 0.0
  %2153 = vmatprep.subr.mxu0 0.0
  %2154 = vmatpush1.msra.mxu0 0.0
  %2155 = vmatprep.subr.mxu0 0.0
  %2156 = vmatpush1.msra.mxu0 0.0
  %2157 = vmatprep.subr.mxu0 0.0
  %2158 = vmatpush1.msra.mxu0 0.0
  %2159 = vmatprep.subr.mxu0 0.0
  %2160 = vmatpush1.msra.mxu0 0.0
  %2161 = vmatprep.subr.mxu0 0.0
  %2162 = vmatpush1.msra.mxu0 0.0
  %2163 = vmatprep.subr.mxu0 0.0
  %2164 = vmatpush1.msra.mxu0 0.0
  %2165 = vmatprep.subr.mxu0 0.0
  %2166 = vmatpush1.msra.mxu0 0.0
  %2167 = vmatprep.subr.mxu0 0.0
  %2168 = vmatpush1.msra.mxu0 0.0
  %2169 = vmatprep.subr.mxu0 0.0
  %2170 = vmatpush1.msra.mxu0 0.0
  %2171 = vmatprep.subr.mxu0 0.0
  %2172 = vmatpush1.msra.mxu0 0.0
  %2173 = vmatprep.subr.mxu0 0.0
  %2174 = vmatpush1.msra.mxu0 0.0
  %2175 = vmatprep.subr.mxu0 0.0
  %2176 = vmatpush1.msra.mxu0 0.0
  %2177 = vmatprep.subr.mxu0 0.0
  %2178 = vmatpush1.msra.mxu0 0.0
  %2179 = vmatprep.subr.mxu0 0.0
  %2180 = vmatpush1.msra.mxu0 0.0
  %2181 = vmatprep.subr.mxu0 0.0
  %2182 = vmatpush1.msra.mxu0 0.0
  %2183 = vmatprep.subr.mxu0 0.0
  %2184 = vmatpush1.msra.mxu0 0.0
  %2185 = vmatprep.subr.mxu0 0.0
  %2186 = vmatpush1.msra.mxu0 0.0
  %2187 = vmatprep.subr.mxu0 0.0
  %2188 = vmatpush1.msra.mxu0 0.0
  %2189 = vmatprep.subr.mxu0 0.0
  %2190 = vmatpush1.msra.mxu0 0.0
  %2191 = vmatprep.subr.mxu0 0.0
  %2192 = vmatpush1.msra.mxu0 0.0
  %2193 = vmatprep.mubr.f32.mxu0 0.0
  %2194 = vmatmul.mubr.f32.gmra.mrb[0].mxu0 %v2125
  %v2195 = vpop.f32.mrb[0].mxu0
  %v2196 = vadd.f32 0.0, %v2195
  %v2197 = vpop.f32.mrb[0].mxu0
  %2198 = vmatprep.mubr.f32.mxu0 0.0
  %2199 = vmatmul.mubr.f32.gmra.mrb[0].mxu0 %v2127
  %v2200 = vpop.f32.mrb[0].mxu0
  %v2201 = vadd.f32 0.0, %v2200
  %v2202 = vpop.f32.mrb[0].mxu0
  %2203 = vdwg.mxu0
  %v2204 = vadd.f32 %v2123, %v2196
  %v2205 = vadd.f32 %v2124, %v2201
  %v2206 = vxor.u32 %v2204, 2147483648
  %v2207 = vxor.u32 %v2205, 2147483648
  %v2208 = vmul.f32 %v2206, 1.442695
  %v2209 = vpow.pop %v2208
  %v2210 = vmul.f32 %v2207, 1.442695
  %v2211 = vpow.pop %v2210
  %v2212 = vadd.f32 %v2209, 1.0
  %v2213 = vadd.f32 %v2211, 1.0
  %v2214 = vrcp.pop %v2212
  %v2215 = vmul.f32 1.0, %v2214
  %v2216 = vrcp.pop %v2213
  %v2217 = vmul.f32 1.0, %v2216
  %v2218 = vtanh.pop %v2204
  %v2219 = vtanh.pop %v2205
  %v2220 = vmul.f32 %v2215, %v2097
  %v2221 = vmul.f32 %v2217, %v2098
  %2224 = vrot.lane.b32.xlu0 %v2218, 32
  %v2225 = vpop.permute.xlu0 %2224
  %2226 = vrot.lane.b32.xlu0 %v2219, 32
  %v2227 = vpop.permute.xlu0 %2226
  %v2230 = vmul.f32 %v2215, %v2225
  %v2231 = vmul.f32 %v2217, %v2227
  %2234 = vrot.lane.b32.xlu0 %v2230, 32
  %v2235 = vpop.permute.xlu0 %2234
  %2236 = vrot.lane.b32.xlu0 %v2231, 32
  %v2237 = vpop.permute.xlu0 %2236
  %v2240 = vadd.f32 %v2220, %v2235
  %v2241 = vadd.f32 %v2221, %v2237
  %v2242 = vtanh.pop %v2240
  %v2243 = vtanh.pop %v2241
  %2246 = vrot.lane.b32.xlu0 %v2242, 32
  %v2247 = vpop.permute.xlu0 %2246
  %2248 = vrot.lane.b32.xlu0 %v2243, 32
  %v2249 = vpop.permute.xlu0 %2248
  %v2252 = vmul.f32 %v2215, %v2247
  %v2253 = vmul.f32 %v2217, %v2249
  %2255 = vrot.lane.b32.xlu0 %v2252, 64
  %v2256 = vpop.permute.xlu0 %2255
  %2258 = vst.msk [vmem:[#allocation4 + $0x30] sm:$0x3] %vm447, %v2256
  %2259 = vst.msk [vmem:[#allocation4 + $0x48] sm:$0x3] %vm447, %v2256
  %2261 = vrot.lane.b32.xlu0 %v2253, 64
  %v2262 = vpop.permute.xlu0 %2261
  %2264 = vst.msk [vmem:[#allocation4 + $0x40] sm:$0x3] %vm454, %v2262
  %2265 = vst.msk [vmem:[#allocation4 + $0x38] sm:$0x3] %vm454, %v2262
  %v2266 = vld [vmem:[#allocation2 + $0x40] sm:$0xff]
  %v2267 = vld [vmem:[#allocation2 + $0x48] sm:$0xff]
  %v2268 = vsel %vm38, %v2256, 0
  %v2270 = vsel %vm38, %v2262, 0
  %2272 = vmatprep.subr.mxu0 0.0
  %2273 = vmatpush1.msra.mxu0 %v1462
  %2274 = vmatprep.subr.mxu0 0.0
  %2275 = vmatpush1.msra.mxu0 %v1463
  %2276 = vmatprep.subr.mxu0 0.0
  %2277 = vmatpush1.msra.mxu0 %v1464
  %2278 = vmatprep.subr.mxu0 0.0
  %2279 = vmatpush1.msra.mxu0 %v1465
  %2280 = vmatprep.subr.mxu0 0.0
  %2281 = vmatpush1.msra.mxu0 0.0
  %2282 = vmatprep.subr.mxu0 0.0
  %2283 = vmatpush1.msra.mxu0 0.0
  %2284 = vmatprep.subr.mxu0 0.0
  %2285 = vmatpush1.msra.mxu0 0.0
  %2286 = vmatprep.subr.mxu0 0.0
  %2287 = vmatpush1.msra.mxu0 0.0
  %2288 = vmatprep.subr.mxu0 0.0
  %2289 = vmatpush1.msra.mxu0 0.0
  %2290 = vmatprep.subr.mxu0 0.0
  %2291 = vmatpush1.msra.mxu0 0.0
  %2292 = vmatprep.subr.mxu0 0.0
  %2293 = vmatpush1.msra.mxu0 0.0
  %2294 = vmatprep.subr.mxu0 0.0
  %2295 = vmatpush1.msra.mxu0 0.0
  %2296 = vmatprep.subr.mxu0 0.0
  %2297 = vmatpush1.msra.mxu0 0.0
  %2298 = vmatprep.subr.mxu0 0.0
  %2299 = vmatpush1.msra.mxu0 0.0
  %2300 = vmatprep.subr.mxu0 0.0
  %2301 = vmatpush1.msra.mxu0 0.0
  %2302 = vmatprep.subr.mxu0 0.0
  %2303 = vmatpush1.msra.mxu0 0.0
  %2304 = vmatprep.subr.mxu0 0.0
  %2305 = vmatpush1.msra.mxu0 0.0
  %2306 = vmatprep.subr.mxu0 0.0
  %2307 = vmatpush1.msra.mxu0 0.0
  %2308 = vmatprep.subr.mxu0 0.0
  %2309 = vmatpush1.msra.mxu0 0.0
  %2310 = vmatprep.subr.mxu0 0.0
  %2311 = vmatpush1.msra.mxu0 0.0
  %2312 = vmatprep.subr.mxu0 0.0
  %2313 = vmatpush1.msra.mxu0 0.0
  %2314 = vmatprep.subr.mxu0 0.0
  %2315 = vmatpush1.msra.mxu0 0.0
  %2316 = vmatprep.subr.mxu0 0.0
  %2317 = vmatpush1.msra.mxu0 0.0
  %2318 = vmatprep.subr.mxu0 0.0
  %2319 = vmatpush1.msra.mxu0 0.0
  %2320 = vmatprep.subr.mxu0 0.0
  %2321 = vmatpush1.msra.mxu0 0.0
  %2322 = vmatprep.subr.mxu0 0.0
  %2323 = vmatpush1.msra.mxu0 0.0
  %2324 = vmatprep.subr.mxu0 0.0
  %2325 = vmatpush1.msra.mxu0 0.0
  %2326 = vmatprep.subr.mxu0 0.0
  %2327 = vmatpush1.msra.mxu0 0.0
  %2328 = vmatprep.subr.mxu0 0.0
  %2329 = vmatpush1.msra.mxu0 0.0
  %2330 = vmatprep.subr.mxu0 0.0
  %2331 = vmatpush1.msra.mxu0 0.0
  %2332 = vmatprep.subr.mxu0 0.0
  %2333 = vmatpush1.msra.mxu0 0.0
  %2334 = vmatprep.subr.mxu0 0.0
  %2335 = vmatpush1.msra.mxu0 0.0
  %2336 = vmatprep.mubr.f32.mxu0 0.0
  %2337 = vmatmul.mubr.f32.gmra.mrb[0].mxu0 %v2268
  %v2338 = vpop.f32.mrb[0].mxu0
  %v2339 = vadd.f32 0.0, %v2338
  %v2340 = vpop.f32.mrb[0].mxu0
  %2341 = vmatprep.mubr.f32.mxu0 0.0
  %2342 = vmatmul.mubr.f32.gmra.mrb[0].mxu0 %v2270
  %v2343 = vpop.f32.mrb[0].mxu0
  %v2344 = vadd.f32 0.0, %v2343
  %v2345 = vpop.f32.mrb[0].mxu0
  %2346 = vdwg.mxu0
  %v2347 = vadd.f32 %v2266, %v2339
  %v2348 = vadd.f32 %v2267, %v2344
  %v2349 = vxor.u32 %v2347, 2147483648
  %v2350 = vxor.u32 %v2348, 2147483648
  %v2351 = vmul.f32 %v2349, 1.442695
  %v2352 = vpow.pop %v2351
  %v2353 = vmul.f32 %v2350, 1.442695
  %v2354 = vpow.pop %v2353
  %v2355 = vadd.f32 %v2352, 1.0
  %v2356 = vadd.f32 %v2354, 1.0
  %v2357 = vrcp.pop %v2355
  %v2358 = vmul.f32 1.0, %v2357
  %v2359 = vrcp.pop %v2356
  %v2360 = vmul.f32 1.0, %v2359
  %v2361 = vtanh.pop %v2347
  %v2362 = vtanh.pop %v2348
  %v2363 = vmul.f32 %v2358, %v2240
  %v2364 = vmul.f32 %v2360, %v2241
  %2367 = vrot.lane.b32.xlu0 %v2361, 32
  %v2368 = vpop.permute.xlu0 %2367
  %2369 = vrot.lane.b32.xlu0 %v2362, 32
  %v2370 = vpop.permute.xlu0 %2369
  %v2373 = vmul.f32 %v2358, %v2368
  %v2374 = vmul.f32 %v2360, %v2370
  %2377 = vrot.lane.b32.xlu0 %v2373, 32
  %v2378 = vpop.permute.xlu0 %2377
  %2379 = vrot.lane.b32.xlu0 %v2374, 32
  %v2380 = vpop.permute.xlu0 %2379
  %v2383 = vadd.f32 %v2363, %v2378
  %v2384 = vadd.f32 %v2364, %v2380
  %v2385 = vtanh.pop %v2383
  %v2386 = vtanh.pop %v2384
  %2389 = vrot.lane.b32.xlu0 %v2385, 32
  %v2390 = vpop.permute.xlu0 %2389
  %2391 = vrot.lane.b32.xlu0 %v2386, 32
  %v2392 = vpop.permute.xlu0 %2391
  %v2395 = vmul.f32 %v2358, %v2390
  %v2396 = vmul.f32 %v2360, %v2392
  %2398 = vrot.lane.b32.xlu0 %v2395, 64
  %v2399 = vpop.permute.xlu0 %2398
  %2401 = vst.msk [vmem:[#allocation4 + $0x40] sm:$0x3] %vm447, %v2399
  %2402 = vst.msk [vmem:[#allocation4 + $0x38] sm:$0x3] %vm447, %v2399
  %2404 = vrot.lane.b32.xlu0 %v2396, 64
  %v2405 = vpop.permute.xlu0 %2404
  %2407 = vst.msk [vmem:[#allocation4 + $0x30] sm:$0x3] %vm454, %v2405
  %2408 = vst.msk [vmem:[#allocation4 + $0x48] sm:$0x3] %vm454, %v2405
  %v2409 = vld [vmem:[#allocation2 + $0x50] sm:$0xff]
  %v2410 = vld [vmem:[#allocation2 + $0x58] sm:$0xff]
  %v2411 = vsel %vm38, %v2399, 0
  %v2413 = vsel %vm38, %v2405, 0
  %2415 = vmatprep.subr.mxu0 0.0
  %2416 = vmatpush1.msra.mxu0 %v1462
  %2417 = vmatprep.subr.mxu0 0.0
  %2418 = vmatpush1.msra.mxu0 %v1463
  %2419 = vmatprep.subr.mxu0 0.0
  %2420 = vmatpush1.msra.mxu0 %v1464
  %2421 = vmatprep.subr.mxu0 0.0
  %2422 = vmatpush1.msra.mxu0 %v1465
  %2423 = vmatprep.subr.mxu0 0.0
  %2424 = vmatpush1.msra.mxu0 0.0
  %2425 = vmatprep.subr.mxu0 0.0
  %2426 = vmatpush1.msra.mxu0 0.0
  %2427 = vmatprep.subr.mxu0 0.0
  %2428 = vmatpush1.msra.mxu0 0.0
  %2429 = vmatprep.subr.mxu0 0.0
  %2430 = vmatpush1.msra.mxu0 0.0
  %2431 = vmatprep.subr.mxu0 0.0
  %2432 = vmatpush1.msra.mxu0 0.0
  %2433 = vmatprep.subr.mxu0 0.0
  %2434 = vmatpush1.msra.mxu0 0.0
  %2435 = vmatprep.subr.mxu0 0.0
  %2436 = vmatpush1.msra.mxu0 0.0
  %2437 = vmatprep.subr.mxu0 0.0
  %2438 = vmatpush1.msra.mxu0 0.0
  %2439 = vmatprep.subr.mxu0 0.0
  %2440 = vmatpush1.msra.mxu0 0.0
  %2441 = vmatprep.subr.mxu0 0.0
  %2442 = vmatpush1.msra.mxu0 0.0
  %2443 = vmatprep.subr.mxu0 0.0
  %2444 = vmatpush1.msra.mxu0 0.0
  %2445 = vmatprep.subr.mxu0 0.0
  %2446 = vmatpush1.msra.mxu0 0.0
  %2447 = vmatprep.subr.mxu0 0.0
  %2448 = vmatpush1.msra.mxu0 0.0
  %2449 = vmatprep.subr.mxu0 0.0
  %2450 = vmatpush1.msra.mxu0 0.0
  %2451 = vmatprep.subr.mxu0 0.0
  %2452 = vmatpush1.msra.mxu0 0.0
  %2453 = vmatprep.subr.mxu0 0.0
  %2454 = vmatpush1.msra.mxu0 0.0
  %2455 = vmatprep.subr.mxu0 0.0
  %2456 = vmatpush1.msra.mxu0 0.0
  %2457 = vmatprep.subr.mxu0 0.0
  %2458 = vmatpush1.msra.mxu0 0.0
  %2459 = vmatprep.subr.mxu0 0.0
  %2460 = vmatpush1.msra.mxu0 0.0
  %2461 = vmatprep.subr.mxu0 0.0
  %2462 = vmatpush1.msra.mxu0 0.0
  %2463 = vmatprep.subr.mxu0 0.0
  %2464 = vmatpush1.msra.mxu0 0.0
  %2465 = vmatprep.subr.mxu0 0.0
  %2466 = vmatpush1.msra.mxu0 0.0
  %2467 = vmatprep.subr.mxu0 0.0
  %2468 = vmatpush1.msra.mxu0 0.0
  %2469 = vmatprep.subr.mxu0 0.0
  %2470 = vmatpush1.msra.mxu0 0.0
  %2471 = vmatprep.subr.mxu0 0.0
  %2472 = vmatpush1.msra.mxu0 0.0
  %2473 = vmatprep.subr.mxu0 0.0
  %2474 = vmatpush1.msra.mxu0 0.0
  %2475 = vmatprep.subr.mxu0 0.0
  %2476 = vmatpush1.msra.mxu0 0.0
  %2477 = vmatprep.subr.mxu0 0.0
  %2478 = vmatpush1.msra.mxu0 0.0
  %2479 = vmatprep.mubr.f32.mxu0 0.0
  %2480 = vmatmul.mubr.f32.gmra.mrb[0].mxu0 %v2411
  %v2481 = vpop.f32.mrb[0].mxu0
  %v2482 = vadd.f32 0.0, %v2481
  %v2483 = vpop.f32.mrb[0].mxu0
  %2484 = vmatprep.mubr.f32.mxu0 0.0
  %2485 = vmatmul.mubr.f32.gmra.mrb[0].mxu0 %v2413
  %v2486 = vpop.f32.mrb[0].mxu0
  %v2487 = vadd.f32 0.0, %v2486
  %v2488 = vpop.f32.mrb[0].mxu0
  %2489 = vdwg.mxu0
  %v2490 = vadd.f32 %v2409, %v2482
  %v2491 = vadd.f32 %v2410, %v2487
  %v2492 = vxor.u32 %v2490, 2147483648
  %v2493 = vxor.u32 %v2491, 2147483648
  %v2494 = vmul.f32 %v2492, 1.442695
  %v2495 = vpow.pop %v2494
  %v2496 = vmul.f32 %v2493, 1.442695
  %v2497 = vpow.pop %v2496
  %v2498 = vadd.f32 %v2495, 1.0
  %v2499 = vadd.f32 %v2497, 1.0
  %v2500 = vrcp.pop %v2498
  %v2501 = vmul.f32 1.0, %v2500
  %v2502 = vrcp.pop %v2499
  %v2503 = vmul.f32 1.0, %v2502
  %v2504 = vtanh.pop %v2490
  %v2505 = vtanh.pop %v2491
  %v2506 = vmul.f32 %v2501, %v2383
  %v2507 = vmul.f32 %v2503, %v2384
  %2510 = vrot.lane.b32.xlu0 %v2504, 32
  %v2511 = vpop.permute.xlu0 %2510
  %2512 = vrot.lane.b32.xlu0 %v2505, 32
  %v2513 = vpop.permute.xlu0 %2512
  %v2516 = vmul.f32 %v2501, %v2511
  %v2517 = vmul.f32 %v2503, %v2513
  %2520 = vrot.lane.b32.xlu0 %v2516, 32
  %v2521 = vpop.permute.xlu0 %2520
  %2522 = vrot.lane.b32.xlu0 %v2517, 32
  %v2523 = vpop.permute.xlu0 %2522
  %v2526 = vadd.f32 %v2506, %v2521
  %v2527 = vadd.f32 %v2507, %v2523
  %v2528 = vtanh.pop %v2526
  %v2529 = vtanh.pop %v2527
  %2532 = vrot.lane.b32.xlu0 %v2528, 32
  %v2533 = vpop.permute.xlu0 %2532
  %2534 = vrot.lane.b32.xlu0 %v2529, 32
  %v2535 = vpop.permute.xlu0 %2534
  %v2538 = vmul.f32 %v2501, %v2533
  %v2539 = vmul.f32 %v2503, %v2535
  %2541 = vrot.lane.b32.xlu0 %v2538, 64
  %v2542 = vpop.permute.xlu0 %2541
  %2544 = vst.msk [vmem:[#allocation4 + $0x50] sm:$0x3] %vm447, %v2542
  %2545 = vst.msk [vmem:[#allocation4 + $0x28] sm:$0x3] %vm447, %v2542
  %2547 = vrot.lane.b32.xlu0 %v2539, 64
  %v2548 = vpop.permute.xlu0 %2547
  %2550 = vst.msk [vmem:[#allocation4 + $0x20] sm:$0x3] %vm454, %v2548
  %2551 = vst.msk [vmem:[#allocation4 + $0x58] sm:$0x3] %vm454, %v2548
  %v2552 = vld [vmem:[#allocation2 + $0x60] sm:$0xff]
  %v2553 = vld [vmem:[#allocation2 + $0x68] sm:$0xff]
  %v2554 = vsel %vm38, %v2542, 0
  %v2556 = vsel %vm38, %v2548, 0
  %2558 = vmatprep.subr.mxu0 0.0
  %2559 = vmatpush1.msra.mxu0 %v1462
  %2560 = vmatprep.subr.mxu0 0.0
  %2561 = vmatpush1.msra.mxu0 %v1463
  %2562 = vmatprep.subr.mxu0 0.0
  %2563 = vmatpush1.msra.mxu0 %v1464
  %2564 = vmatprep.subr.mxu0 0.0
  %2565 = vmatpush1.msra.mxu0 %v1465
  %2566 = vmatprep.subr.mxu0 0.0
  %2567 = vmatpush1.msra.mxu0 0.0
  %2568 = vmatprep.subr.mxu0 0.0
  %2569 = vmatpush1.msra.mxu0 0.0
  %2570 = vmatprep.subr.mxu0 0.0
  %2571 = vmatpush1.msra.mxu0 0.0
  %2572 = vmatprep.subr.mxu0 0.0
  %2573 = vmatpush1.msra.mxu0 0.0
  %2574 = vmatprep.subr.mxu0 0.0
  %2575 = vmatpush1.msra.mxu0 0.0
  %2576 = vmatprep.subr.mxu0 0.0
  %2577 = vmatpush1.msra.mxu0 0.0
  %2578 = vmatprep.subr.mxu0 0.0
  %2579 = vmatpush1.msra.mxu0 0.0
  %2580 = vmatprep.subr.mxu0 0.0
  %2581 = vmatpush1.msra.mxu0 0.0
  %2582 = vmatprep.subr.mxu0 0.0
  %2583 = vmatpush1.msra.mxu0 0.0
  %2584 = vmatprep.subr.mxu0 0.0
  %2585 = vmatpush1.msra.mxu0 0.0
  %2586 = vmatprep.subr.mxu0 0.0
  %2587 = vmatpush1.msra.mxu0 0.0
  %2588 = vmatprep.subr.mxu0 0.0
  %2589 = vmatpush1.msra.mxu0 0.0
  %2590 = vmatprep.subr.mxu0 0.0
  %2591 = vmatpush1.msra.mxu0 0.0
  %2592 = vmatprep.subr.mxu0 0.0
  %2593 = vmatpush1.msra.mxu0 0.0
  %2594 = vmatprep.subr.mxu0 0.0
  %2595 = vmatpush1.msra.mxu0 0.0
  %2596 = vmatprep.subr.mxu0 0.0
  %2597 = vmatpush1.msra.mxu0 0.0
  %2598 = vmatprep.subr.mxu0 0.0
  %2599 = vmatpush1.msra.mxu0 0.0
  %2600 = vmatprep.subr.mxu0 0.0
  %2601 = vmatpush1.msra.mxu0 0.0
  %2602 = vmatprep.subr.mxu0 0.0
  %2603 = vmatpush1.msra.mxu0 0.0
  %2604 = vmatprep.subr.mxu0 0.0
  %2605 = vmatpush1.msra.mxu0 0.0
  %2606 = vmatprep.subr.mxu0 0.0
  %2607 = vmatpush1.msra.mxu0 0.0
  %2608 = vmatprep.subr.mxu0 0.0
  %2609 = vmatpush1.msra.mxu0 0.0
  %2610 = vmatprep.subr.mxu0 0.0
  %2611 = vmatpush1.msra.mxu0 0.0
  %2612 = vmatprep.subr.mxu0 0.0
  %2613 = vmatpush1.msra.mxu0 0.0
  %2614 = vmatprep.subr.mxu0 0.0
  %2615 = vmatpush1.msra.mxu0 0.0
  %2616 = vmatprep.subr.mxu0 0.0
  %2617 = vmatpush1.msra.mxu0 0.0
  %2618 = vmatprep.subr.mxu0 0.0
  %2619 = vmatpush1.msra.mxu0 0.0
  %2620 = vmatprep.subr.mxu0 0.0
  %2621 = vmatpush1.msra.mxu0 0.0
  %2622 = vmatprep.mubr.f32.mxu0 0.0
  %2623 = vmatmul.mubr.f32.gmra.mrb[0].mxu0 %v2554
  %v2624 = vpop.f32.mrb[0].mxu0
  %v2625 = vadd.f32 0.0, %v2624
  %v2626 = vpop.f32.mrb[0].mxu0
  %2627 = vmatprep.mubr.f32.mxu0 0.0
  %2628 = vmatmul.mubr.f32.gmra.mrb[0].mxu0 %v2556
  %v2629 = vpop.f32.mrb[0].mxu0
  %v2630 = vadd.f32 0.0, %v2629
  %v2631 = vpop.f32.mrb[0].mxu0
  %2632 = vdwg.mxu0
  %v2633 = vadd.f32 %v2552, %v2625
  %v2634 = vadd.f32 %v2553, %v2630
  %v2635 = vxor.u32 %v2633, 2147483648
  %v2636 = vxor.u32 %v2634, 2147483648
  %v2637 = vmul.f32 %v2635, 1.442695
  %v2638 = vpow.pop %v2637
  %v2639 = vmul.f32 %v2636, 1.442695
  %v2640 = vpow.pop %v2639
  %v2641 = vadd.f32 %v2638, 1.0
  %v2642 = vadd.f32 %v2640, 1.0
  %v2643 = vrcp.pop %v2641
  %v2644 = vmul.f32 1.0, %v2643
  %v2645 = vrcp.pop %v2642
  %v2646 = vmul.f32 1.0, %v2645
  %v2647 = vtanh.pop %v2633
  %v2648 = vtanh.pop %v2634
  %v2649 = vmul.f32 %v2644, %v2526
  %v2650 = vmul.f32 %v2646, %v2527
  %2653 = vrot.lane.b32.xlu0 %v2647, 32
  %v2654 = vpop.permute.xlu0 %2653
  %2655 = vrot.lane.b32.xlu0 %v2648, 32
  %v2656 = vpop.permute.xlu0 %2655
  %v2659 = vmul.f32 %v2644, %v2654
  %v2660 = vmul.f32 %v2646, %v2656
  %2663 = vrot.lane.b32.xlu0 %v2659, 32
  %v2664 = vpop.permute.xlu0 %2663
  %2665 = vrot.lane.b32.xlu0 %v2660, 32
  %v2666 = vpop.permute.xlu0 %2665
  %v2669 = vadd.f32 %v2649, %v2664
  %v2670 = vadd.f32 %v2650, %v2666
  %v2671 = vtanh.pop %v2669
  %v2672 = vtanh.pop %v2670
  %2675 = vrot.lane.b32.xlu0 %v2671, 32
  %v2676 = vpop.permute.xlu0 %2675
  %2677 = vrot.lane.b32.xlu0 %v2672, 32
  %v2678 = vpop.permute.xlu0 %2677
  %v2681 = vmul.f32 %v2644, %v2676
  %v2682 = vmul.f32 %v2646, %v2678
  %2684 = vrot.lane.b32.xlu0 %v2681, 64
  %v2685 = vpop.permute.xlu0 %2684
  %2687 = vst.msk [vmem:[#allocation4 + $0x60] sm:$0x3] %vm447, %v2685
  %2688 = vst.msk [vmem:[#allocation4 + $0x18] sm:$0x3] %vm447, %v2685
  %2690 = vrot.lane.b32.xlu0 %v2682, 64
  %v2691 = vpop.permute.xlu0 %2690
  %2693 = vst.msk [vmem:[#allocation4 + $0x10] sm:$0x3] %vm454, %v2691
  %2694 = vst.msk [vmem:[#allocation4 + $0x68] sm:$0x3] %vm454, %v2691
  %v2695 = vld [vmem:[#allocation2 + $0x70] sm:$0xff]
  %v2696 = vld [vmem:[#allocation2 + $0x78] sm:$0xff]
  %v2697 = vsel %vm38, %v2685, 0
  %v2699 = vsel %vm38, %v2691, 0
  %2701 = vmatprep.subr.mxu0 0.0
  %2702 = vmatpush1.msra.mxu0 %v1462
  %2703 = vmatprep.subr.mxu0 0.0
  %2704 = vmatpush1.msra.mxu0 %v1463
  %2705 = vmatprep.subr.mxu0 0.0
  %2706 = vmatpush1.msra.mxu0 %v1464
  %2707 = vmatprep.subr.mxu0 0.0
  %2708 = vmatpush1.msra.mxu0 %v1465
  %2709 = vmatprep.subr.mxu0 0.0
  %2710 = vmatpush1.msra.mxu0 0.0
  %2711 = vmatprep.subr.mxu0 0.0
  %2712 = vmatpush1.msra.mxu0 0.0
  %2713 = vmatprep.subr.mxu0 0.0
  %2714 = vmatpush1.msra.mxu0 0.0
  %2715 = vmatprep.subr.mxu0 0.0
  %2716 = vmatpush1.msra.mxu0 0.0
  %2717 = vmatprep.subr.mxu0 0.0
  %2718 = vmatpush1.msra.mxu0 0.0
  %2719 = vmatprep.subr.mxu0 0.0
  %2720 = vmatpush1.msra.mxu0 0.0
  %2721 = vmatprep.subr.mxu0 0.0
  %2722 = vmatpush1.msra.mxu0 0.0
  %2723 = vmatprep.subr.mxu0 0.0
  %2724 = vmatpush1.msra.mxu0 0.0
  %2725 = vmatprep.subr.mxu0 0.0
  %2726 = vmatpush1.msra.mxu0 0.0
  %2727 = vmatprep.subr.mxu0 0.0
  %2728 = vmatpush1.msra.mxu0 0.0
  %2729 = vmatprep.subr.mxu0 0.0
  %2730 = vmatpush1.msra.mxu0 0.0
  %2731 = vmatprep.subr.mxu0 0.0
  %2732 = vmatpush1.msra.mxu0 0.0
  %2733 = vmatprep.subr.mxu0 0.0
  %2734 = vmatpush1.msra.mxu0 0.0
  %2735 = vmatprep.subr.mxu0 0.0
  %2736 = vmatpush1.msra.mxu0 0.0
  %2737 = vmatprep.subr.mxu0 0.0
  %2738 = vmatpush1.msra.mxu0 0.0
  %2739 = vmatprep.subr.mxu0 0.0
  %2740 = vmatpush1.msra.mxu0 0.0
  %2741 = vmatprep.subr.mxu0 0.0
  %2742 = vmatpush1.msra.mxu0 0.0
  %2743 = vmatprep.subr.mxu0 0.0
  %2744 = vmatpush1.msra.mxu0 0.0
  %2745 = vmatprep.subr.mxu0 0.0
  %2746 = vmatpush1.msra.mxu0 0.0
  %2747 = vmatprep.subr.mxu0 0.0
  %2748 = vmatpush1.msra.mxu0 0.0
  %2749 = vmatprep.subr.mxu0 0.0
  %2750 = vmatpush1.msra.mxu0 0.0
  %2751 = vmatprep.subr.mxu0 0.0
  %2752 = vmatpush1.msra.mxu0 0.0
  %2753 = vmatprep.subr.mxu0 0.0
  %2754 = vmatpush1.msra.mxu0 0.0
  %2755 = vmatprep.subr.mxu0 0.0
  %2756 = vmatpush1.msra.mxu0 0.0
  %2757 = vmatprep.subr.mxu0 0.0
  %2758 = vmatpush1.msra.mxu0 0.0
  %2759 = vmatprep.subr.mxu0 0.0
  %2760 = vmatpush1.msra.mxu0 0.0
  %2761 = vmatprep.subr.mxu0 0.0
  %2762 = vmatpush1.msra.mxu0 0.0
  %2763 = vmatprep.subr.mxu0 0.0
  %2764 = vmatpush1.msra.mxu0 0.0
  %2765 = vmatprep.mubr.f32.mxu0 0.0
  %2766 = vmatmul.mubr.f32.gmra.mrb[0].mxu0 %v2697
  %v2767 = vpop.f32.mrb[0].mxu0
  %v2768 = vadd.f32 0.0, %v2767
  %v2769 = vpop.f32.mrb[0].mxu0
  %2770 = vmatprep.mubr.f32.mxu0 0.0
  %2771 = vmatmul.mubr.f32.gmra.mrb[0].mxu0 %v2699
  %v2772 = vpop.f32.mrb[0].mxu0
  %v2773 = vadd.f32 0.0, %v2772
  %v2774 = vpop.f32.mrb[0].mxu0
  %2775 = vdwg.mxu0
  %v2776 = vadd.f32 %v2695, %v2768
  %v2777 = vadd.f32 %v2696, %v2773
  %v2778 = vxor.u32 %v2776, 2147483648
  %v2779 = vxor.u32 %v2777, 2147483648
  %v2780 = vmul.f32 %v2778, 1.442695
  %v2781 = vpow.pop %v2780
  %v2782 = vmul.f32 %v2779, 1.442695
  %v2783 = vpow.pop %v2782
  %v2784 = vadd.f32 %v2781, 1.0
  %v2785 = vadd.f32 %v2783, 1.0
  %v2786 = vrcp.pop %v2784
  %v2787 = vmul.f32 1.0, %v2786
  %v2788 = vrcp.pop %v2785
  %v2789 = vmul.f32 1.0, %v2788
  %v2790 = vtanh.pop %v2776
  %v2791 = vtanh.pop %v2777
  %v2792 = vmul.f32 %v2787, %v2669
  %v2793 = vmul.f32 %v2789, %v2670
  %2796 = vrot.lane.b32.xlu0 %v2790, 32
  %v2797 = vpop.permute.xlu0 %2796
  %2798 = vrot.lane.b32.xlu0 %v2791, 32
  %v2799 = vpop.permute.xlu0 %2798
  %v2802 = vmul.f32 %v2787, %v2797
  %v2803 = vmul.f32 %v2789, %v2799
  %2806 = vrot.lane.b32.xlu0 %v2802, 32
  %v2807 = vpop.permute.xlu0 %2806
  %2808 = vrot.lane.b32.xlu0 %v2803, 32
  %v2809 = vpop.permute.xlu0 %2808
  %v2812 = vadd.f32 %v2792, %v2807
  %v2813 = vadd.f32 %v2793, %v2809
  %v2814 = vtanh.pop %v2812
  %v2815 = vtanh.pop %v2813
  %2818 = vrot.lane.b32.xlu0 %v2814, 32
  %v2819 = vpop.permute.xlu0 %2818
  %2820 = vrot.lane.b32.xlu0 %v2815, 32
  %v2821 = vpop.permute.xlu0 %2820
  %v2824 = vmul.f32 %v2787, %v2819
  %v2825 = vmul.f32 %v2789, %v2821
  %2827 = vrot.lane.b32.xlu0 %v2824, 64
  %v2828 = vpop.permute.xlu0 %2827
  %2830 = vst.msk [vmem:[#allocation4 + $0x70] sm:$0x3] %vm447, %v2828
  %2831 = vst.msk [vmem:[#allocation4 + $0x8] sm:$0x3] %vm447, %v2828
  %2833 = vrot.lane.b32.xlu0 %v2825, 64
  %v2834 = vpop.permute.xlu0 %2833
  %2836 = vst.msk [vmem:[#allocation4] sm:$0x3] %vm454, %v2834
  %2837 = vst.msk [vmem:[#allocation4 + $0x78] sm:$0x3] %vm454, %v2834
  %v2838 = vld [vmem:[%s7] sm:$0xff]
  %v2839 = vld [vmem:[%s7 + $0x8] sm:$0xff]
  %v2840 = vld [vmem:[%s7 + $0x10] sm:$0xff]
  %v2841 = vld [vmem:[%s7 + $0x18] sm:$0xff]
  %v2842 = vld [vmem:[%s8] sm:$0xff]
  %v2843 = vld [vmem:[%s8 + $0x8] sm:$0xff]
  %v2844 = vld [vmem:[%s8 + $0x10] sm:$0xff]
  %v2845 = vld [vmem:[%s8 + $0x18] sm:$0xff]
  %v2846 = vld [vmem:[%s9] sm:$0x1]
  %v2847 = vld [vmem:[#allocation4] sm:$0xff]
  %v2848 = vld [vmem:[#allocation4 + $0x8] sm:$0xff]
  %v2849 = vld [vmem:[#allocation4 + $0x10] sm:$0xff]
  %v2850 = vld [vmem:[#allocation4 + $0x18] sm:$0xff]
  %v2851 = vld [vmem:[#allocation4 + $0x20] sm:$0xff]
  %v2852 = vld [vmem:[#allocation4 + $0x28] sm:$0xff]
  %v2853 = vld [vmem:[#allocation4 + $0x30] sm:$0xff]
  %v2854 = vld [vmem:[#allocation4 + $0x38] sm:$0xff]
  %v2855 = vld [vmem:[#allocation4 + $0x40] sm:$0xff]
  %v2856 = vld [vmem:[#allocation4 + $0x48] sm:$0xff]
  %v2857 = vld [vmem:[#allocation4 + $0x50] sm:$0xff]
  %v2858 = vld [vmem:[#allocation4 + $0x58] sm:$0xff]
  %v2859 = vld [vmem:[#allocation4 + $0x60] sm:$0xff]
  %v2860 = vld [vmem:[#allocation4 + $0x68] sm:$0xff]
  %v2861 = vld [vmem:[#allocation4 + $0x70] sm:$0xff]
  %v2862 = vld [vmem:[#allocation4 + $0x78] sm:$0xff]
  %v2864 = vlaneseq
  %v2865 = vshrl.u32 %v2864, 7
  %v2866 = vsub.s32 0, %v2865
  %v2867 = vrot.slane %v2846, %v2866
  %v2870 = vsel %vm38, %v2847, 0
  %v2873 = vsel %vm38, %v2848, 0
  %v2876 = vsel %vm38, %v2849, 0
  %v2879 = vsel %vm38, %v2850, 0
  %v2882 = vsel %vm38, %v2851, 0
  %v2885 = vsel %vm38, %v2852, 0
  %v2888 = vsel %vm38, %v2853, 0
  %v2891 = vsel %vm38, %v2854, 0
  %v2894 = vsel %vm38, %v2855, 0
  %v2897 = vsel %vm38, %v2856, 0
  %v2900 = vsel %vm38, %v2857, 0
  %v2903 = vsel %vm38, %v2858, 0
  %v2906 = vsel %vm38, %v2859, 0
  %v2909 = vsel %vm38, %v2860, 0
  %v2912 = vsel %vm38, %v2861, 0
  %v2915 = vsel %vm38, %v2862, 0
  %2917 = vmatprep.subr.mxu0 0.0
  %2918 = vmatpush1.msra.mxu0 %v2838
  %2919 = vmatprep.subr.mxu0 0.0
  %2920 = vmatpush1.msra.mxu0 %v2839
  %2921 = vmatprep.subr.mxu0 0.0
  %2922 = vmatpush1.msra.mxu0 %v2840
  %2923 = vmatprep.subr.mxu0 0.0
  %2924 = vmatpush1.msra.mxu0 %v2841
  %2925 = vmatprep.subr.mxu0 0.0
  %2926 = vmatpush1.msra.mxu0 0.0
  %2927 = vmatprep.subr.mxu0 0.0
  %2928 = vmatpush1.msra.mxu0 0.0
  %2929 = vmatprep.subr.mxu0 0.0
  %2930 = vmatpush1.msra.mxu0 0.0
  %2931 = vmatprep.subr.mxu0 0.0
  %2932 = vmatpush1.msra.mxu0 0.0
  %2933 = vmatprep.subr.mxu0 0.0
  %2934 = vmatpush1.msra.mxu0 0.0
  %2935 = vmatprep.subr.mxu0 0.0
  %2936 = vmatpush1.msra.mxu0 0.0
  %2937 = vmatprep.subr.mxu0 0.0
  %2938 = vmatpush1.msra.mxu0 0.0
  %2939 = vmatprep.subr.mxu0 0.0
  %2940 = vmatpush1.msra.mxu0 0.0
  %2941 = vmatprep.subr.mxu0 0.0
  %2942 = vmatpush1.msra.mxu0 0.0
  %2943 = vmatprep.subr.mxu0 0.0
  %2944 = vmatpush1.msra.mxu0 0.0
  %2945 = vmatprep.subr.mxu0 0.0
  %2946 = vmatpush1.msra.mxu0 0.0
  %2947 = vmatprep.subr.mxu0 0.0
  %2948 = vmatpush1.msra.mxu0 0.0
  %2949 = vmatprep.subr.mxu0 0.0
  %2950 = vmatpush1.msra.mxu0 0.0
  %2951 = vmatprep.subr.mxu0 0.0
  %2952 = vmatpush1.msra.mxu0 0.0
  %2953 = vmatprep.subr.mxu0 0.0
  %2954 = vmatpush1.msra.mxu0 0.0
  %2955 = vmatprep.subr.mxu0 0.0
  %2956 = vmatpush1.msra.mxu0 0.0
  %2957 = vmatprep.subr.mxu0 0.0
  %2958 = vmatpush1.msra.mxu0 0.0
  %2959 = vmatprep.subr.mxu0 0.0
  %2960 = vmatpush1.msra.mxu0 0.0
  %2961 = vmatprep.subr.mxu0 0.0
  %2962 = vmatpush1.msra.mxu0 0.0
  %2963 = vmatprep.subr.mxu0 0.0
  %2964 = vmatpush1.msra.mxu0 0.0
  %2965 = vmatprep.subr.mxu0 0.0
  %2966 = vmatpush1.msra.mxu0 0.0
  %2967 = vmatprep.subr.mxu0 0.0
  %2968 = vmatpush1.msra.mxu0 0.0
  %2969 = vmatprep.subr.mxu0 0.0
  %2970 = vmatpush1.msra.mxu0 0.0
  %2971 = vmatprep.subr.mxu0 0.0
  %2972 = vmatpush1.msra.mxu0 0.0
  %2973 = vmatprep.subr.mxu0 0.0
  %2974 = vmatpush1.msra.mxu0 0.0
  %2975 = vmatprep.subr.mxu0 0.0
  %2976 = vmatpush1.msra.mxu0 0.0
  %2977 = vmatprep.subr.mxu0 0.0
  %2978 = vmatpush1.msra.mxu0 0.0
  %2979 = vmatprep.subr.mxu0 0.0
  %2980 = vmatpush1.msra.mxu0 0.0
  %2981 = vmatprep.mubr.f32.mxu0 0.0
  %2982 = vmatmul.mubr.f32.gmra.mrb[0].mxu0 %v2870
  %v2983 = vpop.f32.mrb[0].mxu0
  %v2984 = vadd.f32 %v2867, %v2983
  %v2985 = vpop.f32.mrb[0].mxu0
  %2986 = vmatprep.mubr.f32.mxu0 0.0
  %2987 = vmatmul.mubr.f32.gmra.mrb[0].mxu0 %v2873
  %v2988 = vpop.f32.mrb[0].mxu0
  %v2989 = vadd.f32 %v2867, %v2988
  %v2990 = vpop.f32.mrb[0].mxu0
  %2991 = vmatprep.mubr.f32.mxu0 0.0
  %2992 = vmatmul.mubr.f32.gmra.mrb[0].mxu0 %v2876
  %v2993 = vpop.f32.mrb[0].mxu0
  %v2994 = vadd.f32 %v2867, %v2993
  %v2995 = vpop.f32.mrb[0].mxu0
  %2996 = vmatprep.mubr.f32.mxu0 0.0
  %2997 = vmatmul.mubr.f32.gmra.mrb[0].mxu0 %v2879
  %v2998 = vpop.f32.mrb[0].mxu0
  %v2999 = vadd.f32 %v2867, %v2998
  %v3000 = vpop.f32.mrb[0].mxu0
  %3001 = vmatprep.mubr.f32.mxu0 0.0
  %3002 = vmatmul.mubr.f32.gmra.mrb[0].mxu0 %v2882
  %v3003 = vpop.f32.mrb[0].mxu0
  %v3004 = vadd.f32 %v2867, %v3003
  %v3005 = vpop.f32.mrb[0].mxu0
  %3006 = vmatprep.mubr.f32.mxu0 0.0
  %3007 = vmatmul.mubr.f32.gmra.mrb[0].mxu0 %v2885
  %v3008 = vpop.f32.mrb[0].mxu0
  %v3009 = vadd.f32 %v2867, %v3008
  %v3010 = vpop.f32.mrb[0].mxu0
  %3011 = vmatprep.mubr.f32.mxu0 0.0
  %3012 = vmatmul.mubr.f32.gmra.mrb[0].mxu0 %v2888
  %v3013 = vpop.f32.mrb[0].mxu0
  %v3014 = vadd.f32 %v2867, %v3013
  %v3015 = vpop.f32.mrb[0].mxu0
  %3016 = vmatprep.mubr.f32.mxu0 0.0
  %3017 = vmatmul.mubr.f32.gmra.mrb[0].mxu0 %v2891
  %v3018 = vpop.f32.mrb[0].mxu0
  %v3019 = vadd.f32 %v2867, %v3018
  %v3020 = vpop.f32.mrb[0].mxu0
  %3021 = vmatprep.mubr.f32.mxu0 0.0
  %3022 = vmatmul.mubr.f32.gmra.mrb[0].mxu0 %v2894
  %v3023 = vpop.f32.mrb[0].mxu0
  %v3024 = vadd.f32 %v2867, %v3023
  %v3025 = vpop.f32.mrb[0].mxu0
  %3026 = vmatprep.mubr.f32.mxu0 0.0
  %3027 = vmatmul.mubr.f32.gmra.mrb[0].mxu0 %v2897
  %v3028 = vpop.f32.mrb[0].mxu0
  %v3029 = vadd.f32 %v2867, %v3028
  %v3030 = vpop.f32.mrb[0].mxu0
  %3031 = vmatprep.mubr.f32.mxu0 0.0
  %3032 = vmatmul.mubr.f32.gmra.mrb[0].mxu0 %v2900
  %v3033 = vpop.f32.mrb[0].mxu0
  %v3034 = vadd.f32 %v2867, %v3033
  %v3035 = vpop.f32.mrb[0].mxu0
  %3036 = vmatprep.mubr.f32.mxu0 0.0
  %3037 = vmatmul.mubr.f32.gmra.mrb[0].mxu0 %v2903
  %v3038 = vpop.f32.mrb[0].mxu0
  %v3039 = vadd.f32 %v2867, %v3038
  %v3040 = vpop.f32.mrb[0].mxu0
  %3041 = vmatprep.mubr.f32.mxu0 0.0
  %3042 = vmatmul.mubr.f32.gmra.mrb[0].mxu0 %v2906
  %v3043 = vpop.f32.mrb[0].mxu0
  %v3044 = vadd.f32 %v2867, %v3043
  %v3045 = vpop.f32.mrb[0].mxu0
  %3046 = vmatprep.mubr.f32.mxu0 0.0
  %3047 = vmatmul.mubr.f32.gmra.mrb[0].mxu0 %v2909
  %v3048 = vpop.f32.mrb[0].mxu0
  %v3049 = vadd.f32 %v2867, %v3048
  %v3050 = vpop.f32.mrb[0].mxu0
  %3051 = vmatprep.mubr.f32.mxu0 0.0
  %3052 = vmatmul.mubr.f32.gmra.mrb[0].mxu0 %v2912
  %v3053 = vpop.f32.mrb[0].mxu0
  %v3054 = vadd.f32 %v2867, %v3053
  %v3055 = vpop.f32.mrb[0].mxu0
  %3056 = vmatprep.mubr.f32.mxu0 0.0
  %3057 = vmatmul.mubr.f32.gmra.mrb[0].mxu0 %v2915
  %v3058 = vpop.f32.mrb[0].mxu0
  %v3059 = vadd.f32 %v2867, %v3058
  %v3060 = vpop.f32.mrb[0].mxu0
  %3061 = vdwg.mxu0
  %3062 = vst [vmem:[#allocation2] sm:$0xff] %v2984
  %3063 = vst [vmem:[#allocation2 + $0x8] sm:$0xff] %v2989
  %3064 = vst [vmem:[#allocation2 + $0x10] sm:$0xff] %v2994
  %3065 = vst [vmem:[#allocation2 + $0x18] sm:$0xff] %v2999
  %3066 = vst [vmem:[#allocation2 + $0x20] sm:$0xff] %v3004
  %3067 = vst [vmem:[#allocation2 + $0x28] sm:$0xff] %v3009
  %3068 = vst [vmem:[#allocation2 + $0x30] sm:$0xff] %v3014
  %3069 = vst [vmem:[#allocation2 + $0x38] sm:$0xff] %v3019
  %3070 = vst [vmem:[#allocation2 + $0x40] sm:$0xff] %v3024
  %3071 = vst [vmem:[#allocation2 + $0x48] sm:$0xff] %v3029
  %3072 = vst [vmem:[#allocation2 + $0x50] sm:$0xff] %v3034
  %3073 = vst [vmem:[#allocation2 + $0x58] sm:$0xff] %v3039
  %3074 = vst [vmem:[#allocation2 + $0x60] sm:$0xff] %v3044
  %3075 = vst [vmem:[#allocation2 + $0x68] sm:$0xff] %v3049
  %3076 = vst [vmem:[#allocation2 + $0x70] sm:$0xff] %v3054
  %3077 = vst [vmem:[#allocation2 + $0x78] sm:$0xff] %v3059
  %v3078 = vld [vmem:[#allocation2] sm:$0xff]
  %v3079 = vld [vmem:[#allocation2 + $0x8] sm:$0xff]
  %3080 = vmatprep.subr.mxu0 0.0
  %3081 = vmatpush1.msra.mxu0 %v2842
  %3082 = vmatprep.subr.mxu0 0.0
  %3083 = vmatpush1.msra.mxu0 %v2843
  %3084 = vmatprep.subr.mxu0 0.0
  %3085 = vmatpush1.msra.mxu0 %v2844
  %3086 = vmatprep.subr.mxu0 0.0
  %3087 = vmatpush1.msra.mxu0 %v2845
  %3088 = vmatprep.subr.mxu0 0.0
  %3089 = vmatpush1.msra.mxu0 0.0
  %3090 = vmatprep.subr.mxu0 0.0
  %3091 = vmatpush1.msra.mxu0 0.0
  %3092 = vmatprep.subr.mxu0 0.0
  %3093 = vmatpush1.msra.mxu0 0.0
  %3094 = vmatprep.subr.mxu0 0.0
  %3095 = vmatpush1.msra.mxu0 0.0
  %3096 = vmatprep.subr.mxu0 0.0
  %3097 = vmatpush1.msra.mxu0 0.0
  %3098 = vmatprep.subr.mxu0 0.0
  %3099 = vmatpush1.msra.mxu0 0.0
  %3100 = vmatprep.subr.mxu0 0.0
  %3101 = vmatpush1.msra.mxu0 0.0
  %3102 = vmatprep.subr.mxu0 0.0
  %3103 = vmatpush1.msra.mxu0 0.0
  %3104 = vmatprep.subr.mxu0 0.0
  %3105 = vmatpush1.msra.mxu0 0.0
  %3106 = vmatprep.subr.mxu0 0.0
  %3107 = vmatpush1.msra.mxu0 0.0
  %3108 = vmatprep.subr.mxu0 0.0
  %3109 = vmatpush1.msra.mxu0 0.0
  %3110 = vmatprep.subr.mxu0 0.0
  %3111 = vmatpush1.msra.mxu0 0.0
  %3112 = vmatprep.subr.mxu0 0.0
  %3113 = vmatpush1.msra.mxu0 0.0
  %3114 = vmatprep.subr.mxu0 0.0
  %3115 = vmatpush1.msra.mxu0 0.0
  %3116 = vmatprep.subr.mxu0 0.0
  %3117 = vmatpush1.msra.mxu0 0.0
  %3118 = vmatprep.subr.mxu0 0.0
  %3119 = vmatpush1.msra.mxu0 0.0
  %3120 = vmatprep.subr.mxu0 0.0
  %3121 = vmatpush1.msra.mxu0 0.0
  %3122 = vmatprep.subr.mxu0 0.0
  %3123 = vmatpush1.msra.mxu0 0.0
  %3124 = vmatprep.subr.mxu0 0.0
  %3125 = vmatpush1.msra.mxu0 0.0
  %3126 = vmatprep.subr.mxu0 0.0
  %3127 = vmatpush1.msra.mxu0 0.0
  %3128 = vmatprep.subr.mxu0 0.0
  %3129 = vmatpush1.msra.mxu0 0.0
  %3130 = vmatprep.subr.mxu0 0.0
  %3131 = vmatpush1.msra.mxu0 0.0
  %3132 = vmatprep.subr.mxu0 0.0
  %3133 = vmatpush1.msra.mxu0 0.0
  %3134 = vmatprep.subr.mxu0 0.0
  %3135 = vmatpush1.msra.mxu0 0.0
  %3136 = vmatprep.subr.mxu0 0.0
  %3137 = vmatpush1.msra.mxu0 0.0
  %3138 = vmatprep.subr.mxu0 0.0
  %3139 = vmatpush1.msra.mxu0 0.0
  %3140 = vmatprep.subr.mxu0 0.0
  %3141 = vmatpush1.msra.mxu0 0.0
  %3142 = vmatprep.subr.mxu0 0.0
  %3143 = vmatpush1.msra.mxu0 0.0
  %3144 = vmatprep.mubr.f32.mxu0 0.0
  %3145 = vmatmul.mubr.f32.gmra.mrb[0].mxu0 %v316
  %v3146 = vpop.f32.mrb[0].mxu0
  %v3147 = vadd.f32 0.0, %v3146
  %v3148 = vpop.f32.mrb[0].mxu0
  %3149 = vmatprep.mubr.f32.mxu0 0.0
  %3150 = vmatmul.mubr.f32.gmra.mrb[0].mxu0 %v316
  %v3151 = vpop.f32.mrb[0].mxu0
  %v3152 = vadd.f32 0.0, %v3151
  %v3153 = vpop.f32.mrb[0].mxu0
  %3154 = vdwg.mxu0
  %v3155 = vadd.f32 %v3078, %v3147
  %v3156 = vadd.f32 %v3079, %v3152
  %v3157 = vxor.u32 %v3155, 2147483648
  %v3158 = vxor.u32 %v3156, 2147483648
  %v3159 = vmul.f32 %v3157, 1.442695
  %v3160 = vpow.pop %v3159
  %v3161 = vmul.f32 %v3158, 1.442695
  %v3162 = vpow.pop %v3161
  %v3163 = vadd.f32 %v3160, 1.0
  %v3164 = vadd.f32 %v3162, 1.0
  %v3165 = vrcp.pop %v3163
  %v3166 = vmul.f32 1.0, %v3165
  %v3167 = vrcp.pop %v3164
  %v3168 = vmul.f32 1.0, %v3167
  %v3169 = vtanh.pop %v3155
  %v3170 = vtanh.pop %v3156
  %v3171 = vmul.f32 %v3166, 0.0
  %v3172 = vmul.f32 %v3168, 0.0
  %3175 = vrot.lane.b32.xlu0 %v3169, 32
  %v3176 = vpop.permute.xlu0 %3175
  %3177 = vrot.lane.b32.xlu0 %v3170, 32
  %v3178 = vpop.permute.xlu0 %3177
  %v3181 = vmul.f32 %v3166, %v3176
  %v3182 = vmul.f32 %v3168, %v3178
  %3185 = vrot.lane.b32.xlu0 %v3181, 32
  %v3186 = vpop.permute.xlu0 %3185
  %3187 = vrot.lane.b32.xlu0 %v3182, 32
  %v3188 = vpop.permute.xlu0 %3187
  %v3191 = vadd.f32 %v3171, %v3186
  %v3192 = vadd.f32 %v3172, %v3188
  %v3193 = vtanh.pop %v3191
  %v3194 = vtanh.pop %v3192
  %3197 = vrot.lane.b32.xlu0 %v3193, 32
  %v3198 = vpop.permute.xlu0 %3197
  %3199 = vrot.lane.b32.xlu0 %v3194, 32
  %v3200 = vpop.permute.xlu0 %3199
  %v3203 = vmul.f32 %v3166, %v3198
  %v3204 = vmul.f32 %v3168, %v3200
  %3206 = vrot.lane.b32.xlu0 %v3203, 64
  %v3207 = vpop.permute.xlu0 %3206
  %3209 = vst.msk [vmem:[#allocation3] sm:$0x3] %vm447, %v3207
  %3210 = vst.msk [vmem:[#allocation3 + $0x78] sm:$0x3] %vm447, %v3207
  %3212 = vrot.lane.b32.xlu0 %v3204, 64
  %v3213 = vpop.permute.xlu0 %3212
  %3215 = vst.msk [vmem:[#allocation3 + $0x70] sm:$0x3] %vm454, %v3213
  %3216 = vst.msk [vmem:[#allocation3 + $0x8] sm:$0x3] %vm454, %v3213
  %v3217 = vld [vmem:[#allocation2 + $0x10] sm:$0xff]
  %v3218 = vld [vmem:[#allocation2 + $0x18] sm:$0xff]
  %v3219 = vsel %vm38, %v3207, 0
  %v3221 = vsel %vm38, %v3213, 0
  %3223 = vmatprep.subr.mxu0 0.0
  %3224 = vmatpush1.msra.mxu0 %v2842
  %3225 = vmatprep.subr.mxu0 0.0
  %3226 = vmatpush1.msra.mxu0 %v2843
  %3227 = vmatprep.subr.mxu0 0.0
  %3228 = vmatpush1.msra.mxu0 %v2844
  %3229 = vmatprep.subr.mxu0 0.0
  %3230 = vmatpush1.msra.mxu0 %v2845
  %3231 = vmatprep.subr.mxu0 0.0
  %3232 = vmatpush1.msra.mxu0 0.0
  %3233 = vmatprep.subr.mxu0 0.0
  %3234 = vmatpush1.msra.mxu0 0.0
  %3235 = vmatprep.subr.mxu0 0.0
  %3236 = vmatpush1.msra.mxu0 0.0
  %3237 = vmatprep.subr.mxu0 0.0
  %3238 = vmatpush1.msra.mxu0 0.0
  %3239 = vmatprep.subr.mxu0 0.0
  %3240 = vmatpush1.msra.mxu0 0.0
  %3241 = vmatprep.subr.mxu0 0.0
  %3242 = vmatpush1.msra.mxu0 0.0
  %3243 = vmatprep.subr.mxu0 0.0
  %3244 = vmatpush1.msra.mxu0 0.0
  %3245 = vmatprep.subr.mxu0 0.0
  %3246 = vmatpush1.msra.mxu0 0.0
  %3247 = vmatprep.subr.mxu0 0.0
  %3248 = vmatpush1.msra.mxu0 0.0
  %3249 = vmatprep.subr.mxu0 0.0
  %3250 = vmatpush1.msra.mxu0 0.0
  %3251 = vmatprep.subr.mxu0 0.0
  %3252 = vmatpush1.msra.mxu0 0.0
  %3253 = vmatprep.subr.mxu0 0.0
  %3254 = vmatpush1.msra.mxu0 0.0
  %3255 = vmatprep.subr.mxu0 0.0
  %3256 = vmatpush1.msra.mxu0 0.0
  %3257 = vmatprep.subr.mxu0 0.0
  %3258 = vmatpush1.msra.mxu0 0.0
  %3259 = vmatprep.subr.mxu0 0.0
  %3260 = vmatpush1.msra.mxu0 0.0
  %3261 = vmatprep.subr.mxu0 0.0
  %3262 = vmatpush1.msra.mxu0 0.0
  %3263 = vmatprep.subr.mxu0 0.0
  %3264 = vmatpush1.msra.mxu0 0.0
  %3265 = vmatprep.subr.mxu0 0.0
  %3266 = vmatpush1.msra.mxu0 0.0
  %3267 = vmatprep.subr.mxu0 0.0
  %3268 = vmatpush1.msra.mxu0 0.0
  %3269 = vmatprep.subr.mxu0 0.0
  %3270 = vmatpush1.msra.mxu0 0.0
  %3271 = vmatprep.subr.mxu0 0.0
  %3272 = vmatpush1.msra.mxu0 0.0
  %3273 = vmatprep.subr.mxu0 0.0
  %3274 = vmatpush1.msra.mxu0 0.0
  %3275 = vmatprep.subr.mxu0 0.0
  %3276 = vmatpush1.msra.mxu0 0.0
  %3277 = vmatprep.subr.mxu0 0.0
  %3278 = vmatpush1.msra.mxu0 0.0
  %3279 = vmatprep.subr.mxu0 0.0
  %3280 = vmatpush1.msra.mxu0 0.0
  %3281 = vmatprep.subr.mxu0 0.0
  %3282 = vmatpush1.msra.mxu0 0.0
  %3283 = vmatprep.subr.mxu0 0.0
  %3284 = vmatpush1.msra.mxu0 0.0
  %3285 = vmatprep.subr.mxu0 0.0
  %3286 = vmatpush1.msra.mxu0 0.0
  %3287 = vmatprep.mubr.f32.mxu0 0.0
  %3288 = vmatmul.mubr.f32.gmra.mrb[0].mxu0 %v3219
  %v3289 = vpop.f32.mrb[0].mxu0
  %v3290 = vadd.f32 0.0, %v3289
  %v3291 = vpop.f32.mrb[0].mxu0
  %3292 = vmatprep.mubr.f32.mxu0 0.0
  %3293 = vmatmul.mubr.f32.gmra.mrb[0].mxu0 %v3221
  %v3294 = vpop.f32.mrb[0].mxu0
  %v3295 = vadd.f32 0.0, %v3294
  %v3296 = vpop.f32.mrb[0].mxu0
  %3297 = vdwg.mxu0
  %v3298 = vadd.f32 %v3217, %v3290
  %v3299 = vadd.f32 %v3218, %v3295
  %v3300 = vxor.u32 %v3298, 2147483648
  %v3301 = vxor.u32 %v3299, 2147483648
  %v3302 = vmul.f32 %v3300, 1.442695
  %v3303 = vpow.pop %v3302
  %v3304 = vmul.f32 %v3301, 1.442695
  %v3305 = vpow.pop %v3304
  %v3306 = vadd.f32 %v3303, 1.0
  %v3307 = vadd.f32 %v3305, 1.0
  %v3308 = vrcp.pop %v3306
  %v3309 = vmul.f32 1.0, %v3308
  %v3310 = vrcp.pop %v3307
  %v3311 = vmul.f32 1.0, %v3310
  %v3312 = vtanh.pop %v3298
  %v3313 = vtanh.pop %v3299
  %v3314 = vmul.f32 %v3309, %v3191
  %v3315 = vmul.f32 %v3311, %v3192
  %3318 = vrot.lane.b32.xlu0 %v3312, 32
  %v3319 = vpop.permute.xlu0 %3318
  %3320 = vrot.lane.b32.xlu0 %v3313, 32
  %v3321 = vpop.permute.xlu0 %3320
  %v3324 = vmul.f32 %v3309, %v3319
  %v3325 = vmul.f32 %v3311, %v3321
  %3328 = vrot.lane.b32.xlu0 %v3324, 32
  %v3329 = vpop.permute.xlu0 %3328
  %3330 = vrot.lane.b32.xlu0 %v3325, 32
  %v3331 = vpop.permute.xlu0 %3330
  %v3334 = vadd.f32 %v3314, %v3329
  %v3335 = vadd.f32 %v3315, %v3331
  %v3336 = vtanh.pop %v3334
  %v3337 = vtanh.pop %v3335
  %3340 = vrot.lane.b32.xlu0 %v3336, 32
  %v3341 = vpop.permute.xlu0 %3340
  %3342 = vrot.lane.b32.xlu0 %v3337, 32
  %v3343 = vpop.permute.xlu0 %3342
  %v3346 = vmul.f32 %v3309, %v3341
  %v3347 = vmul.f32 %v3311, %v3343
  %3349 = vrot.lane.b32.xlu0 %v3346, 64
  %v3350 = vpop.permute.xlu0 %3349
  %3352 = vst.msk [vmem:[#allocation3 + $0x10] sm:$0x3] %vm447, %v3350
  %3353 = vst.msk [vmem:[#allocation3 + $0x68] sm:$0x3] %vm447, %v3350
  %3355 = vrot.lane.b32.xlu0 %v3347, 64
  %v3356 = vpop.permute.xlu0 %3355
  %3358 = vst.msk [vmem:[#allocation3 + $0x60] sm:$0x3] %vm454, %v3356
  %3359 = vst.msk [vmem:[#allocation3 + $0x18] sm:$0x3] %vm454, %v3356
  %v3360 = vld [vmem:[#allocation2 + $0x20] sm:$0xff]
  %v3361 = vld [vmem:[#allocation2 + $0x28] sm:$0xff]
  %v3362 = vsel %vm38, %v3350, 0
  %v3364 = vsel %vm38, %v3356, 0
  %3366 = vmatprep.subr.mxu0 0.0
  %3367 = vmatpush1.msra.mxu0 %v2842
  %3368 = vmatprep.subr.mxu0 0.0
  %3369 = vmatpush1.msra.mxu0 %v2843
  %3370 = vmatprep.subr.mxu0 0.0
  %3371 = vmatpush1.msra.mxu0 %v2844
  %3372 = vmatprep.subr.mxu0 0.0
  %3373 = vmatpush1.msra.mxu0 %v2845
  %3374 = vmatprep.subr.mxu0 0.0
  %3375 = vmatpush1.msra.mxu0 0.0
  %3376 = vmatprep.subr.mxu0 0.0
  %3377 = vmatpush1.msra.mxu0 0.0
  %3378 = vmatprep.subr.mxu0 0.0
  %3379 = vmatpush1.msra.mxu0 0.0
  %3380 = vmatprep.subr.mxu0 0.0
  %3381 = vmatpush1.msra.mxu0 0.0
  %3382 = vmatprep.subr.mxu0 0.0
  %3383 = vmatpush1.msra.mxu0 0.0
  %3384 = vmatprep.subr.mxu0 0.0
  %3385 = vmatpush1.msra.mxu0 0.0
  %3386 = vmatprep.subr.mxu0 0.0
  %3387 = vmatpush1.msra.mxu0 0.0
  %3388 = vmatprep.subr.mxu0 0.0
  %3389 = vmatpush1.msra.mxu0 0.0
  %3390 = vmatprep.subr.mxu0 0.0
  %3391 = vmatpush1.msra.mxu0 0.0
  %3392 = vmatprep.subr.mxu0 0.0
  %3393 = vmatpush1.msra.mxu0 0.0
  %3394 = vmatprep.subr.mxu0 0.0
  %3395 = vmatpush1.msra.mxu0 0.0
  %3396 = vmatprep.subr.mxu0 0.0
  %3397 = vmatpush1.msra.mxu0 0.0
  %3398 = vmatprep.subr.mxu0 0.0
  %3399 = vmatpush1.msra.mxu0 0.0
  %3400 = vmatprep.subr.mxu0 0.0
  %3401 = vmatpush1.msra.mxu0 0.0
  %3402 = vmatprep.subr.mxu0 0.0
  %3403 = vmatpush1.msra.mxu0 0.0
  %3404 = vmatprep.subr.mxu0 0.0
  %3405 = vmatpush1.msra.mxu0 0.0
  %3406 = vmatprep.subr.mxu0 0.0
  %3407 = vmatpush1.msra.mxu0 0.0
  %3408 = vmatprep.subr.mxu0 0.0
  %3409 = vmatpush1.msra.mxu0 0.0
  %3410 = vmatprep.subr.mxu0 0.0
  %3411 = vmatpush1.msra.mxu0 0.0
  %3412 = vmatprep.subr.mxu0 0.0
  %3413 = vmatpush1.msra.mxu0 0.0
  %3414 = vmatprep.subr.mxu0 0.0
  %3415 = vmatpush1.msra.mxu0 0.0
  %3416 = vmatprep.subr.mxu0 0.0
  %3417 = vmatpush1.msra.mxu0 0.0
  %3418 = vmatprep.subr.mxu0 0.0
  %3419 = vmatpush1.msra.mxu0 0.0
  %3420 = vmatprep.subr.mxu0 0.0
  %3421 = vmatpush1.msra.mxu0 0.0
  %3422 = vmatprep.subr.mxu0 0.0
  %3423 = vmatpush1.msra.mxu0 0.0
  %3424 = vmatprep.subr.mxu0 0.0
  %3425 = vmatpush1.msra.mxu0 0.0
  %3426 = vmatprep.subr.mxu0 0.0
  %3427 = vmatpush1.msra.mxu0 0.0
  %3428 = vmatprep.subr.mxu0 0.0
  %3429 = vmatpush1.msra.mxu0 0.0
  %3430 = vmatprep.mubr.f32.mxu0 0.0
  %3431 = vmatmul.mubr.f32.gmra.mrb[0].mxu0 %v3362
  %v3432 = vpop.f32.mrb[0].mxu0
  %v3433 = vadd.f32 0.0, %v3432
  %v3434 = vpop.f32.mrb[0].mxu0
  %3435 = vmatprep.mubr.f32.mxu0 0.0
  %3436 = vmatmul.mubr.f32.gmra.mrb[0].mxu0 %v3364
  %v3437 = vpop.f32.mrb[0].mxu0
  %v3438 = vadd.f32 0.0, %v3437
  %v3439 = vpop.f32.mrb[0].mxu0
  %3440 = vdwg.mxu0
  %v3441 = vadd.f32 %v3360, %v3433
  %v3442 = vadd.f32 %v3361, %v3438
  %v3443 = vxor.u32 %v3441, 2147483648
  %v3444 = vxor.u32 %v3442, 2147483648
  %v3445 = vmul.f32 %v3443, 1.442695
  %v3446 = vpow.pop %v3445
  %v3447 = vmul.f32 %v3444, 1.442695
  %v3448 = vpow.pop %v3447
  %v3449 = vadd.f32 %v3446, 1.0
  %v3450 = vadd.f32 %v3448, 1.0
  %v3451 = vrcp.pop %v3449
  %v3452 = vmul.f32 1.0, %v3451
  %v3453 = vrcp.pop %v3450
  %v3454 = vmul.f32 1.0, %v3453
  %v3455 = vtanh.pop %v3441
  %v3456 = vtanh.pop %v3442
  %v3457 = vmul.f32 %v3452, %v3334
  %v3458 = vmul.f32 %v3454, %v3335
  %3461 = vrot.lane.b32.xlu0 %v3455, 32
  %v3462 = vpop.permute.xlu0 %3461
  %3463 = vrot.lane.b32.xlu0 %v3456, 32
  %v3464 = vpop.permute.xlu0 %3463
  %v3467 = vmul.f32 %v3452, %v3462
  %v3468 = vmul.f32 %v3454, %v3464
  %3471 = vrot.lane.b32.xlu0 %v3467, 32
  %v3472 = vpop.permute.xlu0 %3471
  %3473 = vrot.lane.b32.xlu0 %v3468, 32
  %v3474 = vpop.permute.xlu0 %3473
  %v3477 = vadd.f32 %v3457, %v3472
  %v3478 = vadd.f32 %v3458, %v3474
  %v3479 = vtanh.pop %v3477
  %v3480 = vtanh.pop %v3478
  %3483 = vrot.lane.b32.xlu0 %v3479, 32
  %v3484 = vpop.permute.xlu0 %3483
  %3485 = vrot.lane.b32.xlu0 %v3480, 32
  %v3486 = vpop.permute.xlu0 %3485
  %v3489 = vmul.f32 %v3452, %v3484
  %v3490 = vmul.f32 %v3454, %v3486
  %3492 = vrot.lane.b32.xlu0 %v3489, 64
  %v3493 = vpop.permute.xlu0 %3492
  %3495 = vst.msk [vmem:[#allocation3 + $0x20] sm:$0x3] %vm447, %v3493
  %3496 = vst.msk [vmem:[#allocation3 + $0x58] sm:$0x3] %vm447, %v3493
  %3498 = vrot.lane.b32.xlu0 %v3490, 64
  %v3499 = vpop.permute.xlu0 %3498
  %3501 = vst.msk [vmem:[#allocation3 + $0x50] sm:$0x3] %vm454, %v3499
  %3502 = vst.msk [vmem:[#allocation3 + $0x28] sm:$0x3] %vm454, %v3499
  %v3503 = vld [vmem:[#allocation2 + $0x30] sm:$0xff]
  %v3504 = vld [vmem:[#allocation2 + $0x38] sm:$0xff]
  %v3505 = vsel %vm38, %v3493, 0
  %v3507 = vsel %vm38, %v3499, 0
  %3509 = vmatprep.subr.mxu0 0.0
  %3510 = vmatpush1.msra.mxu0 %v2842
  %3511 = vmatprep.subr.mxu0 0.0
  %3512 = vmatpush1.msra.mxu0 %v2843
  %3513 = vmatprep.subr.mxu0 0.0
  %3514 = vmatpush1.msra.mxu0 %v2844
  %3515 = vmatprep.subr.mxu0 0.0
  %3516 = vmatpush1.msra.mxu0 %v2845
  %3517 = vmatprep.subr.mxu0 0.0
  %3518 = vmatpush1.msra.mxu0 0.0
  %3519 = vmatprep.subr.mxu0 0.0
  %3520 = vmatpush1.msra.mxu0 0.0
  %3521 = vmatprep.subr.mxu0 0.0
  %3522 = vmatpush1.msra.mxu0 0.0
  %3523 = vmatprep.subr.mxu0 0.0
  %3524 = vmatpush1.msra.mxu0 0.0
  %3525 = vmatprep.subr.mxu0 0.0
  %3526 = vmatpush1.msra.mxu0 0.0
  %3527 = vmatprep.subr.mxu0 0.0
  %3528 = vmatpush1.msra.mxu0 0.0
  %3529 = vmatprep.subr.mxu0 0.0
  %3530 = vmatpush1.msra.mxu0 0.0
  %3531 = vmatprep.subr.mxu0 0.0
  %3532 = vmatpush1.msra.mxu0 0.0
  %3533 = vmatprep.subr.mxu0 0.0
  %3534 = vmatpush1.msra.mxu0 0.0
  %3535 = vmatprep.subr.mxu0 0.0
  %3536 = vmatpush1.msra.mxu0 0.0
  %3537 = vmatprep.subr.mxu0 0.0
  %3538 = vmatpush1.msra.mxu0 0.0
  %3539 = vmatprep.subr.mxu0 0.0
  %3540 = vmatpush1.msra.mxu0 0.0
  %3541 = vmatprep.subr.mxu0 0.0
  %3542 = vmatpush1.msra.mxu0 0.0
  %3543 = vmatprep.subr.mxu0 0.0
  %3544 = vmatpush1.msra.mxu0 0.0
  %3545 = vmatprep.subr.mxu0 0.0
  %3546 = vmatpush1.msra.mxu0 0.0
  %3547 = vmatprep.subr.mxu0 0.0
  %3548 = vmatpush1.msra.mxu0 0.0
  %3549 = vmatprep.subr.mxu0 0.0
  %3550 = vmatpush1.msra.mxu0 0.0
  %3551 = vmatprep.subr.mxu0 0.0
  %3552 = vmatpush1.msra.mxu0 0.0
  %3553 = vmatprep.subr.mxu0 0.0
  %3554 = vmatpush1.msra.mxu0 0.0
  %3555 = vmatprep.subr.mxu0 0.0
  %3556 = vmatpush1.msra.mxu0 0.0
  %3557 = vmatprep.subr.mxu0 0.0
  %3558 = vmatpush1.msra.mxu0 0.0
  %3559 = vmatprep.subr.mxu0 0.0
  %3560 = vmatpush1.msra.mxu0 0.0
  %3561 = vmatprep.subr.mxu0 0.0
  %3562 = vmatpush1.msra.mxu0 0.0
  %3563 = vmatprep.subr.mxu0 0.0
  %3564 = vmatpush1.msra.mxu0 0.0
  %3565 = vmatprep.subr.mxu0 0.0
  %3566 = vmatpush1.msra.mxu0 0.0
  %3567 = vmatprep.subr.mxu0 0.0
  %3568 = vmatpush1.msra.mxu0 0.0
  %3569 = vmatprep.subr.mxu0 0.0
  %3570 = vmatpush1.msra.mxu0 0.0
  %3571 = vmatprep.subr.mxu0 0.0
  %3572 = vmatpush1.msra.mxu0 0.0
  %3573 = vmatprep.mubr.f32.mxu0 0.0
  %3574 = vmatmul.mubr.f32.gmra.mrb[0].mxu0 %v3505
  %v3575 = vpop.f32.mrb[0].mxu0
  %v3576 = vadd.f32 0.0, %v3575
  %v3577 = vpop.f32.mrb[0].mxu0
  %3578 = vmatprep.mubr.f32.mxu0 0.0
  %3579 = vmatmul.mubr.f32.gmra.mrb[0].mxu0 %v3507
  %v3580 = vpop.f32.mrb[0].mxu0
  %v3581 = vadd.f32 0.0, %v3580
  %v3582 = vpop.f32.mrb[0].mxu0
  %3583 = vdwg.mxu0
  %v3584 = vadd.f32 %v3503, %v3576
  %v3585 = vadd.f32 %v3504, %v3581
  %v3586 = vxor.u32 %v3584, 2147483648
  %v3587 = vxor.u32 %v3585, 2147483648
  %v3588 = vmul.f32 %v3586, 1.442695
  %v3589 = vpow.pop %v3588
  %v3590 = vmul.f32 %v3587, 1.442695
  %v3591 = vpow.pop %v3590
  %v3592 = vadd.f32 %v3589, 1.0
  %v3593 = vadd.f32 %v3591, 1.0
  %v3594 = vrcp.pop %v3592
  %v3595 = vmul.f32 1.0, %v3594
  %v3596 = vrcp.pop %v3593
  %v3597 = vmul.f32 1.0, %v3596
  %v3598 = vtanh.pop %v3584
  %v3599 = vtanh.pop %v3585
  %v3600 = vmul.f32 %v3595, %v3477
  %v3601 = vmul.f32 %v3597, %v3478
  %3604 = vrot.lane.b32.xlu0 %v3598, 32
  %v3605 = vpop.permute.xlu0 %3604
  %3606 = vrot.lane.b32.xlu0 %v3599, 32
  %v3607 = vpop.permute.xlu0 %3606
  %v3610 = vmul.f32 %v3595, %v3605
  %v3611 = vmul.f32 %v3597, %v3607
  %3614 = vrot.lane.b32.xlu0 %v3610, 32
  %v3615 = vpop.permute.xlu0 %3614
  %3616 = vrot.lane.b32.xlu0 %v3611, 32
  %v3617 = vpop.permute.xlu0 %3616
  %v3620 = vadd.f32 %v3600, %v3615
  %v3621 = vadd.f32 %v3601, %v3617
  %v3622 = vtanh.pop %v3620
  %v3623 = vtanh.pop %v3621
  %3626 = vrot.lane.b32.xlu0 %v3622, 32
  %v3627 = vpop.permute.xlu0 %3626
  %3628 = vrot.lane.b32.xlu0 %v3623, 32
  %v3629 = vpop.permute.xlu0 %3628
  %v3632 = vmul.f32 %v3595, %v3627
  %v3633 = vmul.f32 %v3597, %v3629
  %3635 = vrot.lane.b32.xlu0 %v3632, 64
  %v3636 = vpop.permute.xlu0 %3635
  %3638 = vst.msk [vmem:[#allocation3 + $0x30] sm:$0x3] %vm447, %v3636
  %3639 = vst.msk [vmem:[#allocation3 + $0x48] sm:$0x3] %vm447, %v3636
  %3641 = vrot.lane.b32.xlu0 %v3633, 64
  %v3642 = vpop.permute.xlu0 %3641
  %3644 = vst.msk [vmem:[#allocation3 + $0x40] sm:$0x3] %vm454, %v3642
  %3645 = vst.msk [vmem:[#allocation3 + $0x38] sm:$0x3] %vm454, %v3642
  %v3646 = vld [vmem:[#allocation2 + $0x40] sm:$0xff]
  %v3647 = vld [vmem:[#allocation2 + $0x48] sm:$0xff]
  %v3648 = vsel %vm38, %v3636, 0
  %v3650 = vsel %vm38, %v3642, 0
  %3652 = vmatprep.subr.mxu0 0.0
  %3653 = vmatpush1.msra.mxu0 %v2842
  %3654 = vmatprep.subr.mxu0 0.0
  %3655 = vmatpush1.msra.mxu0 %v2843
  %3656 = vmatprep.subr.mxu0 0.0
  %3657 = vmatpush1.msra.mxu0 %v2844
  %3658 = vmatprep.subr.mxu0 0.0
  %3659 = vmatpush1.msra.mxu0 %v2845
  %3660 = vmatprep.subr.mxu0 0.0
  %3661 = vmatpush1.msra.mxu0 0.0
  %3662 = vmatprep.subr.mxu0 0.0
  %3663 = vmatpush1.msra.mxu0 0.0
  %3664 = vmatprep.subr.mxu0 0.0
  %3665 = vmatpush1.msra.mxu0 0.0
  %3666 = vmatprep.subr.mxu0 0.0
  %3667 = vmatpush1.msra.mxu0 0.0
  %3668 = vmatprep.subr.mxu0 0.0
  %3669 = vmatpush1.msra.mxu0 0.0
  %3670 = vmatprep.subr.mxu0 0.0
  %3671 = vmatpush1.msra.mxu0 0.0
  %3672 = vmatprep.subr.mxu0 0.0
  %3673 = vmatpush1.msra.mxu0 0.0
  %3674 = vmatprep.subr.mxu0 0.0
  %3675 = vmatpush1.msra.mxu0 0.0
  %3676 = vmatprep.subr.mxu0 0.0
  %3677 = vmatpush1.msra.mxu0 0.0
  %3678 = vmatprep.subr.mxu0 0.0
  %3679 = vmatpush1.msra.mxu0 0.0
  %3680 = vmatprep.subr.mxu0 0.0
  %3681 = vmatpush1.msra.mxu0 0.0
  %3682 = vmatprep.subr.mxu0 0.0
  %3683 = vmatpush1.msra.mxu0 0.0
  %3684 = vmatprep.subr.mxu0 0.0
  %3685 = vmatpush1.msra.mxu0 0.0
  %3686 = vmatprep.subr.mxu0 0.0
  %3687 = vmatpush1.msra.mxu0 0.0
  %3688 = vmatprep.subr.mxu0 0.0
  %3689 = vmatpush1.msra.mxu0 0.0
  %3690 = vmatprep.subr.mxu0 0.0
  %3691 = vmatpush1.msra.mxu0 0.0
  %3692 = vmatprep.subr.mxu0 0.0
  %3693 = vmatpush1.msra.mxu0 0.0
  %3694 = vmatprep.subr.mxu0 0.0
  %3695 = vmatpush1.msra.mxu0 0.0
  %3696 = vmatprep.subr.mxu0 0.0
  %3697 = vmatpush1.msra.mxu0 0.0
  %3698 = vmatprep.subr.mxu0 0.0
  %3699 = vmatpush1.msra.mxu0 0.0
  %3700 = vmatprep.subr.mxu0 0.0
  %3701 = vmatpush1.msra.mxu0 0.0
  %3702 = vmatprep.subr.mxu0 0.0
  %3703 = vmatpush1.msra.mxu0 0.0
  %3704 = vmatprep.subr.mxu0 0.0
  %3705 = vmatpush1.msra.mxu0 0.0
  %3706 = vmatprep.subr.mxu0 0.0
  %3707 = vmatpush1.msra.mxu0 0.0
  %3708 = vmatprep.subr.mxu0 0.0
  %3709 = vmatpush1.msra.mxu0 0.0
  %3710 = vmatprep.subr.mxu0 0.0
  %3711 = vmatpush1.msra.mxu0 0.0
  %3712 = vmatprep.subr.mxu0 0.0
  %3713 = vmatpush1.msra.mxu0 0.0
  %3714 = vmatprep.subr.mxu0 0.0
  %3715 = vmatpush1.msra.mxu0 0.0
  %3716 = vmatprep.mubr.f32.mxu0 0.0
  %3717 = vmatmul.mubr.f32.gmra.mrb[0].mxu0 %v3648
  %v3718 = vpop.f32.mrb[0].mxu0
  %v3719 = vadd.f32 0.0, %v3718
  %v3720 = vpop.f32.mrb[0].mxu0
  %3721 = vmatprep.mubr.f32.mxu0 0.0
  %3722 = vmatmul.mubr.f32.gmra.mrb[0].mxu0 %v3650
  %v3723 = vpop.f32.mrb[0].mxu0
  %v3724 = vadd.f32 0.0, %v3723
  %v3725 = vpop.f32.mrb[0].mxu0
  %3726 = vdwg.mxu0
  %v3727 = vadd.f32 %v3646, %v3719
  %v3728 = vadd.f32 %v3647, %v3724
  %v3729 = vxor.u32 %v3727, 2147483648
  %v3730 = vxor.u32 %v3728, 2147483648
  %v3731 = vmul.f32 %v3729, 1.442695
  %v3732 = vpow.pop %v3731
  %v3733 = vmul.f32 %v3730, 1.442695
  %v3734 = vpow.pop %v3733
  %v3735 = vadd.f32 %v3732, 1.0
  %v3736 = vadd.f32 %v3734, 1.0
  %v3737 = vrcp.pop %v3735
  %v3738 = vmul.f32 1.0, %v3737
  %v3739 = vrcp.pop %v3736
  %v3740 = vmul.f32 1.0, %v3739
  %v3741 = vtanh.pop %v3727
  %v3742 = vtanh.pop %v3728
  %v3743 = vmul.f32 %v3738, %v3620
  %v3744 = vmul.f32 %v3740, %v3621
  %3747 = vrot.lane.b32.xlu0 %v3741, 32
  %v3748 = vpop.permute.xlu0 %3747
  %3749 = vrot.lane.b32.xlu0 %v3742, 32
  %v3750 = vpop.permute.xlu0 %3749
  %v3753 = vmul.f32 %v3738, %v3748
  %v3754 = vmul.f32 %v3740, %v3750
  %3757 = vrot.lane.b32.xlu0 %v3753, 32
  %v3758 = vpop.permute.xlu0 %3757
  %3759 = vrot.lane.b32.xlu0 %v3754, 32
  %v3760 = vpop.permute.xlu0 %3759
  %v3763 = vadd.f32 %v3743, %v3758
  %v3764 = vadd.f32 %v3744, %v3760
  %v3765 = vtanh.pop %v3763
  %v3766 = vtanh.pop %v3764
  %3769 = vrot.lane.b32.xlu0 %v3765, 32
  %v3770 = vpop.permute.xlu0 %3769
  %3771 = vrot.lane.b32.xlu0 %v3766, 32
  %v3772 = vpop.permute.xlu0 %3771
  %v3775 = vmul.f32 %v3738, %v3770
  %v3776 = vmul.f32 %v3740, %v3772
  %3778 = vrot.lane.b32.xlu0 %v3775, 64
  %v3779 = vpop.permute.xlu0 %3778
  %3781 = vst.msk [vmem:[#allocation3 + $0x40] sm:$0x3] %vm447, %v3779
  %3782 = vst.msk [vmem:[#allocation3 + $0x38] sm:$0x3] %vm447, %v3779
  %3784 = vrot.lane.b32.xlu0 %v3776, 64
  %v3785 = vpop.permute.xlu0 %3784
  %3787 = vst.msk [vmem:[#allocation3 + $0x30] sm:$0x3] %vm454, %v3785
  %3788 = vst.msk [vmem:[#allocation3 + $0x48] sm:$0x3] %vm454, %v3785
  %v3789 = vld [vmem:[#allocation2 + $0x50] sm:$0xff]
  %v3790 = vld [vmem:[#allocation2 + $0x58] sm:$0xff]
  %v3791 = vsel %vm38, %v3779, 0
  %v3793 = vsel %vm38, %v3785, 0
  %3795 = vmatprep.subr.mxu0 0.0
  %3796 = vmatpush1.msra.mxu0 %v2842
  %3797 = vmatprep.subr.mxu0 0.0
  %3798 = vmatpush1.msra.mxu0 %v2843
  %3799 = vmatprep.subr.mxu0 0.0
  %3800 = vmatpush1.msra.mxu0 %v2844
  %3801 = vmatprep.subr.mxu0 0.0
  %3802 = vmatpush1.msra.mxu0 %v2845
  %3803 = vmatprep.subr.mxu0 0.0
  %3804 = vmatpush1.msra.mxu0 0.0
  %3805 = vmatprep.subr.mxu0 0.0
  %3806 = vmatpush1.msra.mxu0 0.0
  %3807 = vmatprep.subr.mxu0 0.0
  %3808 = vmatpush1.msra.mxu0 0.0
  %3809 = vmatprep.subr.mxu0 0.0
  %3810 = vmatpush1.msra.mxu0 0.0
  %3811 = vmatprep.subr.mxu0 0.0
  %3812 = vmatpush1.msra.mxu0 0.0
  %3813 = vmatprep.subr.mxu0 0.0
  %3814 = vmatpush1.msra.mxu0 0.0
  %3815 = vmatprep.subr.mxu0 0.0
  %3816 = vmatpush1.msra.mxu0 0.0
  %3817 = vmatprep.subr.mxu0 0.0
  %3818 = vmatpush1.msra.mxu0 0.0
  %3819 = vmatprep.subr.mxu0 0.0
  %3820 = vmatpush1.msra.mxu0 0.0
  %3821 = vmatprep.subr.mxu0 0.0
  %3822 = vmatpush1.msra.mxu0 0.0
  %3823 = vmatprep.subr.mxu0 0.0
  %3824 = vmatpush1.msra.mxu0 0.0
  %3825 = vmatprep.subr.mxu0 0.0
  %3826 = vmatpush1.msra.mxu0 0.0
  %3827 = vmatprep.subr.mxu0 0.0
  %3828 = vmatpush1.msra.mxu0 0.0
  %3829 = vmatprep.subr.mxu0 0.0
  %3830 = vmatpush1.msra.mxu0 0.0
  %3831 = vmatprep.subr.mxu0 0.0
  %3832 = vmatpush1.msra.mxu0 0.0
  %3833 = vmatprep.subr.mxu0 0.0
  %3834 = vmatpush1.msra.mxu0 0.0
  %3835 = vmatprep.subr.mxu0 0.0
  %3836 = vmatpush1.msra.mxu0 0.0
  %3837 = vmatprep.subr.mxu0 0.0
  %3838 = vmatpush1.msra.mxu0 0.0
  %3839 = vmatprep.subr.mxu0 0.0
  %3840 = vmatpush1.msra.mxu0 0.0
  %3841 = vmatprep.subr.mxu0 0.0
  %3842 = vmatpush1.msra.mxu0 0.0
  %3843 = vmatprep.subr.mxu0 0.0
  %3844 = vmatpush1.msra.mxu0 0.0
  %3845 = vmatprep.subr.mxu0 0.0
  %3846 = vmatpush1.msra.mxu0 0.0
  %3847 = vmatprep.subr.mxu0 0.0
  %3848 = vmatpush1.msra.mxu0 0.0
  %3849 = vmatprep.subr.mxu0 0.0
  %3850 = vmatpush1.msra.mxu0 0.0
  %3851 = vmatprep.subr.mxu0 0.0
  %3852 = vmatpush1.msra.mxu0 0.0
  %3853 = vmatprep.subr.mxu0 0.0
  %3854 = vmatpush1.msra.mxu0 0.0
  %3855 = vmatprep.subr.mxu0 0.0
  %3856 = vmatpush1.msra.mxu0 0.0
  %3857 = vmatprep.subr.mxu0 0.0
  %3858 = vmatpush1.msra.mxu0 0.0
  %3859 = vmatprep.mubr.f32.mxu0 0.0
  %3860 = vmatmul.mubr.f32.gmra.mrb[0].mxu0 %v3791
  %v3861 = vpop.f32.mrb[0].mxu0
  %v3862 = vadd.f32 0.0, %v3861
  %v3863 = vpop.f32.mrb[0].mxu0
  %3864 = vmatprep.mubr.f32.mxu0 0.0
  %3865 = vmatmul.mubr.f32.gmra.mrb[0].mxu0 %v3793
  %v3866 = vpop.f32.mrb[0].mxu0
  %v3867 = vadd.f32 0.0, %v3866
  %v3868 = vpop.f32.mrb[0].mxu0
  %3869 = vdwg.mxu0
  %v3870 = vadd.f32 %v3789, %v3862
  %v3871 = vadd.f32 %v3790, %v3867
  %v3872 = vxor.u32 %v3870, 2147483648
  %v3873 = vxor.u32 %v3871, 2147483648
  %v3874 = vmul.f32 %v3872, 1.442695
  %v3875 = vpow.pop %v3874
  %v3876 = vmul.f32 %v3873, 1.442695
  %v3877 = vpow.pop %v3876
  %v3878 = vadd.f32 %v3875, 1.0
  %v3879 = vadd.f32 %v3877, 1.0
  %v3880 = vrcp.pop %v3878
  %v3881 = vmul.f32 1.0, %v3880
  %v3882 = vrcp.pop %v3879
  %v3883 = vmul.f32 1.0, %v3882
  %v3884 = vtanh.pop %v3870
  %v3885 = vtanh.pop %v3871
  %v3886 = vmul.f32 %v3881, %v3763
  %v3887 = vmul.f32 %v3883, %v3764
  %3890 = vrot.lane.b32.xlu0 %v3884, 32
  %v3891 = vpop.permute.xlu0 %3890
  %3892 = vrot.lane.b32.xlu0 %v3885, 32
  %v3893 = vpop.permute.xlu0 %3892
  %v3896 = vmul.f32 %v3881, %v3891
  %v3897 = vmul.f32 %v3883, %v3893
  %3900 = vrot.lane.b32.xlu0 %v3896, 32
  %v3901 = vpop.permute.xlu0 %3900
  %3902 = vrot.lane.b32.xlu0 %v3897, 32
  %v3903 = vpop.permute.xlu0 %3902
  %v3906 = vadd.f32 %v3886, %v3901
  %v3907 = vadd.f32 %v3887, %v3903
  %v3908 = vtanh.pop %v3906
  %v3909 = vtanh.pop %v3907
  %3912 = vrot.lane.b32.xlu0 %v3908, 32
  %v3913 = vpop.permute.xlu0 %3912
  %3914 = vrot.lane.b32.xlu0 %v3909, 32
  %v3915 = vpop.permute.xlu0 %3914
  %v3918 = vmul.f32 %v3881, %v3913
  %v3919 = vmul.f32 %v3883, %v3915
  %3921 = vrot.lane.b32.xlu0 %v3918, 64
  %v3922 = vpop.permute.xlu0 %3921
  %3924 = vst.msk [vmem:[#allocation3 + $0x50] sm:$0x3] %vm447, %v3922
  %3925 = vst.msk [vmem:[#allocation3 + $0x28] sm:$0x3] %vm447, %v3922
  %3927 = vrot.lane.b32.xlu0 %v3919, 64
  %v3928 = vpop.permute.xlu0 %3927
  %3930 = vst.msk [vmem:[#allocation3 + $0x20] sm:$0x3] %vm454, %v3928
  %3931 = vst.msk [vmem:[#allocation3 + $0x58] sm:$0x3] %vm454, %v3928
  %v3932 = vld [vmem:[#allocation2 + $0x60] sm:$0xff]
  %v3933 = vld [vmem:[#allocation2 + $0x68] sm:$0xff]
  %v3934 = vsel %vm38, %v3922, 0
  %v3936 = vsel %vm38, %v3928, 0
  %3938 = vmatprep.subr.mxu0 0.0
  %3939 = vmatpush1.msra.mxu0 %v2842
  %3940 = vmatprep.subr.mxu0 0.0
  %3941 = vmatpush1.msra.mxu0 %v2843
  %3942 = vmatprep.subr.mxu0 0.0
  %3943 = vmatpush1.msra.mxu0 %v2844
  %3944 = vmatprep.subr.mxu0 0.0
  %3945 = vmatpush1.msra.mxu0 %v2845
  %3946 = vmatprep.subr.mxu0 0.0
  %3947 = vmatpush1.msra.mxu0 0.0
  %3948 = vmatprep.subr.mxu0 0.0
  %3949 = vmatpush1.msra.mxu0 0.0
  %3950 = vmatprep.subr.mxu0 0.0
  %3951 = vmatpush1.msra.mxu0 0.0
  %3952 = vmatprep.subr.mxu0 0.0
  %3953 = vmatpush1.msra.mxu0 0.0
  %3954 = vmatprep.subr.mxu0 0.0
  %3955 = vmatpush1.msra.mxu0 0.0
  %3956 = vmatprep.subr.mxu0 0.0
  %3957 = vmatpush1.msra.mxu0 0.0
  %3958 = vmatprep.subr.mxu0 0.0
  %3959 = vmatpush1.msra.mxu0 0.0
  %3960 = vmatprep.subr.mxu0 0.0
  %3961 = vmatpush1.msra.mxu0 0.0
  %3962 = vmatprep.subr.mxu0 0.0
  %3963 = vmatpush1.msra.mxu0 0.0
  %3964 = vmatprep.subr.mxu0 0.0
  %3965 = vmatpush1.msra.mxu0 0.0
  %3966 = vmatprep.subr.mxu0 0.0
  %3967 = vmatpush1.msra.mxu0 0.0
  %3968 = vmatprep.subr.mxu0 0.0
  %3969 = vmatpush1.msra.mxu0 0.0
  %3970 = vmatprep.subr.mxu0 0.0
  %3971 = vmatpush1.msra.mxu0 0.0
  %3972 = vmatprep.subr.mxu0 0.0
  %3973 = vmatpush1.msra.mxu0 0.0
  %3974 = vmatprep.subr.mxu0 0.0
  %3975 = vmatpush1.msra.mxu0 0.0
  %3976 = vmatprep.subr.mxu0 0.0
  %3977 = vmatpush1.msra.mxu0 0.0
  %3978 = vmatprep.subr.mxu0 0.0
  %3979 = vmatpush1.msra.mxu0 0.0
  %3980 = vmatprep.subr.mxu0 0.0
  %3981 = vmatpush1.msra.mxu0 0.0
  %3982 = vmatprep.subr.mxu0 0.0
  %3983 = vmatpush1.msra.mxu0 0.0
  %3984 = vmatprep.subr.mxu0 0.0
  %3985 = vmatpush1.msra.mxu0 0.0
  %3986 = vmatprep.subr.mxu0 0.0
  %3987 = vmatpush1.msra.mxu0 0.0
  %3988 = vmatprep.subr.mxu0 0.0
  %3989 = vmatpush1.msra.mxu0 0.0
  %3990 = vmatprep.subr.mxu0 0.0
  %3991 = vmatpush1.msra.mxu0 0.0
  %3992 = vmatprep.subr.mxu0 0.0
  %3993 = vmatpush1.msra.mxu0 0.0
  %3994 = vmatprep.subr.mxu0 0.0
  %3995 = vmatpush1.msra.mxu0 0.0
  %3996 = vmatprep.subr.mxu0 0.0
  %3997 = vmatpush1.msra.mxu0 0.0
  %3998 = vmatprep.subr.mxu0 0.0
  %3999 = vmatpush1.msra.mxu0 0.0
  %4000 = vmatprep.subr.mxu0 0.0
  %4001 = vmatpush1.msra.mxu0 0.0
  %4002 = vmatprep.mubr.f32.mxu0 0.0
  %4003 = vmatmul.mubr.f32.gmra.mrb[0].mxu0 %v3934
  %v4004 = vpop.f32.mrb[0].mxu0
  %v4005 = vadd.f32 0.0, %v4004
  %v4006 = vpop.f32.mrb[0].mxu0
  %4007 = vmatprep.mubr.f32.mxu0 0.0
  %4008 = vmatmul.mubr.f32.gmra.mrb[0].mxu0 %v3936
  %v4009 = vpop.f32.mrb[0].mxu0
  %v4010 = vadd.f32 0.0, %v4009
  %v4011 = vpop.f32.mrb[0].mxu0
  %4012 = vdwg.mxu0
  %v4013 = vadd.f32 %v3932, %v4005
  %v4014 = vadd.f32 %v3933, %v4010
  %v4015 = vxor.u32 %v4013, 2147483648
  %v4016 = vxor.u32 %v4014, 2147483648
  %v4017 = vmul.f32 %v4015, 1.442695
  %v4018 = vpow.pop %v4017
  %v4019 = vmul.f32 %v4016, 1.442695
  %v4020 = vpow.pop %v4019
  %v4021 = vadd.f32 %v4018, 1.0
  %v4022 = vadd.f32 %v4020, 1.0
  %v4023 = vrcp.pop %v4021
  %v4024 = vmul.f32 1.0, %v4023
  %v4025 = vrcp.pop %v4022
  %v4026 = vmul.f32 1.0, %v4025
  %v4027 = vtanh.pop %v4013
  %v4028 = vtanh.pop %v4014
  %v4029 = vmul.f32 %v4024, %v3906
  %v4030 = vmul.f32 %v4026, %v3907
  %4033 = vrot.lane.b32.xlu0 %v4027, 32
  %v4034 = vpop.permute.xlu0 %4033
  %4035 = vrot.lane.b32.xlu0 %v4028, 32
  %v4036 = vpop.permute.xlu0 %4035
  %v4039 = vmul.f32 %v4024, %v4034
  %v4040 = vmul.f32 %v4026, %v4036
  %4043 = vrot.lane.b32.xlu0 %v4039, 32
  %v4044 = vpop.permute.xlu0 %4043
  %4045 = vrot.lane.b32.xlu0 %v4040, 32
  %v4046 = vpop.permute.xlu0 %4045
  %v4049 = vadd.f32 %v4029, %v4044
  %v4050 = vadd.f32 %v4030, %v4046
  %v4051 = vtanh.pop %v4049
  %v4052 = vtanh.pop %v4050
  %4055 = vrot.lane.b32.xlu0 %v4051, 32
  %v4056 = vpop.permute.xlu0 %4055
  %4057 = vrot.lane.b32.xlu0 %v4052, 32
  %v4058 = vpop.permute.xlu0 %4057
  %v4061 = vmul.f32 %v4024, %v4056
  %v4062 = vmul.f32 %v4026, %v4058
  %4064 = vrot.lane.b32.xlu0 %v4061, 64
  %v4065 = vpop.permute.xlu0 %4064
  %4067 = vst.msk [vmem:[#allocation3 + $0x60] sm:$0x3] %vm447, %v4065
  %4068 = vst.msk [vmem:[#allocation3 + $0x18] sm:$0x3] %vm447, %v4065
  %4070 = vrot.lane.b32.xlu0 %v4062, 64
  %v4071 = vpop.permute.xlu0 %4070
  %4073 = vst.msk [vmem:[#allocation3 + $0x10] sm:$0x3] %vm454, %v4071
  %4074 = vst.msk [vmem:[#allocation3 + $0x68] sm:$0x3] %vm454, %v4071
  %v4075 = vld [vmem:[#allocation2 + $0x70] sm:$0xff]
  %v4076 = vld [vmem:[#allocation2 + $0x78] sm:$0xff]
  %v4077 = vsel %vm38, %v4065, 0
  %v4079 = vsel %vm38, %v4071, 0
  %4081 = vmatprep.subr.mxu0 0.0
  %4082 = vmatpush1.msra.mxu0 %v2842
  %4083 = vmatprep.subr.mxu0 0.0
  %4084 = vmatpush1.msra.mxu0 %v2843
  %4085 = vmatprep.subr.mxu0 0.0
  %4086 = vmatpush1.msra.mxu0 %v2844
  %4087 = vmatprep.subr.mxu0 0.0
  %4088 = vmatpush1.msra.mxu0 %v2845
  %4089 = vmatprep.subr.mxu0 0.0
  %4090 = vmatpush1.msra.mxu0 0.0
  %4091 = vmatprep.subr.mxu0 0.0
  %4092 = vmatpush1.msra.mxu0 0.0
  %4093 = vmatprep.subr.mxu0 0.0
  %4094 = vmatpush1.msra.mxu0 0.0
  %4095 = vmatprep.subr.mxu0 0.0
  %4096 = vmatpush1.msra.mxu0 0.0
  %4097 = vmatprep.subr.mxu0 0.0
  %4098 = vmatpush1.msra.mxu0 0.0
  %4099 = vmatprep.subr.mxu0 0.0
  %4100 = vmatpush1.msra.mxu0 0.0
  %4101 = vmatprep.subr.mxu0 0.0
  %4102 = vmatpush1.msra.mxu0 0.0
  %4103 = vmatprep.subr.mxu0 0.0
  %4104 = vmatpush1.msra.mxu0 0.0
  %4105 = vmatprep.subr.mxu0 0.0
  %4106 = vmatpush1.msra.mxu0 0.0
  %4107 = vmatprep.subr.mxu0 0.0
  %4108 = vmatpush1.msra.mxu0 0.0
  %4109 = vmatprep.subr.mxu0 0.0
  %4110 = vmatpush1.msra.mxu0 0.0
  %4111 = vmatprep.subr.mxu0 0.0
  %4112 = vmatpush1.msra.mxu0 0.0
  %4113 = vmatprep.subr.mxu0 0.0
  %4114 = vmatpush1.msra.mxu0 0.0
  %4115 = vmatprep.subr.mxu0 0.0
  %4116 = vmatpush1.msra.mxu0 0.0
  %4117 = vmatprep.subr.mxu0 0.0
  %4118 = vmatpush1.msra.mxu0 0.0
  %4119 = vmatprep.subr.mxu0 0.0
  %4120 = vmatpush1.msra.mxu0 0.0
  %4121 = vmatprep.subr.mxu0 0.0
  %4122 = vmatpush1.msra.mxu0 0.0
  %4123 = vmatprep.subr.mxu0 0.0
  %4124 = vmatpush1.msra.mxu0 0.0
  %4125 = vmatprep.subr.mxu0 0.0
  %4126 = vmatpush1.msra.mxu0 0.0
  %4127 = vmatprep.subr.mxu0 0.0
  %4128 = vmatpush1.msra.mxu0 0.0
  %4129 = vmatprep.subr.mxu0 0.0
  %4130 = vmatpush1.msra.mxu0 0.0
  %4131 = vmatprep.subr.mxu0 0.0
  %4132 = vmatpush1.msra.mxu0 0.0
  %4133 = vmatprep.subr.mxu0 0.0
  %4134 = vmatpush1.msra.mxu0 0.0
  %4135 = vmatprep.subr.mxu0 0.0
  %4136 = vmatpush1.msra.mxu0 0.0
  %4137 = vmatprep.subr.mxu0 0.0
  %4138 = vmatpush1.msra.mxu0 0.0
  %4139 = vmatprep.subr.mxu0 0.0
  %4140 = vmatpush1.msra.mxu0 0.0
  %4141 = vmatprep.subr.mxu0 0.0
  %4142 = vmatpush1.msra.mxu0 0.0
  %4143 = vmatprep.subr.mxu0 0.0
  %4144 = vmatpush1.msra.mxu0 0.0
  %4145 = vmatprep.mubr.f32.mxu0 0.0
  %4146 = vmatmul.mubr.f32.gmra.mrb[0].mxu0 %v4077
  %v4147 = vpop.f32.mrb[0].mxu0
  %v4148 = vadd.f32 0.0, %v4147
  %v4149 = vpop.f32.mrb[0].mxu0
  %4150 = vmatprep.mubr.f32.mxu0 0.0
  %4151 = vmatmul.mubr.f32.gmra.mrb[0].mxu0 %v4079
  %v4152 = vpop.f32.mrb[0].mxu0
  %v4153 = vadd.f32 0.0, %v4152
  %v4154 = vpop.f32.mrb[0].mxu0
  %4155 = vdwg.mxu0
  %v4156 = vadd.f32 %v4075, %v4148
  %v4157 = vadd.f32 %v4076, %v4153
  %v4158 = vxor.u32 %v4156, 2147483648
  %v4159 = vxor.u32 %v4157, 2147483648
  %v4160 = vmul.f32 %v4158, 1.442695
  %v4161 = vpow.pop %v4160
  %v4162 = vmul.f32 %v4159, 1.442695
  %v4163 = vpow.pop %v4162
  %v4164 = vadd.f32 %v4161, 1.0
  %v4165 = vadd.f32 %v4163, 1.0
  %v4166 = vrcp.pop %v4164
  %v4167 = vmul.f32 1.0, %v4166
  %v4168 = vrcp.pop %v4165
  %v4169 = vmul.f32 1.0, %v4168
  %v4170 = vtanh.pop %v4156
  %v4171 = vtanh.pop %v4157
  %v4172 = vmul.f32 %v4167, %v4049
  %v4173 = vmul.f32 %v4169, %v4050
  %4176 = vrot.lane.b32.xlu0 %v4170, 32
  %v4177 = vpop.permute.xlu0 %4176
  %4178 = vrot.lane.b32.xlu0 %v4171, 32
  %v4179 = vpop.permute.xlu0 %4178
  %v4182 = vmul.f32 %v4167, %v4177
  %v4183 = vmul.f32 %v4169, %v4179
  %4186 = vrot.lane.b32.xlu0 %v4182, 32
  %v4187 = vpop.permute.xlu0 %4186
  %4188 = vrot.lane.b32.xlu0 %v4183, 32
  %v4189 = vpop.permute.xlu0 %4188
  %v4192 = vadd.f32 %v4172, %v4187
  %v4193 = vadd.f32 %v4173, %v4189
  %v4194 = vtanh.pop %v4192
  %v4195 = vtanh.pop %v4193
  %4198 = vrot.lane.b32.xlu0 %v4194, 32
  %v4199 = vpop.permute.xlu0 %4198
  %4200 = vrot.lane.b32.xlu0 %v4195, 32
  %v4201 = vpop.permute.xlu0 %4200
  %v4204 = vmul.f32 %v4167, %v4199
  %v4205 = vmul.f32 %v4169, %v4201
  %4207 = vrot.lane.b32.xlu0 %v4204, 64
  %v4208 = vpop.permute.xlu0 %4207
  %4210 = vst.msk [vmem:[#allocation3 + $0x70] sm:$0x3] %vm447, %v4208
  %4211 = vst.msk [vmem:[#allocation3 + $0x8] sm:$0x3] %vm447, %v4208
  %4213 = vrot.lane.b32.xlu0 %v4205, 64
  %v4214 = vpop.permute.xlu0 %4213
  %4216 = vst.msk [vmem:[#allocation3] sm:$0x3] %vm454, %v4214
  %4217 = vst.msk [vmem:[#allocation3 + $0x78] sm:$0x3] %vm454, %v4214
  %v4218 = vld [vmem:[#allocation3] sm:$0xff]
  %v4219 = vld [vmem:[%s10] sm:$0xff]
  %v4220 = vmul.f32 %v4218, %v4219
  %v4221 = vadd.f32 %v4220, 0.0
  %v4222 = vld [vmem:[#allocation3 + $0x10] sm:$0xff]
  %v4223 = vld [vmem:[%s10 + $0x8] sm:$0xff]
  %v4224 = vmul.f32 %v4222, %v4223
  %v4225 = vadd.f32 %v4221, %v4224
  %v4226 = vld [vmem:[#allocation3 + $0x20] sm:$0xff]
  %v4227 = vld [vmem:[%s10 + $0x10] sm:$0xff]
  %v4228 = vmul.f32 %v4226, %v4227
  %v4229 = vadd.f32 %v4225, %v4228
  %v4230 = vld [vmem:[#allocation3 + $0x30] sm:$0xff]
  %v4231 = vld [vmem:[%s10 + $0x18] sm:$0xff]
  %v4232 = vmul.f32 %v4230, %v4231
  %v4233 = vadd.f32 %v4229, %v4232
  %v4234 = vld [vmem:[#allocation3 + $0x40] sm:$0xff]
  %v4235 = vld [vmem:[%s10 + $0x20] sm:$0xff]
  %v4236 = vmul.f32 %v4234, %v4235
  %v4237 = vadd.f32 %v4233, %v4236
  %v4238 = vld [vmem:[#allocation3 + $0x50] sm:$0xff]
  %v4239 = vld [vmem:[%s10 + $0x28] sm:$0xff]
  %v4240 = vmul.f32 %v4238, %v4239
  %v4241 = vadd.f32 %v4237, %v4240
  %v4242 = vld [vmem:[#allocation3 + $0x60] sm:$0xff]
  %v4243 = vld [vmem:[%s10 + $0x30] sm:$0xff]
  %v4244 = vmul.f32 %v4242, %v4243
  %v4245 = vadd.f32 %v4241, %v4244
  %v4246 = vld [vmem:[#allocation3 + $0x70] sm:$0xff]
  %v4247 = vld [vmem:[%s10 + $0x38] sm:$0xff]
  %v4248 = vmul.f32 %v4246, %v4247
  %v4249 = vadd.f32 %v4245, %v4248
  %v4250 = vsel %vm38, %v4249, 0.0
  %4251 = vadd.xlane.f32.xlu0 %v4250
  %v4252 = vpop.xlane.xlu0 %4251
  %vm4253 = vcmask 1024
  %4254 = vst.msk [vmem:[%s11] sm:$0x3] %vm4253, %v4252
  // Predicated region
  $region46: #{dilated_net_forward.1} parent=0 // pred_check
    _
  $region47: #{dilated_net_forward.1} parent=0 // pred_check_branch
    %4256 = sbr.rel (0) target = $region49
  $region48: #{dilated_net_forward.1} parent=0 // pred_region
    _
  $region49: #{dilated_net_forward.1} parent=0 // pred_fallthru
    _
  // Predicated region
  $region50: #{dilated_net_forward.1} parent=0 // pred_check
    _
  $region51: #{dilated_net_forward.1} parent=0 // pred_check_branch
    %4258 = sbr.rel (0) target = $region53
  $region52: #{dilated_net_forward.1} parent=0 // pred_region
    _
  $region53: #{dilated_net_forward.1} parent=0 // pred_fallthru
    _

</llo_original>
